<compile_context>
chip_gen: v7x
topology: tpu7x:2x2x1
jax: 0.10.0
libtpu: 0.0.40
codegen_flags: <defaults>
</compile_context>

<pallas_src>
import functools

import jax
import jax.numpy as jnp
import numpy as np
from jax import lax
from jax.experimental import pallas as pl
from jax.experimental.pallas import tpu as pltpu

EPS = 1e-5  # nn.InstanceNorm2d default eps


# ----------------------------- fused Pallas kernel ---------------------------

def _decoder_kernel(x_ref, m_ref,
                    w0, g0, be0, a0,
                    w1, g1, be1, a1,
                    w2, g2, be2, a2,
                    w3, g3, be3, a3,
                    ws, bs, asub,
                    wf, bf,
                    o_ref, skip_ref, *, C, T, F, mxu_dtype):
    """Whole ComplexDecoder forward for one batch element.

    Layout: activations are channel-major (channels, T*F) so the flattened
    spatial axis (T*F) is the lane axis.

    x_ref    : (1, C, S)            input (NCHW flattened over (T, F))
    m_ref    : (24, S)              0/1 validity masks, row = layer*6 + kt*3 + kf
    w_i      : (6, C, (i+1)*C)      dense conv weights, tap-major (j = kt*3+kf)
    g/be/a   : (C, 1)               IN gamma / IN beta / PReLU alpha
    ws, bs   : (3, 2C, C), (2C, 1)  SPConv tap weights / bias
    asub     : (2C, 1)              PReLU alpha tiled to the pre-shuffle channels
    wf, bf   : (2, 2, C), (2, 1)    final conv taps (kw-major) / bias
    o_ref    : (1, 4, S)            row = parity(even/odd)*2 + out_channel
    skip_ref : (5C, S)              VMEM dense-skip buffer
    """
    S = T * F
    dense = ((w0, g0, be0, a0), (w1, g1, be1, a1),
             (w2, g2, be2, a2), (w3, g3, be3, a3))

    def roll(x, shift):
        sh = shift % S
        return x if sh == 0 else pltpu.roll(x, sh, axis=1)

    def mask(x, row):
        return x * m_ref[row:row + 1, :]

    def mm(w_ref, j, v):
        # one conv tap: (Cout, Cin) x (Cin, S) on the MXU, f32 accumulation
        return jnp.dot(w_ref[j], v.astype(mxu_dtype),
                       preferred_element_type=jnp.float32)

    # Stage the input into the top channel slice of the skip buffer.
    skip_ref[4 * C:5 * C, :] = x_ref[0].astype(jnp.float32)

    # ---- DenseBlock: 4 x [dilated (2,3) conv + InstanceNorm2d + PReLU] ------
    for i in range(4):
        dil = 2 ** i
        w_r, g_r, be_r, a_r = dense[i]
        xin = skip_ref[(4 - i) * C:5 * C, :]             # ((i+1)*C, S)
        base = i * 6
        # kt = 1 taps (no time shift); kf = 1 mask is all-ones -> skip multiply
        acc = mm(w_r, 4, xin)
        acc += mm(w_r, 3, mask(roll(xin, 1), base + 3))
        acc += mm(w_r, 5, mask(roll(xin, -1), base + 5))
        # kt = 0 taps: factor the time roll, derive +-1 lane rolls from it
        xt = roll(xin, dil * F)
        acc += mm(w_r, 1, mask(xt, base + 1))
        acc += mm(w_r, 0, mask(roll(xt, 1), base + 0))
        acc += mm(w_r, 2, mask(roll(xt, -1), base + 2))
        # InstanceNorm2d (conv bias is cancelled by the mean subtraction, so it
        # is never added); gamma folded into the per-channel rsqrt scale.
        mean = jnp.mean(acc, axis=1, keepdims=True)
        cent = acc - mean
        var = jnp.mean(cent * cent, axis=1, keepdims=True)
        scale = g_r[...] * lax.rsqrt(var + EPS)          # (C, 1)
        y = cent * scale + be_r[...]
        y = jnp.where(y >= 0, y, a_r[...] * y)           # PReLU
        skip_ref[(3 - i) * C:(4 - i) * C, :] = y

    # ---- SPConvTranspose2d inner Conv2d((1,3)) -> 2C channels + PReLU -------
    # (PReLU commutes with the sub-pixel shuffle when alpha is tiled to 2C.)
    xin = skip_ref[0:C, :]
    y = mm(ws, 1, xin) + bs[...]                         # kf=1, all-ones mask
    y += mm(ws, 0, mask(roll(xin, 1), 3))                # kf=0
    y += mm(ws, 2, mask(roll(xin, -1), 5))               # kf=2
    y = jnp.where(y >= 0, y, asub[...] * y)              # (2C, S)

    # ---- sub-pixel shuffle (r=2 along F) fused with final Conv2d(C,2,(1,2)) -
    # shuffled[c, t, 2f]   = y0[c, t*F+f] ; shuffled[c, t, 2f+1] = y1[c, t*F+f]
    # even w=2f   : wf0 . y0 + wf1 . y1
    # odd  w=2f+1 : wf0 . y1 + wf1 . y0[f+1]   (f+1 masked at the F edge)
    y0 = y[0:C, :]
    y1 = y[C:2 * C, :]
    y0s = mask(roll(y0, -1), 5)                          # y0 at f+1, edge zeroed
    even = mm(wf, 0, y0) + mm(wf, 1, y1) + bf[...]
    odd = mm(wf, 0, y1) + mm(wf, 1, y0s) + bf[...]
    o_ref[0] = jnp.concatenate([even, odd], axis=0).astype(o_ref.dtype)  # (4,S)


# ------------------------------ pallas_call glue ----------------------------

def _const_spec(p):
    nd = p.ndim
    return pl.BlockSpec(p.shape, lambda b, _nd=nd: (0,) * _nd)


def complex_decoder_forward(x_nchw, params, mxu_dtype=jnp.float32):
    """x_nchw: [B, C, T, F] float32 (PyTorch layout). Returns [B, 2, T, 2F-1].

    mxu_dtype: set to jnp.bfloat16 on v6e/v7x at production sizes (f32 here to
    keep the small-size numerical check tight).
    """
    B, C, T, F = x_nchw.shape
    S = T * F
    x_flat = x_nchw.reshape(B, C, S).astype(jnp.float32)

    # Static 0/1 validity masks for the rolled conv taps (built at trace time).
    # Row = layer*6 + kt*3 + kf ; flat position p = t*F + f.
    p = np.arange(S)
    f = p % F
    col_ok = [f >= 1, np.ones(S, bool), f <= F - 2]
    m = np.zeros((24, S), np.float32)
    for i in range(4):
        dil = 2 ** i
        for kt in range(2):
            row_ok = (p >= dil * F) if kt == 0 else np.ones(S, bool)
            for kf in range(3):
                m[i * 6 + kt * 3 + kf] = (row_ok & col_ok[kf]).astype(np.float32)
    masks = jnp.asarray(m)

    flat_params = []
    for i in range(4):
        d = params["dense"][i]
        flat_params += [d["w"].astype(mxu_dtype), d["gamma"], d["beta"],
                        d["alpha"]]
    flat_params += [params["sub"]["w"].astype(mxu_dtype), params["sub"]["b"],
                    params["prelu_alpha2"]]
    flat_params += [params["conv"]["w"].astype(mxu_dtype), params["conv"]["b"]]

    in_specs = [pl.BlockSpec((1, C, S), lambda b: (b, 0, 0)),
                _const_spec(masks)] + [_const_spec(q) for q in flat_params]

    kern = functools.partial(_decoder_kernel, C=C, T=T, F=F,
                             mxu_dtype=mxu_dtype)
    out = pl.pallas_call(
        kern,
        out_shape=jax.ShapeDtypeStruct((B, 4, S), jnp.float32),
        grid=(B,),
        in_specs=in_specs,
        out_specs=pl.BlockSpec((1, 4, S), lambda b: (b, 0, 0)),
        scratch_shapes=[pltpu.VMEM((5 * C, S), jnp.float32)],
        compiler_params=pltpu.CompilerParams(
            # Use pltpu.CORE_PARALLEL here on v7x (2 TensorCores) to shard B.
            dimension_semantics=("parallel",),
            vmem_limit_bytes=32 * 1024 * 1024),
    )(x_flat, masks, *flat_params)

    # out[b, parity*2 + cc, t*F+f] -> z[b, cc, t, 2*f + parity]  (tiny tensor)
    z = out.reshape(B, 2, 2, T, F)
    z = jnp.transpose(z, (0, 2, 3, 4, 1)).reshape(B, 2, T, 2 * F)
    return z[:, :, :, :2 * F - 1]


# --------------------------- deterministic params ---------------------------

def init_params(key, C):
    keys = iter(jax.random.split(key, 32))
    dense_k, dense_pt = [], []
    for i in range(4):
        Cin = C * (i + 1)
        w_pt = jax.random.normal(next(keys), (C, Cin, 2, 3),
                                 jnp.float32) / np.sqrt(Cin * 6)
        b = jax.random.normal(next(keys), (C,), jnp.float32) * 0.05
        gamma = 1.0 + 0.1 * jax.random.normal(next(keys), (C,), jnp.float32)
        beta = 0.1 * jax.random.normal(next(keys), (C,), jnp.float32)
        alpha = jnp.full((C,), 0.25, jnp.float32)        # nn.PReLU default
        # tap-major packing: w_k[kt*3+kf, cout, cin] = w_pt[cout, cin, kt, kf]
        w_k = jnp.transpose(w_pt, (2, 3, 0, 1)).reshape(6, C, Cin)
        # NOTE: conv bias is not passed to the kernel (dead under InstanceNorm).
        dense_k.append(dict(w=w_k, gamma=gamma.reshape(C, 1),
                            beta=beta.reshape(C, 1), alpha=alpha.reshape(C, 1)))
        dense_pt.append(dict(w=w_pt, b=b, gamma=gamma, beta=beta, alpha=alpha))

    w_sub_pt = jax.random.normal(next(keys), (2 * C, C, 1, 3),
                                 jnp.float32) / np.sqrt(C * 3)
    b_sub = jax.random.normal(next(keys), (2 * C,), jnp.float32) * 0.05
    prelu_alpha = jnp.full((C,), 0.25, jnp.float32)
    w_c_pt = jax.random.normal(next(keys), (2, C, 1, 2),
                               jnp.float32) / np.sqrt(C * 2)
    b_c = jax.random.normal(next(keys), (2,), jnp.float32) * 0.05

    params = dict(
        dense=dense_k,
        sub=dict(w=jnp.transpose(w_sub_pt, (2, 3, 0, 1)).reshape(3, 2 * C, C),
                 b=b_sub.reshape(2 * C, 1)),
        prelu_alpha2=jnp.tile(prelu_alpha, 2).reshape(2 * C, 1),
        conv=dict(w=jnp.transpose(w_c_pt, (2, 3, 0, 1)).reshape(2, 2, C),
                  b=b_c.reshape(2, 1)),
    )
    params_pt = dict(dense=dense_pt, sub=dict(w=w_sub_pt, b=b_sub),
                     prelu_alpha=prelu_alpha, conv=dict(w=w_c_pt, b=b_c))
    return params, params_pt


# ------------------------------ pure-JAX reference ---------------------------

def _conv2d_nhwc(x, w_pt, b, dilation=(1, 1)):
    out = jax.lax.conv_general_dilated(
        x, jnp.transpose(w_pt, (2, 3, 1, 0)),
        window_strides=(1, 1), padding="VALID", rhs_dilation=dilation,
        dimension_numbers=("NHWC", "HWIO", "NHWC"),
        precision=jax.lax.Precision.HIGHEST)
    return out + b


def reference_forward(x_nchw, pt):
    B, C, T, F = x_nchw.shape
    h = jnp.transpose(x_nchw, (0, 2, 3, 1)).astype(jnp.float32)
    skip, out = h, h
    for i in range(4):
        dil = 2 ** i
        p = pt["dense"][i]
        xp = jnp.pad(skip, ((0, 0), (dil, 0), (1, 1), (0, 0)))
        out = _conv2d_nhwc(xp, p["w"], p["b"], dilation=(dil, 1))
        mean = out.mean(axis=(1, 2), keepdims=True)
        var = ((out - mean) ** 2).mean(axis=(1, 2), keepdims=True)
        out = (out - mean) / jnp.sqrt(var + EPS) * p["gamma"] + p["beta"]
        out = jnp.where(out >= 0, out, p["alpha"] * out)
        skip = jnp.concatenate([out, skip], axis=-1)
    xp = jnp.pad(out, ((0, 0), (0, 0), (1, 1), (0, 0)))
    y = _conv2d_nhwc(xp, pt["sub"]["w"], pt["sub"]["b"])
    y = y.reshape(B, T, F, 2, C).reshape(B, T, 2 * F, C)
    y = jnp.where(y >= 0, y, pt["prelu_alpha"] * y)
    z = _conv2d_nhwc(y, pt["conv"]["w"], pt["conv"]["b"])
    return jnp.transpose(z, (0, 3, 1, 2))


# ----------------------------------- main ------------------------------------

if __name__ == "__main__":
    B, C, T, F = 2, 8, 16, 16        # small: num_channel=8, 16 frames, 16 bins
    key = jax.random.PRNGKey(0)
    kx, kp = jax.random.split(key)
    x = jax.random.normal(kx, (B, C, T, F), jnp.float32)   # PyTorch NCHW
    params, params_pt = init_params(kp, C)

    out = jax.jit(complex_decoder_forward)(x, params)
    out = jax.block_until_ready(out)
    assert out.shape == (B, 2, T, 2 * F - 1), out.shape

    ref = reference_forward(x, params_pt)
    err = float(jnp.max(jnp.abs(out - ref)))
    assert err < 1e-2, f"max abs err {err}"
    print("KERNEL_OK")
</pallas_src>

<mosaic_0001>
module attributes {stable_mosaic.version = 11 : i64} {
  func.func @_decoder_kernel(%arg0: i32, %arg1: memref<1x8x256xf32, #tpu.memory_space<vmem>>, %arg2: memref<24x256xf32, #tpu.memory_space<vmem>>, %arg3: memref<6x8x8xf32, #tpu.memory_space<vmem>>, %arg4: memref<8x1xf32, #tpu.memory_space<vmem>>, %arg5: memref<8x1xf32, #tpu.memory_space<vmem>>, %arg6: memref<8x1xf32, #tpu.memory_space<vmem>>, %arg7: memref<6x8x16xf32, #tpu.memory_space<vmem>>, %arg8: memref<8x1xf32, #tpu.memory_space<vmem>>, %arg9: memref<8x1xf32, #tpu.memory_space<vmem>>, %arg10: memref<8x1xf32, #tpu.memory_space<vmem>>, %arg11: memref<6x8x24xf32, #tpu.memory_space<vmem>>, %arg12: memref<8x1xf32, #tpu.memory_space<vmem>>, %arg13: memref<8x1xf32, #tpu.memory_space<vmem>>, %arg14: memref<8x1xf32, #tpu.memory_space<vmem>>, %arg15: memref<6x8x32xf32, #tpu.memory_space<vmem>>, %arg16: memref<8x1xf32, #tpu.memory_space<vmem>>, %arg17: memref<8x1xf32, #tpu.memory_space<vmem>>, %arg18: memref<8x1xf32, #tpu.memory_space<vmem>>, %arg19: memref<3x16x8xf32, #tpu.memory_space<vmem>>, %arg20: memref<16x1xf32, #tpu.memory_space<vmem>>, %arg21: memref<16x1xf32, #tpu.memory_space<vmem>>, %arg22: memref<2x2x8xf32, #tpu.memory_space<vmem>>, %arg23: memref<2x1xf32, #tpu.memory_space<vmem>>, %arg24: memref<1x4x256xf32, #tpu.memory_space<vmem>>, %arg25: memref<40x256xf32, #tpu.memory_space<vmem>>) attributes {dimension_semantics = [#tpu.dimension_semantics<parallel>], iteration_bounds = array<i64: 2>, scalar_prefetch = 0 : i64, scratch_operands = 1 : i64, tpu.core_type = #tpu.core_type<tc>, window_params = [{transform_indices = @transform_0, window_bounds = array<i64: 1, 8, 256>}, {pipeline_mode = #tpu.pipeline_mode<synchronous>, transform_indices = @transform_1, window_bounds = array<i64: 24, 256>}, {pipeline_mode = #tpu.pipeline_mode<synchronous>, transform_indices = @transform_2, window_bounds = array<i64: 6, 8, 8>}, {pipeline_mode = #tpu.pipeline_mode<synchronous>, transform_indices = @transform_3, window_bounds = array<i64: 8, 1>}, {pipeline_mode = #tpu.pipeline_mode<synchronous>, transform_indices = @transform_4, window_bounds = array<i64: 8, 1>}, {pipeline_mode = #tpu.pipeline_mode<synchronous>, transform_indices = @transform_5, window_bounds = array<i64: 8, 1>}, {pipeline_mode = #tpu.pipeline_mode<synchronous>, transform_indices = @transform_6, window_bounds = array<i64: 6, 8, 16>}, {pipeline_mode = #tpu.pipeline_mode<synchronous>, transform_indices = @transform_7, window_bounds = array<i64: 8, 1>}, {pipeline_mode = #tpu.pipeline_mode<synchronous>, transform_indices = @transform_8, window_bounds = array<i64: 8, 1>}, {pipeline_mode = #tpu.pipeline_mode<synchronous>, transform_indices = @transform_9, window_bounds = array<i64: 8, 1>}, {pipeline_mode = #tpu.pipeline_mode<synchronous>, transform_indices = @transform_10, window_bounds = array<i64: 6, 8, 24>}, {pipeline_mode = #tpu.pipeline_mode<synchronous>, transform_indices = @transform_11, window_bounds = array<i64: 8, 1>}, {pipeline_mode = #tpu.pipeline_mode<synchronous>, transform_indices = @transform_12, window_bounds = array<i64: 8, 1>}, {pipeline_mode = #tpu.pipeline_mode<synchronous>, transform_indices = @transform_13, window_bounds = array<i64: 8, 1>}, {pipeline_mode = #tpu.pipeline_mode<synchronous>, transform_indices = @transform_14, window_bounds = array<i64: 6, 8, 32>}, {pipeline_mode = #tpu.pipeline_mode<synchronous>, transform_indices = @transform_15, window_bounds = array<i64: 8, 1>}, {pipeline_mode = #tpu.pipeline_mode<synchronous>, transform_indices = @transform_16, window_bounds = array<i64: 8, 1>}, {pipeline_mode = #tpu.pipeline_mode<synchronous>, transform_indices = @transform_17, window_bounds = array<i64: 8, 1>}, {pipeline_mode = #tpu.pipeline_mode<synchronous>, transform_indices = @transform_18, window_bounds = array<i64: 3, 16, 8>}, {pipeline_mode = #tpu.pipeline_mode<synchronous>, transform_indices = @transform_19, window_bounds = array<i64: 16, 1>}, {pipeline_mode = #tpu.pipeline_mode<synchronous>, transform_indices = @transform_20, window_bounds = array<i64: 16, 1>}, {pipeline_mode = #tpu.pipeline_mode<synchronous>, transform_indices = @transform_21, window_bounds = array<i64: 2, 2, 8>}, {pipeline_mode = #tpu.pipeline_mode<synchronous>, transform_indices = @transform_22, window_bounds = array<i64: 2, 1>}, {transform_indices = @transform_23, window_bounds = array<i64: 1, 4, 256>}]} {
    %c0 = arith.constant 0 : index
    %c0_0 = arith.constant 0 : index
    %c0_1 = arith.constant 0 : index
    %0 = vector.load %arg1[%c0, %c0_0, %c0_1] : memref<1x8x256xf32, #tpu.memory_space<vmem>>, vector<1x8x256xf32>
    %1 = vector.shape_cast %0 : vector<1x8x256xf32> to vector<8x256xf32>
    %c32 = arith.constant 32 : index
    %c0_2 = arith.constant 0 : index
    %2 = vector.load %arg25[%c32, %c0_2] : memref<40x256xf32, #tpu.memory_space<vmem>>, vector<8x256xf32>
    tpu.vector_store %arg25[%c32, %c0_2], %1 {strides = array<i32>} : memref<40x256xf32, #tpu.memory_space<vmem>>, vector<8x256xf32>,
    %c32_3 = arith.constant 32 : index
    %c0_4 = arith.constant 0 : index
    %3 = vector.load %arg25[%c32_3, %c0_4] : memref<40x256xf32, #tpu.memory_space<vmem>>, vector<8x256xf32>
    %c4 = arith.constant 4 : index
    %c0_5 = arith.constant 0 : index
    %c0_6 = arith.constant 0 : index
    %4 = vector.load %arg3[%c4, %c0_5, %c0_6] : memref<6x8x8xf32, #tpu.memory_space<vmem>>, vector<1x8x8xf32>
    %5 = vector.shape_cast %4 : vector<1x8x8xf32> to vector<8x8xf32>
    %cst = arith.constant dense<0.000000e+00> : vector<8x256xf32>
    %6 = tpu.matmul %5, %3, %cst {dimension_numbers = #tpu.dot_dimension_numbers<[1], [0], [0], [1], [0, 0, 1, 1], [], []>} : vector<8x8xf32>, vector<8x256xf32>, vector<8x256xf32> -> vector<8x256xf32>
    %c1_i32 = arith.constant 1 : i32
    %7 = tpu.dynamic_rotate %3 by %c1_i32 dim 1 : vector<8x256xf32>, i32 -> vector<8x256xf32>
    %c3 = arith.constant 3 : index
    %c0_7 = arith.constant 0 : index
    %8 = vector.load %arg2[%c3, %c0_7] : memref<24x256xf32, #tpu.memory_space<vmem>>, vector<1x256xf32>
    %9 = vector.broadcast %8 : vector<1x256xf32> to vector<8x256xf32>
    %10 = arith.mulf %7, %9 : vector<8x256xf32>
    %c3_8 = arith.constant 3 : index
    %c0_9 = arith.constant 0 : index
    %c0_10 = arith.constant 0 : index
    %11 = vector.load %arg3[%c3_8, %c0_9, %c0_10] : memref<6x8x8xf32, #tpu.memory_space<vmem>>, vector<1x8x8xf32>
    %12 = vector.shape_cast %11 : vector<1x8x8xf32> to vector<8x8xf32>
    %cst_11 = arith.constant dense<0.000000e+00> : vector<8x256xf32>
    %13 = tpu.matmul %12, %10, %cst_11 {dimension_numbers = #tpu.dot_dimension_numbers<[1], [0], [0], [1], [0, 0, 1, 1], [], []>} : vector<8x8xf32>, vector<8x256xf32>, vector<8x256xf32> -> vector<8x256xf32>
    %14 = arith.addf %6, %13 : vector<8x256xf32>
    %c255_i32 = arith.constant 255 : i32
    %15 = tpu.dynamic_rotate %3 by %c255_i32 dim 1 : vector<8x256xf32>, i32 -> vector<8x256xf32>
    %c5 = arith.constant 5 : index
    %c0_12 = arith.constant 0 : index
    %16 = vector.load %arg2[%c5, %c0_12] : memref<24x256xf32, #tpu.memory_space<vmem>>, vector<1x256xf32>
    %17 = vector.broadcast %16 : vector<1x256xf32> to vector<8x256xf32>
    %18 = arith.mulf %15, %17 : vector<8x256xf32>
    %c5_13 = arith.constant 5 : index
    %c0_14 = arith.constant 0 : index
    %c0_15 = arith.constant 0 : index
    %19 = vector.load %arg3[%c5_13, %c0_14, %c0_15] : memref<6x8x8xf32, #tpu.memory_space<vmem>>, vector<1x8x8xf32>
    %20 = vector.shape_cast %19 : vector<1x8x8xf32> to vector<8x8xf32>
    %cst_16 = arith.constant dense<0.000000e+00> : vector<8x256xf32>
    %21 = tpu.matmul %20, %18, %cst_16 {dimension_numbers = #tpu.dot_dimension_numbers<[1], [0], [0], [1], [0, 0, 1, 1], [], []>} : vector<8x8xf32>, vector<8x256xf32>, vector<8x256xf32> -> vector<8x256xf32>
    %22 = arith.addf %14, %21 : vector<8x256xf32>
    %c16_i32 = arith.constant 16 : i32
    %23 = tpu.dynamic_rotate %3 by %c16_i32 dim 1 : vector<8x256xf32>, i32 -> vector<8x256xf32>
    %c1 = arith.constant 1 : index
    %c0_17 = arith.constant 0 : index
    %24 = vector.load %arg2[%c1, %c0_17] : memref<24x256xf32, #tpu.memory_space<vmem>>, vector<1x256xf32>
    %25 = vector.broadcast %24 : vector<1x256xf32> to vector<8x256xf32>
    %26 = arith.mulf %23, %25 : vector<8x256xf32>
    %c1_18 = arith.constant 1 : index
    %c0_19 = arith.constant 0 : index
    %c0_20 = arith.constant 0 : index
    %27 = vector.load %arg3[%c1_18, %c0_19, %c0_20] : memref<6x8x8xf32, #tpu.memory_space<vmem>>, vector<1x8x8xf32>
    %28 = vector.shape_cast %27 : vector<1x8x8xf32> to vector<8x8xf32>
    %cst_21 = arith.constant dense<0.000000e+00> : vector<8x256xf32>
    %29 = tpu.matmul %28, %26, %cst_21 {dimension_numbers = #tpu.dot_dimension_numbers<[1], [0], [0], [1], [0, 0, 1, 1], [], []>} : vector<8x8xf32>, vector<8x256xf32>, vector<8x256xf32> -> vector<8x256xf32>
    %30 = arith.addf %22, %29 : vector<8x256xf32>
    %c1_i32_22 = arith.constant 1 : i32
    %31 = tpu.dynamic_rotate %23 by %c1_i32_22 dim 1 : vector<8x256xf32>, i32 -> vector<8x256xf32>
    %c0_23 = arith.constant 0 : index
    %c0_24 = arith.constant 0 : index
    %32 = vector.load %arg2[%c0_23, %c0_24] : memref<24x256xf32, #tpu.memory_space<vmem>>, vector<1x256xf32>
    %33 = vector.broadcast %32 : vector<1x256xf32> to vector<8x256xf32>
    %34 = arith.mulf %31, %33 : vector<8x256xf32>
    %c0_25 = arith.constant 0 : index
    %c0_26 = arith.constant 0 : index
    %c0_27 = arith.constant 0 : index
    %35 = vector.load %arg3[%c0_25, %c0_26, %c0_27] : memref<6x8x8xf32, #tpu.memory_space<vmem>>, vector<1x8x8xf32>
    %36 = vector.shape_cast %35 : vector<1x8x8xf32> to vector<8x8xf32>
    %cst_28 = arith.constant dense<0.000000e+00> : vector<8x256xf32>
    %37 = tpu.matmul %36, %34, %cst_28 {dimension_numbers = #tpu.dot_dimension_numbers<[1], [0], [0], [1], [0, 0, 1, 1], [], []>} : vector<8x8xf32>, vector<8x256xf32>, vector<8x256xf32> -> vector<8x256xf32>
    %38 = arith.addf %30, %37 : vector<8x256xf32>
    %c255_i32_29 = arith.constant 255 : i32
    %39 = tpu.dynamic_rotate %23 by %c255_i32_29 dim 1 : vector<8x256xf32>, i32 -> vector<8x256xf32>
    %c2 = arith.constant 2 : index
    %c0_30 = arith.constant 0 : index
    %40 = vector.load %arg2[%c2, %c0_30] : memref<24x256xf32, #tpu.memory_space<vmem>>, vector<1x256xf32>
    %41 = vector.broadcast %40 : vector<1x256xf32> to vector<8x256xf32>
    %42 = arith.mulf %39, %41 : vector<8x256xf32>
    %c2_31 = arith.constant 2 : index
    %c0_32 = arith.constant 0 : index
    %c0_33 = arith.constant 0 : index
    %43 = vector.load %arg3[%c2_31, %c0_32, %c0_33] : memref<6x8x8xf32, #tpu.memory_space<vmem>>, vector<1x8x8xf32>
    %44 = vector.shape_cast %43 : vector<1x8x8xf32> to vector<8x8xf32>
    %cst_34 = arith.constant dense<0.000000e+00> : vector<8x256xf32>
    %45 = tpu.matmul %44, %42, %cst_34 {dimension_numbers = #tpu.dot_dimension_numbers<[1], [0], [0], [1], [0, 0, 1, 1], [], []>} : vector<8x8xf32>, vector<8x256xf32>, vector<8x256xf32> -> vector<8x256xf32>
    %46 = arith.addf %38, %45 : vector<8x256xf32>
    %cst_35 = arith.constant dense<0.000000e+00> : vector<8xf32>
    %47 = vector.multi_reduction <add>, %46, %cst_35 [1] : vector<8x256xf32> to vector<8xf32>
    %48 = vector.shape_cast %47 : vector<8xf32> to vector<8x1xf32>
    %cst_36 = arith.constant 2.560000e+02 : f32
    %49 = vector.broadcast %cst_36 : f32 to vector<8x1xf32>
    %50 = arith.divf %48, %49 : vector<8x1xf32>
    %51 = vector.broadcast %50 : vector<8x1xf32> to vector<8x256xf32>
    %52 = arith.subf %46, %51 : vector<8x256xf32>
    %53 = arith.mulf %52, %52 : vector<8x256xf32>
    %cst_37 = arith.constant dense<0.000000e+00> : vector<8xf32>
    %54 = vector.multi_reduction <add>, %53, %cst_37 [1] : vector<8x256xf32> to vector<8xf32>
    %55 = vector.shape_cast %54 : vector<8xf32> to vector<8x1xf32>
    %cst_38 = arith.constant 2.560000e+02 : f32
    %56 = vector.broadcast %cst_38 : f32 to vector<8x1xf32>
    %57 = arith.divf %55, %56 : vector<8x1xf32>
    %c0_39 = arith.constant 0 : index
    %c0_40 = arith.constant 0 : index
    %58 = vector.load %arg4[%c0_39, %c0_40] : memref<8x1xf32, #tpu.memory_space<vmem>>, vector<8x1xf32>
    %cst_41 = arith.constant 9.99999974E-6 : f32
    %59 = vector.broadcast %cst_41 : f32 to vector<8x1xf32>
    %60 = arith.addf %57, %59 : vector<8x1xf32>
    %61 = math.rsqrt %60 : vector<8x1xf32>
    %62 = arith.mulf %58, %61 : vector<8x1xf32>
    %63 = vector.broadcast %62 : vector<8x1xf32> to vector<8x256xf32>
    %64 = arith.mulf %52, %63 : vector<8x256xf32>
    %c0_42 = arith.constant 0 : index
    %c0_43 = arith.constant 0 : index
    %65 = vector.load %arg5[%c0_42, %c0_43] : memref<8x1xf32, #tpu.memory_space<vmem>>, vector<8x1xf32>
    %66 = vector.broadcast %65 : vector<8x1xf32> to vector<8x256xf32>
    %67 = arith.addf %64, %66 : vector<8x256xf32>
    %cst_44 = arith.constant 0.000000e+00 : f32
    %68 = vector.broadcast %cst_44 : f32 to vector<8x256xf32>
    %69 = arith.cmpf oge, %67, %68 : vector<8x256xf32>
    %c0_45 = arith.constant 0 : index
    %c0_46 = arith.constant 0 : index
    %70 = vector.load %arg6[%c0_45, %c0_46] : memref<8x1xf32, #tpu.memory_space<vmem>>, vector<8x1xf32>
    %71 = vector.broadcast %70 : vector<8x1xf32> to vector<8x256xf32>
    %72 = arith.mulf %71, %67 : vector<8x256xf32>
    %73 = arith.select %69, %67, %72 : vector<8x256xi1>, vector<8x256xf32>
    %c24 = arith.constant 24 : index
    %c0_47 = arith.constant 0 : index
    %74 = vector.load %arg25[%c24, %c0_47] : memref<40x256xf32, #tpu.memory_space<vmem>>, vector<8x256xf32>
    tpu.vector_store %arg25[%c24, %c0_47], %73 {strides = array<i32>} : memref<40x256xf32, #tpu.memory_space<vmem>>, vector<8x256xf32>,
    %c24_48 = arith.constant 24 : index
    %c0_49 = arith.constant 0 : index
    %75 = vector.load %arg25[%c24_48, %c0_49] : memref<40x256xf32, #tpu.memory_space<vmem>>, vector<16x256xf32>
    %c4_50 = arith.constant 4 : index
    %c0_51 = arith.constant 0 : index
    %c0_52 = arith.constant 0 : index
    %76 = vector.load %arg7[%c4_50, %c0_51, %c0_52] : memref<6x8x16xf32, #tpu.memory_space<vmem>>, vector<1x8x16xf32>
    %77 = vector.shape_cast %76 : vector<1x8x16xf32> to vector<8x16xf32>
    %cst_53 = arith.constant dense<0.000000e+00> : vector<8x256xf32>
    %78 = tpu.matmul %77, %75, %cst_53 {dimension_numbers = #tpu.dot_dimension_numbers<[1], [0], [0], [1], [0, 0, 1, 1], [], []>} : vector<8x16xf32>, vector<16x256xf32>, vector<8x256xf32> -> vector<8x256xf32>
    %c1_i32_54 = arith.constant 1 : i32
    %79 = tpu.dynamic_rotate %75 by %c1_i32_54 dim 1 : vector<16x256xf32>, i32 -> vector<16x256xf32>
    %c9 = arith.constant 9 : index
    %c0_55 = arith.constant 0 : index
    %80 = vector.load %arg2[%c9, %c0_55] : memref<24x256xf32, #tpu.memory_space<vmem>>, vector<1x256xf32>
    %81 = vector.broadcast %80 : vector<1x256xf32> to vector<16x256xf32>
    %82 = arith.mulf %79, %81 : vector<16x256xf32>
    %c3_56 = arith.constant 3 : index
    %c0_57 = arith.constant 0 : index
    %c0_58 = arith.constant 0 : index
    %83 = vector.load %arg7[%c3_56, %c0_57, %c0_58] : memref<6x8x16xf32, #tpu.memory_space<vmem>>, vector<1x8x16xf32>
    %84 = vector.shape_cast %83 : vector<1x8x16xf32> to vector<8x16xf32>
    %cst_59 = arith.constant dense<0.000000e+00> : vector<8x256xf32>
    %85 = tpu.matmul %84, %82, %cst_59 {dimension_numbers = #tpu.dot_dimension_numbers<[1], [0], [0], [1], [0, 0, 1, 1], [], []>} : vector<8x16xf32>, vector<16x256xf32>, vector<8x256xf32> -> vector<8x256xf32>
    %86 = arith.addf %78, %85 : vector<8x256xf32>
    %c255_i32_60 = arith.constant 255 : i32
    %87 = tpu.dynamic_rotate %75 by %c255_i32_60 dim 1 : vector<16x256xf32>, i32 -> vector<16x256xf32>
    %c11 = arith.constant 11 : index
    %c0_61 = arith.constant 0 : index
    %88 = vector.load %arg2[%c11, %c0_61] : memref<24x256xf32, #tpu.memory_space<vmem>>, vector<1x256xf32>
    %89 = vector.broadcast %88 : vector<1x256xf32> to vector<16x256xf32>
    %90 = arith.mulf %87, %89 : vector<16x256xf32>
    %c5_62 = arith.constant 5 : index
    %c0_63 = arith.constant 0 : index
    %c0_64 = arith.constant 0 : index
    %91 = vector.load %arg7[%c5_62, %c0_63, %c0_64] : memref<6x8x16xf32, #tpu.memory_space<vmem>>, vector<1x8x16xf32>
    %92 = vector.shape_cast %91 : vector<1x8x16xf32> to vector<8x16xf32>
    %cst_65 = arith.constant dense<0.000000e+00> : vector<8x256xf32>
    %93 = tpu.matmul %92, %90, %cst_65 {dimension_numbers = #tpu.dot_dimension_numbers<[1], [0], [0], [1], [0, 0, 1, 1], [], []>} : vector<8x16xf32>, vector<16x256xf32>, vector<8x256xf32> -> vector<8x256xf32>
    %94 = arith.addf %86, %93 : vector<8x256xf32>
    %c32_i32 = arith.constant 32 : i32
    %95 = tpu.dynamic_rotate %75 by %c32_i32 dim 1 : vector<16x256xf32>, i32 -> vector<16x256xf32>
    %c7 = arith.constant 7 : index
    %c0_66 = arith.constant 0 : index
    %96 = vector.load %arg2[%c7, %c0_66] : memref<24x256xf32, #tpu.memory_space<vmem>>, vector<1x256xf32>
    %97 = vector.broadcast %96 : vector<1x256xf32> to vector<16x256xf32>
    %98 = arith.mulf %95, %97 : vector<16x256xf32>
    %c1_67 = arith.constant 1 : index
    %c0_68 = arith.constant 0 : index
    %c0_69 = arith.constant 0 : index
    %99 = vector.load %arg7[%c1_67, %c0_68, %c0_69] : memref<6x8x16xf32, #tpu.memory_space<vmem>>, vector<1x8x16xf32>
    %100 = vector.shape_cast %99 : vector<1x8x16xf32> to vector<8x16xf32>
    %cst_70 = arith.constant dense<0.000000e+00> : vector<8x256xf32>
    %101 = tpu.matmul %100, %98, %cst_70 {dimension_numbers = #tpu.dot_dimension_numbers<[1], [0], [0], [1], [0, 0, 1, 1], [], []>} : vector<8x16xf32>, vector<16x256xf32>, vector<8x256xf32> -> vector<8x256xf32>
    %102 = arith.addf %94, %101 : vector<8x256xf32>
    %c1_i32_71 = arith.constant 1 : i32
    %103 = tpu.dynamic_rotate %95 by %c1_i32_71 dim 1 : vector<16x256xf32>, i32 -> vector<16x256xf32>
    %c6 = arith.constant 6 : index
    %c0_72 = arith.constant 0 : index
    %104 = vector.load %arg2[%c6, %c0_72] : memref<24x256xf32, #tpu.memory_space<vmem>>, vector<1x256xf32>
    %105 = vector.broadcast %104 : vector<1x256xf32> to vector<16x256xf32>
    %106 = arith.mulf %103, %105 : vector<16x256xf32>
    %c0_73 = arith.constant 0 : index
    %c0_74 = arith.constant 0 : index
    %c0_75 = arith.constant 0 : index
    %107 = vector.load %arg7[%c0_73, %c0_74, %c0_75] : memref<6x8x16xf32, #tpu.memory_space<vmem>>, vector<1x8x16xf32>
    %108 = vector.shape_cast %107 : vector<1x8x16xf32> to vector<8x16xf32>
    %cst_76 = arith.constant dense<0.000000e+00> : vector<8x256xf32>
    %109 = tpu.matmul %108, %106, %cst_76 {dimension_numbers = #tpu.dot_dimension_numbers<[1], [0], [0], [1], [0, 0, 1, 1], [], []>} : vector<8x16xf32>, vector<16x256xf32>, vector<8x256xf32> -> vector<8x256xf32>
    %110 = arith.addf %102, %109 : vector<8x256xf32>
    %c255_i32_77 = arith.constant 255 : i32
    %111 = tpu.dynamic_rotate %95 by %c255_i32_77 dim 1 : vector<16x256xf32>, i32 -> vector<16x256xf32>
    %c8 = arith.constant 8 : index
    %c0_78 = arith.constant 0 : index
    %112 = vector.load %arg2[%c8, %c0_78] : memref<24x256xf32, #tpu.memory_space<vmem>>, vector<1x256xf32>
    %113 = vector.broadcast %112 : vector<1x256xf32> to vector<16x256xf32>
    %114 = arith.mulf %111, %113 : vector<16x256xf32>
    %c2_79 = arith.constant 2 : index
    %c0_80 = arith.constant 0 : index
    %c0_81 = arith.constant 0 : index
    %115 = vector.load %arg7[%c2_79, %c0_80, %c0_81] : memref<6x8x16xf32, #tpu.memory_space<vmem>>, vector<1x8x16xf32>
    %116 = vector.shape_cast %115 : vector<1x8x16xf32> to vector<8x16xf32>
    %cst_82 = arith.constant dense<0.000000e+00> : vector<8x256xf32>
    %117 = tpu.matmul %116, %114, %cst_82 {dimension_numbers = #tpu.dot_dimension_numbers<[1], [0], [0], [1], [0, 0, 1, 1], [], []>} : vector<8x16xf32>, vector<16x256xf32>, vector<8x256xf32> -> vector<8x256xf32>
    %118 = arith.addf %110, %117 : vector<8x256xf32>
    %cst_83 = arith.constant dense<0.000000e+00> : vector<8xf32>
    %119 = vector.multi_reduction <add>, %118, %cst_83 [1] : vector<8x256xf32> to vector<8xf32>
    %120 = vector.shape_cast %119 : vector<8xf32> to vector<8x1xf32>
    %cst_84 = arith.constant 2.560000e+02 : f32
    %121 = vector.broadcast %cst_84 : f32 to vector<8x1xf32>
    %122 = arith.divf %120, %121 : vector<8x1xf32>
    %123 = vector.broadcast %122 : vector<8x1xf32> to vector<8x256xf32>
    %124 = arith.subf %118, %123 : vector<8x256xf32>
    %125 = arith.mulf %124, %124 : vector<8x256xf32>
    %cst_85 = arith.constant dense<0.000000e+00> : vector<8xf32>
    %126 = vector.multi_reduction <add>, %125, %cst_85 [1] : vector<8x256xf32> to vector<8xf32>
    %127 = vector.shape_cast %126 : vector<8xf32> to vector<8x1xf32>
    %cst_86 = arith.constant 2.560000e+02 : f32
    %128 = vector.broadcast %cst_86 : f32 to vector<8x1xf32>
    %129 = arith.divf %127, %128 : vector<8x1xf32>
    %c0_87 = arith.constant 0 : index
    %c0_88 = arith.constant 0 : index
    %130 = vector.load %arg8[%c0_87, %c0_88] : memref<8x1xf32, #tpu.memory_space<vmem>>, vector<8x1xf32>
    %cst_89 = arith.constant 9.99999974E-6 : f32
    %131 = vector.broadcast %cst_89 : f32 to vector<8x1xf32>
    %132 = arith.addf %129, %131 : vector<8x1xf32>
    %133 = math.rsqrt %132 : vector<8x1xf32>
    %134 = arith.mulf %130, %133 : vector<8x1xf32>
    %135 = vector.broadcast %134 : vector<8x1xf32> to vector<8x256xf32>
    %136 = arith.mulf %124, %135 : vector<8x256xf32>
    %c0_90 = arith.constant 0 : index
    %c0_91 = arith.constant 0 : index
    %137 = vector.load %arg9[%c0_90, %c0_91] : memref<8x1xf32, #tpu.memory_space<vmem>>, vector<8x1xf32>
    %138 = vector.broadcast %137 : vector<8x1xf32> to vector<8x256xf32>
    %139 = arith.addf %136, %138 : vector<8x256xf32>
    %cst_92 = arith.constant 0.000000e+00 : f32
    %140 = vector.broadcast %cst_92 : f32 to vector<8x256xf32>
    %141 = arith.cmpf oge, %139, %140 : vector<8x256xf32>
    %c0_93 = arith.constant 0 : index
    %c0_94 = arith.constant 0 : index
    %142 = vector.load %arg10[%c0_93, %c0_94] : memref<8x1xf32, #tpu.memory_space<vmem>>, vector<8x1xf32>
    %143 = vector.broadcast %142 : vector<8x1xf32> to vector<8x256xf32>
    %144 = arith.mulf %143, %139 : vector<8x256xf32>
    %145 = arith.select %141, %139, %144 : vector<8x256xi1>, vector<8x256xf32>
    %c16 = arith.constant 16 : index
    %c0_95 = arith.constant 0 : index
    %146 = vector.load %arg25[%c16, %c0_95] : memref<40x256xf32, #tpu.memory_space<vmem>>, vector<8x256xf32>
    tpu.vector_store %arg25[%c16, %c0_95], %145 {strides = array<i32>} : memref<40x256xf32, #tpu.memory_space<vmem>>, vector<8x256xf32>,
    %c16_96 = arith.constant 16 : index
    %c0_97 = arith.constant 0 : index
    %147 = vector.load %arg25[%c16_96, %c0_97] : memref<40x256xf32, #tpu.memory_space<vmem>>, vector<24x256xf32>
    %c4_98 = arith.constant 4 : index
    %c0_99 = arith.constant 0 : index
    %c0_100 = arith.constant 0 : index
    %148 = vector.load %arg11[%c4_98, %c0_99, %c0_100] : memref<6x8x24xf32, #tpu.memory_space<vmem>>, vector<1x8x24xf32>
    %149 = vector.shape_cast %148 : vector<1x8x24xf32> to vector<8x24xf32>
    %cst_101 = arith.constant dense<0.000000e+00> : vector<8x256xf32>
    %150 = tpu.matmul %149, %147, %cst_101 {dimension_numbers = #tpu.dot_dimension_numbers<[1], [0], [0], [1], [0, 0, 1, 1], [], []>} : vector<8x24xf32>, vector<24x256xf32>, vector<8x256xf32> -> vector<8x256xf32>
    %c1_i32_102 = arith.constant 1 : i32
    %151 = tpu.dynamic_rotate %147 by %c1_i32_102 dim 1 : vector<24x256xf32>, i32 -> vector<24x256xf32>
    %c15 = arith.constant 15 : index
    %c0_103 = arith.constant 0 : index
    %152 = vector.load %arg2[%c15, %c0_103] : memref<24x256xf32, #tpu.memory_space<vmem>>, vector<1x256xf32>
    %153 = vector.broadcast %152 : vector<1x256xf32> to vector<24x256xf32>
    %154 = arith.mulf %151, %153 : vector<24x256xf32>
    %c3_104 = arith.constant 3 : index
    %c0_105 = arith.constant 0 : index
    %c0_106 = arith.constant 0 : index
    %155 = vector.load %arg11[%c3_104, %c0_105, %c0_106] : memref<6x8x24xf32, #tpu.memory_space<vmem>>, vector<1x8x24xf32>
    %156 = vector.shape_cast %155 : vector<1x8x24xf32> to vector<8x24xf32>
    %cst_107 = arith.constant dense<0.000000e+00> : vector<8x256xf32>
    %157 = tpu.matmul %156, %154, %cst_107 {dimension_numbers = #tpu.dot_dimension_numbers<[1], [0], [0], [1], [0, 0, 1, 1], [], []>} : vector<8x24xf32>, vector<24x256xf32>, vector<8x256xf32> -> vector<8x256xf32>
    %158 = arith.addf %150, %157 : vector<8x256xf32>
    %c255_i32_108 = arith.constant 255 : i32
    %159 = tpu.dynamic_rotate %147 by %c255_i32_108 dim 1 : vector<24x256xf32>, i32 -> vector<24x256xf32>
    %c17 = arith.constant 17 : index
    %c0_109 = arith.constant 0 : index
    %160 = vector.load %arg2[%c17, %c0_109] : memref<24x256xf32, #tpu.memory_space<vmem>>, vector<1x256xf32>
    %161 = vector.broadcast %160 : vector<1x256xf32> to vector<24x256xf32>
    %162 = arith.mulf %159, %161 : vector<24x256xf32>
    %c5_110 = arith.constant 5 : index
    %c0_111 = arith.constant 0 : index
    %c0_112 = arith.constant 0 : index
    %163 = vector.load %arg11[%c5_110, %c0_111, %c0_112] : memref<6x8x24xf32, #tpu.memory_space<vmem>>, vector<1x8x24xf32>
    %164 = vector.shape_cast %163 : vector<1x8x24xf32> to vector<8x24xf32>
    %cst_113 = arith.constant dense<0.000000e+00> : vector<8x256xf32>
    %165 = tpu.matmul %164, %162, %cst_113 {dimension_numbers = #tpu.dot_dimension_numbers<[1], [0], [0], [1], [0, 0, 1, 1], [], []>} : vector<8x24xf32>, vector<24x256xf32>, vector<8x256xf32> -> vector<8x256xf32>
    %166 = arith.addf %158, %165 : vector<8x256xf32>
    %c64_i32 = arith.constant 64 : i32
    %167 = tpu.dynamic_rotate %147 by %c64_i32 dim 1 : vector<24x256xf32>, i32 -> vector<24x256xf32>
    %c13 = arith.constant 13 : index
    %c0_114 = arith.constant 0 : index
    %168 = vector.load %arg2[%c13, %c0_114] : memref<24x256xf32, #tpu.memory_space<vmem>>, vector<1x256xf32>
    %169 = vector.broadcast %168 : vector<1x256xf32> to vector<24x256xf32>
    %170 = arith.mulf %167, %169 : vector<24x256xf32>
    %c1_115 = arith.constant 1 : index
    %c0_116 = arith.constant 0 : index
    %c0_117 = arith.constant 0 : index
    %171 = vector.load %arg11[%c1_115, %c0_116, %c0_117] : memref<6x8x24xf32, #tpu.memory_space<vmem>>, vector<1x8x24xf32>
    %172 = vector.shape_cast %171 : vector<1x8x24xf32> to vector<8x24xf32>
    %cst_118 = arith.constant dense<0.000000e+00> : vector<8x256xf32>
    %173 = tpu.matmul %172, %170, %cst_118 {dimension_numbers = #tpu.dot_dimension_numbers<[1], [0], [0], [1], [0, 0, 1, 1], [], []>} : vector<8x24xf32>, vector<24x256xf32>, vector<8x256xf32> -> vector<8x256xf32>
    %174 = arith.addf %166, %173 : vector<8x256xf32>
    %c1_i32_119 = arith.constant 1 : i32
    %175 = tpu.dynamic_rotate %167 by %c1_i32_119 dim 1 : vector<24x256xf32>, i32 -> vector<24x256xf32>
    %c12 = arith.constant 12 : index
    %c0_120 = arith.constant 0 : index
    %176 = vector.load %arg2[%c12, %c0_120] : memref<24x256xf32, #tpu.memory_space<vmem>>, vector<1x256xf32>
    %177 = vector.broadcast %176 : vector<1x256xf32> to vector<24x256xf32>
    %178 = arith.mulf %175, %177 : vector<24x256xf32>
    %c0_121 = arith.constant 0 : index
    %c0_122 = arith.constant 0 : index
    %c0_123 = arith.constant 0 : index
    %179 = vector.load %arg11[%c0_121, %c0_122, %c0_123] : memref<6x8x24xf32, #tpu.memory_space<vmem>>, vector<1x8x24xf32>
    %180 = vector.shape_cast %179 : vector<1x8x24xf32> to vector<8x24xf32>
    %cst_124 = arith.constant dense<0.000000e+00> : vector<8x256xf32>
    %181 = tpu.matmul %180, %178, %cst_124 {dimension_numbers = #tpu.dot_dimension_numbers<[1], [0], [0], [1], [0, 0, 1, 1], [], []>} : vector<8x24xf32>, vector<24x256xf32>, vector<8x256xf32> -> vector<8x256xf32>
    %182 = arith.addf %174, %181 : vector<8x256xf32>
    %c255_i32_125 = arith.constant 255 : i32
    %183 = tpu.dynamic_rotate %167 by %c255_i32_125 dim 1 : vector<24x256xf32>, i32 -> vector<24x256xf32>
    %c14 = arith.constant 14 : index
    %c0_126 = arith.constant 0 : index
    %184 = vector.load %arg2[%c14, %c0_126] : memref<24x256xf32, #tpu.memory_space<vmem>>, vector<1x256xf32>
    %185 = vector.broadcast %184 : vector<1x256xf32> to vector<24x256xf32>
    %186 = arith.mulf %183, %185 : vector<24x256xf32>
    %c2_127 = arith.constant 2 : index
    %c0_128 = arith.constant 0 : index
    %c0_129 = arith.constant 0 : index
    %187 = vector.load %arg11[%c2_127, %c0_128, %c0_129] : memref<6x8x24xf32, #tpu.memory_space<vmem>>, vector<1x8x24xf32>
    %188 = vector.shape_cast %187 : vector<1x8x24xf32> to vector<8x24xf32>
    %cst_130 = arith.constant dense<0.000000e+00> : vector<8x256xf32>
    %189 = tpu.matmul %188, %186, %cst_130 {dimension_numbers = #tpu.dot_dimension_numbers<[1], [0], [0], [1], [0, 0, 1, 1], [], []>} : vector<8x24xf32>, vector<24x256xf32>, vector<8x256xf32> -> vector<8x256xf32>
    %190 = arith.addf %182, %189 : vector<8x256xf32>
    %cst_131 = arith.constant dense<0.000000e+00> : vector<8xf32>
    %191 = vector.multi_reduction <add>, %190, %cst_131 [1] : vector<8x256xf32> to vector<8xf32>
    %192 = vector.shape_cast %191 : vector<8xf32> to vector<8x1xf32>
    %cst_132 = arith.constant 2.560000e+02 : f32
    %193 = vector.broadcast %cst_132 : f32 to vector<8x1xf32>
    %194 = arith.divf %192, %193 : vector<8x1xf32>
    %195 = vector.broadcast %194 : vector<8x1xf32> to vector<8x256xf32>
    %196 = arith.subf %190, %195 : vector<8x256xf32>
    %197 = arith.mulf %196, %196 : vector<8x256xf32>
    %cst_133 = arith.constant dense<0.000000e+00> : vector<8xf32>
    %198 = vector.multi_reduction <add>, %197, %cst_133 [1] : vector<8x256xf32> to vector<8xf32>
    %199 = vector.shape_cast %198 : vector<8xf32> to vector<8x1xf32>
    %cst_134 = arith.constant 2.560000e+02 : f32
    %200 = vector.broadcast %cst_134 : f32 to vector<8x1xf32>
    %201 = arith.divf %199, %200 : vector<8x1xf32>
    %c0_135 = arith.constant 0 : index
    %c0_136 = arith.constant 0 : index
    %202 = vector.load %arg12[%c0_135, %c0_136] : memref<8x1xf32, #tpu.memory_space<vmem>>, vector<8x1xf32>
    %cst_137 = arith.constant 9.99999974E-6 : f32
    %203 = vector.broadcast %cst_137 : f32 to vector<8x1xf32>
    %204 = arith.addf %201, %203 : vector<8x1xf32>
    %205 = math.rsqrt %204 : vector<8x1xf32>
    %206 = arith.mulf %202, %205 : vector<8x1xf32>
    %207 = vector.broadcast %206 : vector<8x1xf32> to vector<8x256xf32>
    %208 = arith.mulf %196, %207 : vector<8x256xf32>
    %c0_138 = arith.constant 0 : index
    %c0_139 = arith.constant 0 : index
    %209 = vector.load %arg13[%c0_138, %c0_139] : memref<8x1xf32, #tpu.memory_space<vmem>>, vector<8x1xf32>
    %210 = vector.broadcast %209 : vector<8x1xf32> to vector<8x256xf32>
    %211 = arith.addf %208, %210 : vector<8x256xf32>
    %cst_140 = arith.constant 0.000000e+00 : f32
    %212 = vector.broadcast %cst_140 : f32 to vector<8x256xf32>
    %213 = arith.cmpf oge, %211, %212 : vector<8x256xf32>
    %c0_141 = arith.constant 0 : index
    %c0_142 = arith.constant 0 : index
    %214 = vector.load %arg14[%c0_141, %c0_142] : memref<8x1xf32, #tpu.memory_space<vmem>>, vector<8x1xf32>
    %215 = vector.broadcast %214 : vector<8x1xf32> to vector<8x256xf32>
    %216 = arith.mulf %215, %211 : vector<8x256xf32>
    %217 = arith.select %213, %211, %216 : vector<8x256xi1>, vector<8x256xf32>
    %c8_143 = arith.constant 8 : index
    %c0_144 = arith.constant 0 : index
    %218 = vector.load %arg25[%c8_143, %c0_144] : memref<40x256xf32, #tpu.memory_space<vmem>>, vector<8x256xf32>
    tpu.vector_store %arg25[%c8_143, %c0_144], %217 {strides = array<i32>} : memref<40x256xf32, #tpu.memory_space<vmem>>, vector<8x256xf32>,
    %c8_145 = arith.constant 8 : index
    %c0_146 = arith.constant 0 : index
    %219 = vector.load %arg25[%c8_145, %c0_146] : memref<40x256xf32, #tpu.memory_space<vmem>>, vector<32x256xf32>
    %c4_147 = arith.constant 4 : index
    %c0_148 = arith.constant 0 : index
    %c0_149 = arith.constant 0 : index
    %220 = vector.load %arg15[%c4_147, %c0_148, %c0_149] : memref<6x8x32xf32, #tpu.memory_space<vmem>>, vector<1x8x32xf32>
    %221 = vector.shape_cast %220 : vector<1x8x32xf32> to vector<8x32xf32>
    %cst_150 = arith.constant dense<0.000000e+00> : vector<8x256xf32>
    %222 = tpu.matmul %221, %219, %cst_150 {dimension_numbers = #tpu.dot_dimension_numbers<[1], [0], [0], [1], [0, 0, 1, 1], [], []>} : vector<8x32xf32>, vector<32x256xf32>, vector<8x256xf32> -> vector<8x256xf32>
    %c1_i32_151 = arith.constant 1 : i32
    %223 = tpu.dynamic_rotate %219 by %c1_i32_151 dim 1 : vector<32x256xf32>, i32 -> vector<32x256xf32>
    %c21 = arith.constant 21 : index
    %c0_152 = arith.constant 0 : index
    %224 = vector.load %arg2[%c21, %c0_152] : memref<24x256xf32, #tpu.memory_space<vmem>>, vector<1x256xf32>
    %225 = vector.broadcast %224 : vector<1x256xf32> to vector<32x256xf32>
    %226 = arith.mulf %223, %225 : vector<32x256xf32>
    %c3_153 = arith.constant 3 : index
    %c0_154 = arith.constant 0 : index
    %c0_155 = arith.constant 0 : index
    %227 = vector.load %arg15[%c3_153, %c0_154, %c0_155] : memref<6x8x32xf32, #tpu.memory_space<vmem>>, vector<1x8x32xf32>
    %228 = vector.shape_cast %227 : vector<1x8x32xf32> to vector<8x32xf32>
    %cst_156 = arith.constant dense<0.000000e+00> : vector<8x256xf32>
    %229 = tpu.matmul %228, %226, %cst_156 {dimension_numbers = #tpu.dot_dimension_numbers<[1], [0], [0], [1], [0, 0, 1, 1], [], []>} : vector<8x32xf32>, vector<32x256xf32>, vector<8x256xf32> -> vector<8x256xf32>
    %230 = arith.addf %222, %229 : vector<8x256xf32>
    %c255_i32_157 = arith.constant 255 : i32
    %231 = tpu.dynamic_rotate %219 by %c255_i32_157 dim 1 : vector<32x256xf32>, i32 -> vector<32x256xf32>
    %c23 = arith.constant 23 : index
    %c0_158 = arith.constant 0 : index
    %232 = vector.load %arg2[%c23, %c0_158] : memref<24x256xf32, #tpu.memory_space<vmem>>, vector<1x256xf32>
    %233 = vector.broadcast %232 : vector<1x256xf32> to vector<32x256xf32>
    %234 = arith.mulf %231, %233 : vector<32x256xf32>
    %c5_159 = arith.constant 5 : index
    %c0_160 = arith.constant 0 : index
    %c0_161 = arith.constant 0 : index
    %235 = vector.load %arg15[%c5_159, %c0_160, %c0_161] : memref<6x8x32xf32, #tpu.memory_space<vmem>>, vector<1x8x32xf32>
    %236 = vector.shape_cast %235 : vector<1x8x32xf32> to vector<8x32xf32>
    %cst_162 = arith.constant dense<0.000000e+00> : vector<8x256xf32>
    %237 = tpu.matmul %236, %234, %cst_162 {dimension_numbers = #tpu.dot_dimension_numbers<[1], [0], [0], [1], [0, 0, 1, 1], [], []>} : vector<8x32xf32>, vector<32x256xf32>, vector<8x256xf32> -> vector<8x256xf32>
    %238 = arith.addf %230, %237 : vector<8x256xf32>
    %c128_i32 = arith.constant 128 : i32
    %239 = tpu.dynamic_rotate %219 by %c128_i32 dim 1 : vector<32x256xf32>, i32 -> vector<32x256xf32>
    %c19 = arith.constant 19 : index
    %c0_163 = arith.constant 0 : index
    %240 = vector.load %arg2[%c19, %c0_163] : memref<24x256xf32, #tpu.memory_space<vmem>>, vector<1x256xf32>
    %241 = vector.broadcast %240 : vector<1x256xf32> to vector<32x256xf32>
    %242 = arith.mulf %239, %241 : vector<32x256xf32>
    %c1_164 = arith.constant 1 : index
    %c0_165 = arith.constant 0 : index
    %c0_166 = arith.constant 0 : index
    %243 = vector.load %arg15[%c1_164, %c0_165, %c0_166] : memref<6x8x32xf32, #tpu.memory_space<vmem>>, vector<1x8x32xf32>
    %244 = vector.shape_cast %243 : vector<1x8x32xf32> to vector<8x32xf32>
    %cst_167 = arith.constant dense<0.000000e+00> : vector<8x256xf32>
    %245 = tpu.matmul %244, %242, %cst_167 {dimension_numbers = #tpu.dot_dimension_numbers<[1], [0], [0], [1], [0, 0, 1, 1], [], []>} : vector<8x32xf32>, vector<32x256xf32>, vector<8x256xf32> -> vector<8x256xf32>
    %246 = arith.addf %238, %245 : vector<8x256xf32>
    %c1_i32_168 = arith.constant 1 : i32
    %247 = tpu.dynamic_rotate %239 by %c1_i32_168 dim 1 : vector<32x256xf32>, i32 -> vector<32x256xf32>
    %c18 = arith.constant 18 : index
    %c0_169 = arith.constant 0 : index
    %248 = vector.load %arg2[%c18, %c0_169] : memref<24x256xf32, #tpu.memory_space<vmem>>, vector<1x256xf32>
    %249 = vector.broadcast %248 : vector<1x256xf32> to vector<32x256xf32>
    %250 = arith.mulf %247, %249 : vector<32x256xf32>
    %c0_170 = arith.constant 0 : index
    %c0_171 = arith.constant 0 : index
    %c0_172 = arith.constant 0 : index
    %251 = vector.load %arg15[%c0_170, %c0_171, %c0_172] : memref<6x8x32xf32, #tpu.memory_space<vmem>>, vector<1x8x32xf32>
    %252 = vector.shape_cast %251 : vector<1x8x32xf32> to vector<8x32xf32>
    %cst_173 = arith.constant dense<0.000000e+00> : vector<8x256xf32>
    %253 = tpu.matmul %252, %250, %cst_173 {dimension_numbers = #tpu.dot_dimension_numbers<[1], [0], [0], [1], [0, 0, 1, 1], [], []>} : vector<8x32xf32>, vector<32x256xf32>, vector<8x256xf32> -> vector<8x256xf32>
    %254 = arith.addf %246, %253 : vector<8x256xf32>
    %c255_i32_174 = arith.constant 255 : i32
    %255 = tpu.dynamic_rotate %239 by %c255_i32_174 dim 1 : vector<32x256xf32>, i32 -> vector<32x256xf32>
    %c20 = arith.constant 20 : index
    %c0_175 = arith.constant 0 : index
    %256 = vector.load %arg2[%c20, %c0_175] : memref<24x256xf32, #tpu.memory_space<vmem>>, vector<1x256xf32>
    %257 = vector.broadcast %256 : vector<1x256xf32> to vector<32x256xf32>
    %258 = arith.mulf %255, %257 : vector<32x256xf32>
    %c2_176 = arith.constant 2 : index
    %c0_177 = arith.constant 0 : index
    %c0_178 = arith.constant 0 : index
    %259 = vector.load %arg15[%c2_176, %c0_177, %c0_178] : memref<6x8x32xf32, #tpu.memory_space<vmem>>, vector<1x8x32xf32>
    %260 = vector.shape_cast %259 : vector<1x8x32xf32> to vector<8x32xf32>
    %cst_179 = arith.constant dense<0.000000e+00> : vector<8x256xf32>
    %261 = tpu.matmul %260, %258, %cst_179 {dimension_numbers = #tpu.dot_dimension_numbers<[1], [0], [0], [1], [0, 0, 1, 1], [], []>} : vector<8x32xf32>, vector<32x256xf32>, vector<8x256xf32> -> vector<8x256xf32>
    %262 = arith.addf %254, %261 : vector<8x256xf32>
    %cst_180 = arith.constant dense<0.000000e+00> : vector<8xf32>
    %263 = vector.multi_reduction <add>, %262, %cst_180 [1] : vector<8x256xf32> to vector<8xf32>
    %264 = vector.shape_cast %263 : vector<8xf32> to vector<8x1xf32>
    %cst_181 = arith.constant 2.560000e+02 : f32
    %265 = vector.broadcast %cst_181 : f32 to vector<8x1xf32>
    %266 = arith.divf %264, %265 : vector<8x1xf32>
    %267 = vector.broadcast %266 : vector<8x1xf32> to vector<8x256xf32>
    %268 = arith.subf %262, %267 : vector<8x256xf32>
    %269 = arith.mulf %268, %268 : vector<8x256xf32>
    %cst_182 = arith.constant dense<0.000000e+00> : vector<8xf32>
    %270 = vector.multi_reduction <add>, %269, %cst_182 [1] : vector<8x256xf32> to vector<8xf32>
    %271 = vector.shape_cast %270 : vector<8xf32> to vector<8x1xf32>
    %cst_183 = arith.constant 2.560000e+02 : f32
    %272 = vector.broadcast %cst_183 : f32 to vector<8x1xf32>
    %273 = arith.divf %271, %272 : vector<8x1xf32>
    %c0_184 = arith.constant 0 : index
    %c0_185 = arith.constant 0 : index
    %274 = vector.load %arg16[%c0_184, %c0_185] : memref<8x1xf32, #tpu.memory_space<vmem>>, vector<8x1xf32>
    %cst_186 = arith.constant 9.99999974E-6 : f32
    %275 = vector.broadcast %cst_186 : f32 to vector<8x1xf32>
    %276 = arith.addf %273, %275 : vector<8x1xf32>
    %277 = math.rsqrt %276 : vector<8x1xf32>
    %278 = arith.mulf %274, %277 : vector<8x1xf32>
    %279 = vector.broadcast %278 : vector<8x1xf32> to vector<8x256xf32>
    %280 = arith.mulf %268, %279 : vector<8x256xf32>
    %c0_187 = arith.constant 0 : index
    %c0_188 = arith.constant 0 : index
    %281 = vector.load %arg17[%c0_187, %c0_188] : memref<8x1xf32, #tpu.memory_space<vmem>>, vector<8x1xf32>
    %282 = vector.broadcast %281 : vector<8x1xf32> to vector<8x256xf32>
    %283 = arith.addf %280, %282 : vector<8x256xf32>
    %cst_189 = arith.constant 0.000000e+00 : f32
    %284 = vector.broadcast %cst_189 : f32 to vector<8x256xf32>
    %285 = arith.cmpf oge, %283, %284 : vector<8x256xf32>
    %c0_190 = arith.constant 0 : index
    %c0_191 = arith.constant 0 : index
    %286 = vector.load %arg18[%c0_190, %c0_191] : memref<8x1xf32, #tpu.memory_space<vmem>>, vector<8x1xf32>
    %287 = vector.broadcast %286 : vector<8x1xf32> to vector<8x256xf32>
    %288 = arith.mulf %287, %283 : vector<8x256xf32>
    %289 = arith.select %285, %283, %288 : vector<8x256xi1>, vector<8x256xf32>
    %c0_192 = arith.constant 0 : index
    %c0_193 = arith.constant 0 : index
    %290 = vector.load %arg25[%c0_192, %c0_193] : memref<40x256xf32, #tpu.memory_space<vmem>>, vector<8x256xf32>
    tpu.vector_store %arg25[%c0_192, %c0_193], %289 {strides = array<i32>} : memref<40x256xf32, #tpu.memory_space<vmem>>, vector<8x256xf32>,
    %c0_194 = arith.constant 0 : index
    %c0_195 = arith.constant 0 : index
    %291 = vector.load %arg25[%c0_194, %c0_195] : memref<40x256xf32, #tpu.memory_space<vmem>>, vector<8x256xf32>
    %c1_196 = arith.constant 1 : index
    %c0_197 = arith.constant 0 : index
    %c0_198 = arith.constant 0 : index
    %292 = vector.load %arg19[%c1_196, %c0_197, %c0_198] : memref<3x16x8xf32, #tpu.memory_space<vmem>>, vector<1x16x8xf32>
    %293 = vector.shape_cast %292 : vector<1x16x8xf32> to vector<16x8xf32>
    %cst_199 = arith.constant dense<0.000000e+00> : vector<16x256xf32>
    %294 = tpu.matmul %293, %291, %cst_199 {dimension_numbers = #tpu.dot_dimension_numbers<[1], [0], [0], [1], [0, 0, 1, 1], [], []>} : vector<16x8xf32>, vector<8x256xf32>, vector<16x256xf32> -> vector<16x256xf32>
    %c0_200 = arith.constant 0 : index
    %c0_201 = arith.constant 0 : index
    %295 = vector.load %arg20[%c0_200, %c0_201] : memref<16x1xf32, #tpu.memory_space<vmem>>, vector<16x1xf32>
    %296 = vector.broadcast %295 : vector<16x1xf32> to vector<16x256xf32>
    %297 = arith.addf %294, %296 : vector<16x256xf32>
    %c1_i32_202 = arith.constant 1 : i32
    %298 = tpu.dynamic_rotate %291 by %c1_i32_202 dim 1 : vector<8x256xf32>, i32 -> vector<8x256xf32>
    %c3_203 = arith.constant 3 : index
    %c0_204 = arith.constant 0 : index
    %299 = vector.load %arg2[%c3_203, %c0_204] : memref<24x256xf32, #tpu.memory_space<vmem>>, vector<1x256xf32>
    %300 = vector.broadcast %299 : vector<1x256xf32> to vector<8x256xf32>
    %301 = arith.mulf %298, %300 : vector<8x256xf32>
    %c0_205 = arith.constant 0 : index
    %c0_206 = arith.constant 0 : index
    %c0_207 = arith.constant 0 : index
    %302 = vector.load %arg19[%c0_205, %c0_206, %c0_207] : memref<3x16x8xf32, #tpu.memory_space<vmem>>, vector<1x16x8xf32>
    %303 = vector.shape_cast %302 : vector<1x16x8xf32> to vector<16x8xf32>
    %cst_208 = arith.constant dense<0.000000e+00> : vector<16x256xf32>
    %304 = tpu.matmul %303, %301, %cst_208 {dimension_numbers = #tpu.dot_dimension_numbers<[1], [0], [0], [1], [0, 0, 1, 1], [], []>} : vector<16x8xf32>, vector<8x256xf32>, vector<16x256xf32> -> vector<16x256xf32>
    %305 = arith.addf %297, %304 : vector<16x256xf32>
    %c255_i32_209 = arith.constant 255 : i32
    %306 = tpu.dynamic_rotate %291 by %c255_i32_209 dim 1 : vector<8x256xf32>, i32 -> vector<8x256xf32>
    %c5_210 = arith.constant 5 : index
    %c0_211 = arith.constant 0 : index
    %307 = vector.load %arg2[%c5_210, %c0_211] : memref<24x256xf32, #tpu.memory_space<vmem>>, vector<1x256xf32>
    %308 = vector.broadcast %307 : vector<1x256xf32> to vector<8x256xf32>
    %309 = arith.mulf %306, %308 : vector<8x256xf32>
    %c2_212 = arith.constant 2 : index
    %c0_213 = arith.constant 0 : index
    %c0_214 = arith.constant 0 : index
    %310 = vector.load %arg19[%c2_212, %c0_213, %c0_214] : memref<3x16x8xf32, #tpu.memory_space<vmem>>, vector<1x16x8xf32>
    %311 = vector.shape_cast %310 : vector<1x16x8xf32> to vector<16x8xf32>
    %cst_215 = arith.constant dense<0.000000e+00> : vector<16x256xf32>
    %312 = tpu.matmul %311, %309, %cst_215 {dimension_numbers = #tpu.dot_dimension_numbers<[1], [0], [0], [1], [0, 0, 1, 1], [], []>} : vector<16x8xf32>, vector<8x256xf32>, vector<16x256xf32> -> vector<16x256xf32>
    %313 = arith.addf %305, %312 : vector<16x256xf32>
    %cst_216 = arith.constant 0.000000e+00 : f32
    %314 = vector.broadcast %cst_216 : f32 to vector<16x256xf32>
    %315 = arith.cmpf oge, %313, %314 : vector<16x256xf32>
    %c0_217 = arith.constant 0 : index
    %c0_218 = arith.constant 0 : index
    %316 = vector.load %arg21[%c0_217, %c0_218] : memref<16x1xf32, #tpu.memory_space<vmem>>, vector<16x1xf32>
    %317 = vector.broadcast %316 : vector<16x1xf32> to vector<16x256xf32>
    %318 = arith.mulf %317, %313 : vector<16x256xf32>
    %319 = arith.select %315, %313, %318 : vector<16x256xi1>, vector<16x256xf32>
    %320 = vector.extract_strided_slice %319 {offsets = [0, 0], sizes = [8, 256], strides = [1, 1]} : vector<16x256xf32> to vector<8x256xf32>
    %321 = vector.extract_strided_slice %319 {offsets = [8, 0], sizes = [8, 256], strides = [1, 1]} : vector<16x256xf32> to vector<8x256xf32>
    %c255_i32_219 = arith.constant 255 : i32
    %322 = tpu.dynamic_rotate %320 by %c255_i32_219 dim 1 : vector<8x256xf32>, i32 -> vector<8x256xf32>
    %c5_220 = arith.constant 5 : index
    %c0_221 = arith.constant 0 : index
    %323 = vector.load %arg2[%c5_220, %c0_221] : memref<24x256xf32, #tpu.memory_space<vmem>>, vector<1x256xf32>
    %324 = vector.broadcast %323 : vector<1x256xf32> to vector<8x256xf32>
    %325 = arith.mulf %322, %324 : vector<8x256xf32>
    %c0_222 = arith.constant 0 : index
    %c0_223 = arith.constant 0 : index
    %c0_224 = arith.constant 0 : index
    %326 = vector.load %arg22[%c0_222, %c0_223, %c0_224] : memref<2x2x8xf32, #tpu.memory_space<vmem>>, vector<1x2x8xf32>
    %327 = vector.shape_cast %326 : vector<1x2x8xf32> to vector<2x8xf32>
    %cst_225 = arith.constant dense<0.000000e+00> : vector<2x256xf32>
    %328 = tpu.matmul %327, %320, %cst_225 {dimension_numbers = #tpu.dot_dimension_numbers<[1], [0], [0], [1], [0, 0, 1, 1], [], []>} : vector<2x8xf32>, vector<8x256xf32>, vector<2x256xf32> -> vector<2x256xf32>
    %c1_226 = arith.constant 1 : index
    %c0_227 = arith.constant 0 : index
    %c0_228 = arith.constant 0 : index
    %329 = vector.load %arg22[%c1_226, %c0_227, %c0_228] : memref<2x2x8xf32, #tpu.memory_space<vmem>>, vector<1x2x8xf32>
    %330 = vector.shape_cast %329 : vector<1x2x8xf32> to vector<2x8xf32>
    %cst_229 = arith.constant dense<0.000000e+00> : vector<2x256xf32>
    %331 = tpu.matmul %330, %321, %cst_229 {dimension_numbers = #tpu.dot_dimension_numbers<[1], [0], [0], [1], [0, 0, 1, 1], [], []>} : vector<2x8xf32>, vector<8x256xf32>, vector<2x256xf32> -> vector<2x256xf32>
    %332 = arith.addf %328, %331 : vector<2x256xf32>
    %c0_230 = arith.constant 0 : index
    %c0_231 = arith.constant 0 : index
    %333 = vector.load %arg23[%c0_230, %c0_231] : memref<2x1xf32, #tpu.memory_space<vmem>>, vector<2x1xf32>
    %334 = vector.broadcast %333 : vector<2x1xf32> to vector<2x256xf32>
    %335 = arith.addf %332, %334 : vector<2x256xf32>
    %c0_232 = arith.constant 0 : index
    %c0_233 = arith.constant 0 : index
    %c0_234 = arith.constant 0 : index
    %336 = vector.load %arg22[%c0_232, %c0_233, %c0_234] : memref<2x2x8xf32, #tpu.memory_space<vmem>>, vector<1x2x8xf32>
    %337 = vector.shape_cast %336 : vector<1x2x8xf32> to vector<2x8xf32>
    %cst_235 = arith.constant dense<0.000000e+00> : vector<2x256xf32>
    %338 = tpu.matmul %337, %321, %cst_235 {dimension_numbers = #tpu.dot_dimension_numbers<[1], [0], [0], [1], [0, 0, 1, 1], [], []>} : vector<2x8xf32>, vector<8x256xf32>, vector<2x256xf32> -> vector<2x256xf32>
    %c1_236 = arith.constant 1 : index
    %c0_237 = arith.constant 0 : index
    %c0_238 = arith.constant 0 : index
    %339 = vector.load %arg22[%c1_236, %c0_237, %c0_238] : memref<2x2x8xf32, #tpu.memory_space<vmem>>, vector<1x2x8xf32>
    %340 = vector.shape_cast %339 : vector<1x2x8xf32> to vector<2x8xf32>
    %cst_239 = arith.constant dense<0.000000e+00> : vector<2x256xf32>
    %341 = tpu.matmul %340, %325, %cst_239 {dimension_numbers = #tpu.dot_dimension_numbers<[1], [0], [0], [1], [0, 0, 1, 1], [], []>} : vector<2x8xf32>, vector<8x256xf32>, vector<2x256xf32> -> vector<2x256xf32>
    %342 = arith.addf %338, %341 : vector<2x256xf32>
    %c0_240 = arith.constant 0 : index
    %c0_241 = arith.constant 0 : index
    %343 = vector.load %arg23[%c0_240, %c0_241] : memref<2x1xf32, #tpu.memory_space<vmem>>, vector<2x1xf32>
    %344 = vector.broadcast %343 : vector<2x1xf32> to vector<2x256xf32>
    %345 = arith.addf %342, %344 : vector<2x256xf32>
    %346 = tpu.concatenate %335, %345 in 0 : vector<2x256xf32>, vector<2x256xf32> -> vector<4x256xf32>
    %c0_242 = arith.constant 0 : index
    %c0_243 = arith.constant 0 : index
    %c0_244 = arith.constant 0 : index
    %347 = vector.load %arg24[%c0_242, %c0_243, %c0_244] : memref<1x4x256xf32, #tpu.memory_space<vmem>>, vector<1x4x256xf32>
    %348 = vector.shape_cast %347 : vector<1x4x256xf32> to vector<4x256xf32>
    %349 = vector.shape_cast %346 : vector<4x256xf32> to vector<1x4x256xf32>
    tpu.vector_store %arg24[%c0_242, %c0_243, %c0_244], %349 {strides = array<i32>} : memref<1x4x256xf32, #tpu.memory_space<vmem>>, vector<1x4x256xf32>,
    return
  }
  func.func @transform_0(%arg0: i32) -> (i32, i32, i32) {
    %c0_i32 = arith.constant 0 : i32
    %c0_i32_0 = arith.constant 0 : i32
    %c0_i32_1 = arith.constant 0 : i32
    return %arg0, %c0_i32, %c0_i32_0 : i32, i32, i32
  }
  func.func @transform_1(%arg0: i32) -> (i32, i32) {
    %c0_i32 = arith.constant 0 : i32
    %c0_i32_0 = arith.constant 0 : i32
    %c0_i32_1 = arith.constant 0 : i32
    return %c0_i32, %c0_i32_0 : i32, i32
  }
  func.func @transform_2(%arg0: i32) -> (i32, i32, i32) {
    %c0_i32 = arith.constant 0 : i32
    %c0_i32_0 = arith.constant 0 : i32
    %c0_i32_1 = arith.constant 0 : i32
    %c0_i32_2 = arith.constant 0 : i32
    return %c0_i32, %c0_i32_0, %c0_i32_1 : i32, i32, i32
  }
  func.func @transform_3(%arg0: i32) -> (i32, i32) {
    %c0_i32 = arith.constant 0 : i32
    %c0_i32_0 = arith.constant 0 : i32
    %c0_i32_1 = arith.constant 0 : i32
    return %c0_i32, %c0_i32_0 : i32, i32
  }
  func.func @transform_4(%arg0: i32) -> (i32, i32) {
    %c0_i32 = arith.constant 0 : i32
    %c0_i32_0 = arith.constant 0 : i32
    %c0_i32_1 = arith.constant 0 : i32
    return %c0_i32, %c0_i32_0 : i32, i32
  }
  func.func @transform_5(%arg0: i32) -> (i32, i32) {
    %c0_i32 = arith.constant 0 : i32
    %c0_i32_0 = arith.constant 0 : i32
    %c0_i32_1 = arith.constant 0 : i32
    return %c0_i32, %c0_i32_0 : i32, i32
  }
  func.func @transform_6(%arg0: i32) -> (i32, i32, i32) {
    %c0_i32 = arith.constant 0 : i32
    %c0_i32_0 = arith.constant 0 : i32
    %c0_i32_1 = arith.constant 0 : i32
    %c0_i32_2 = arith.constant 0 : i32
    return %c0_i32, %c0_i32_0, %c0_i32_1 : i32, i32, i32
  }
  func.func @transform_7(%arg0: i32) -> (i32, i32) {
    %c0_i32 = arith.constant 0 : i32
    %c0_i32_0 = arith.constant 0 : i32
    %c0_i32_1 = arith.constant 0 : i32
    return %c0_i32, %c0_i32_0 : i32, i32
  }
  func.func @transform_8(%arg0: i32) -> (i32, i32) {
    %c0_i32 = arith.constant 0 : i32
    %c0_i32_0 = arith.constant 0 : i32
    %c0_i32_1 = arith.constant 0 : i32
    return %c0_i32, %c0_i32_0 : i32, i32
  }
  func.func @transform_9(%arg0: i32) -> (i32, i32) {
    %c0_i32 = arith.constant 0 : i32
    %c0_i32_0 = arith.constant 0 : i32
    %c0_i32_1 = arith.constant 0 : i32
    return %c0_i32, %c0_i32_0 : i32, i32
  }
  func.func @transform_10(%arg0: i32) -> (i32, i32, i32) {
    %c0_i32 = arith.constant 0 : i32
    %c0_i32_0 = arith.constant 0 : i32
    %c0_i32_1 = arith.constant 0 : i32
    %c0_i32_2 = arith.constant 0 : i32
    return %c0_i32, %c0_i32_0, %c0_i32_1 : i32, i32, i32
  }
  func.func @transform_11(%arg0: i32) -> (i32, i32) {
    %c0_i32 = arith.constant 0 : i32
    %c0_i32_0 = arith.constant 0 : i32
    %c0_i32_1 = arith.constant 0 : i32
    return %c0_i32, %c0_i32_0 : i32, i32
  }
  func.func @transform_12(%arg0: i32) -> (i32, i32) {
    %c0_i32 = arith.constant 0 : i32
    %c0_i32_0 = arith.constant 0 : i32
    %c0_i32_1 = arith.constant 0 : i32
    return %c0_i32, %c0_i32_0 : i32, i32
  }
  func.func @transform_13(%arg0: i32) -> (i32, i32) {
    %c0_i32 = arith.constant 0 : i32
    %c0_i32_0 = arith.constant 0 : i32
    %c0_i32_1 = arith.constant 0 : i32
    return %c0_i32, %c0_i32_0 : i32, i32
  }
  func.func @transform_14(%arg0: i32) -> (i32, i32, i32) {
    %c0_i32 = arith.constant 0 : i32
    %c0_i32_0 = arith.constant 0 : i32
    %c0_i32_1 = arith.constant 0 : i32
    %c0_i32_2 = arith.constant 0 : i32
    return %c0_i32, %c0_i32_0, %c0_i32_1 : i32, i32, i32
  }
  func.func @transform_15(%arg0: i32) -> (i32, i32) {
    %c0_i32 = arith.constant 0 : i32
    %c0_i32_0 = arith.constant 0 : i32
    %c0_i32_1 = arith.constant 0 : i32
    return %c0_i32, %c0_i32_0 : i32, i32
  }
  func.func @transform_16(%arg0: i32) -> (i32, i32) {
    %c0_i32 = arith.constant 0 : i32
    %c0_i32_0 = arith.constant 0 : i32
    %c0_i32_1 = arith.constant 0 : i32
    return %c0_i32, %c0_i32_0 : i32, i32
  }
  func.func @transform_17(%arg0: i32) -> (i32, i32) {
    %c0_i32 = arith.constant 0 : i32
    %c0_i32_0 = arith.constant 0 : i32
    %c0_i32_1 = arith.constant 0 : i32
    return %c0_i32, %c0_i32_0 : i32, i32
  }
  func.func @transform_18(%arg0: i32) -> (i32, i32, i32) {
    %c0_i32 = arith.constant 0 : i32
    %c0_i32_0 = arith.constant 0 : i32
    %c0_i32_1 = arith.constant 0 : i32
    %c0_i32_2 = arith.constant 0 : i32
    return %c0_i32, %c0_i32_0, %c0_i32_1 : i32, i32, i32
  }
  func.func @transform_19(%arg0: i32) -> (i32, i32) {
    %c0_i32 = arith.constant 0 : i32
    %c0_i32_0 = arith.constant 0 : i32
    %c0_i32_1 = arith.constant 0 : i32
    return %c0_i32, %c0_i32_0 : i32, i32
  }
  func.func @transform_20(%arg0: i32) -> (i32, i32) {
    %c0_i32 = arith.constant 0 : i32
    %c0_i32_0 = arith.constant 0 : i32
    %c0_i32_1 = arith.constant 0 : i32
    return %c0_i32, %c0_i32_0 : i32, i32
  }
  func.func @transform_21(%arg0: i32) -> (i32, i32, i32) {
    %c0_i32 = arith.constant 0 : i32
    %c0_i32_0 = arith.constant 0 : i32
    %c0_i32_1 = arith.constant 0 : i32
    %c0_i32_2 = arith.constant 0 : i32
    return %c0_i32, %c0_i32_0, %c0_i32_1 : i32, i32, i32
  }
  func.func @transform_22(%arg0: i32) -> (i32, i32) {
    %c0_i32 = arith.constant 0 : i32
    %c0_i32_0 = arith.constant 0 : i32
    %c0_i32_1 = arith.constant 0 : i32
    return %c0_i32, %c0_i32_0 : i32, i32
  }
  func.func @transform_23(%arg0: i32) -> (i32, i32, i32) {
    %c0_i32 = arith.constant 0 : i32
    %c0_i32_0 = arith.constant 0 : i32
    %c0_i32_1 = arith.constant 0 : i32
    return %arg0, %c0_i32, %c0_i32_0 : i32, i32, i32
  }
}

</mosaic_0001>

<llo_original>
// kernel: complex_decoder_forward.1
$region0: #{complex_decoder_forward.1}
  #allocation0 [shape = 'u32[]', space=smem, size = 0x4, offset = 0x4, fixed_abs, tag = 'smem constant byte address 0x4 - core index']
  #allocation1 [shape = 'u32[144,128]{1,0:T(1,128)}', space=vmem, size = 0x12000, scoped, tag = 'internal scratch']
  #allocation2 [shape = 'f32[40,256]{1,0:T(8,128)}', space=vmem, size = 0xa000, scoped, tag = 'scratch operand']
  %s0 = inlined_call_operand.vmem [shape: f32[2,8,256], index: 0, kind: input, shape index: {}]
  %s1 = inlined_call_operand.vmem [shape: f32[24,256], index: 1, kind: input, shape index: {}]
  %s2 = inlined_call_operand.vmem [shape: f32[6,8,8], index: 2, kind: input, shape index: {}]
  %s3 = inlined_call_operand.vmem [shape: f32[8,1], index: 3, kind: input, shape index: {}]
  %s4 = inlined_call_operand.vmem [shape: f32[8,1], index: 4, kind: input, shape index: {}]
  %s5 = inlined_call_operand.vmem [shape: f32[8,1], index: 5, kind: input, shape index: {}]
  %s6 = inlined_call_operand.vmem [shape: f32[6,8,16], index: 6, kind: input, shape index: {}]
  %s7 = inlined_call_operand.vmem [shape: f32[8,1], index: 7, kind: input, shape index: {}]
  %s8 = inlined_call_operand.vmem [shape: f32[8,1], index: 8, kind: input, shape index: {}]
  %s9 = inlined_call_operand.vmem [shape: f32[8,1], index: 9, kind: input, shape index: {}]
  %s10 = inlined_call_operand.vmem [shape: f32[6,8,24], index: 10, kind: input, shape index: {}]
  %s11 = inlined_call_operand.vmem [shape: f32[8,1], index: 11, kind: input, shape index: {}]
  %s12 = inlined_call_operand.vmem [shape: f32[8,1], index: 12, kind: input, shape index: {}]
  %s13 = inlined_call_operand.vmem [shape: f32[8,1], index: 13, kind: input, shape index: {}]
  %s14 = inlined_call_operand.vmem [shape: f32[6,8,32], index: 14, kind: input, shape index: {}]
  %s15 = inlined_call_operand.vmem [shape: f32[8,1], index: 15, kind: input, shape index: {}]
  %s16 = inlined_call_operand.vmem [shape: f32[8,1], index: 16, kind: input, shape index: {}]
  %s17 = inlined_call_operand.vmem [shape: f32[8,1], index: 17, kind: input, shape index: {}]
  %s18 = inlined_call_operand.vmem [shape: f32[3,16,8], index: 18, kind: input, shape index: {}]
  %s19 = inlined_call_operand.vmem [shape: f32[16,1], index: 19, kind: input, shape index: {}]
  %s20 = inlined_call_operand.vmem [shape: f32[16,1], index: 20, kind: input, shape index: {}]
  %s21 = inlined_call_operand.vmem [shape: f32[2,2,8], index: 21, kind: input, shape index: {}]
  %s22 = inlined_call_operand.vmem [shape: f32[2,1], index: 22, kind: input, shape index: {}]
  %s23 = inlined_call_operand.vmem [shape: f32[2,4,256], index: 23, kind: output, shape index: {}]
  %s24 = sld [smem:[#allocation0]]
  $region125: #{complex_decoder_forward.1} parent=0
    _
  %s26 = ssub.s32 1, %s24
  %s27 = scalar_select 0, %s26, %s24
  loop: start=0, step=1, limit=4
  $region2: #{complex_decoder_forward.1} parent=0 // loop_pre_header
    _
  $region3: #{complex_decoder_forward.1} parent=0 // loop_header
    %s29 = sphi 0, %s33
    %p30 = scmp.ge.s32.totalorder %s29, 4
    %s39 = sphi 0, %s41
    %s42 = sphi 0, %s39
    %s43 = sphi 0, %s42
    %s59 = sphi 0, %s43
    %s63 = sphi 0, %s63
    %s65 = sphi 0, %s63
    %s66 = sphi 0, %s65
    %s80 = sphi 0, %s66
    %s84 = sphi 0, %s84
    %s86 = sphi 0, %s84
    %s87 = sphi 0, %s86
    %s101 = sphi 0, %s87
    %s105 = sphi 0, %s105
    %s107 = sphi 0, %s105
    %s108 = sphi 0, %s107
    %s122 = sphi 0, %s108
    %s126 = sphi 0, %s126
    %s128 = sphi 0, %s126
    %s129 = sphi 0, %s128
    %s143 = sphi 0, %s129
    %s147 = sphi 0, %s147
    %s149 = sphi 0, %s147
    %s150 = sphi 0, %s149
    %s164 = sphi 0, %s150
    %s168 = sphi 0, %s168
    %s170 = sphi 0, %s168
    %s171 = sphi 0, %s170
    %s185 = sphi 0, %s171
    %s189 = sphi 0, %s189
    %s191 = sphi 0, %s189
    %s192 = sphi 0, %s191
    %s206 = sphi 0, %s192
    %s210 = sphi 0, %s210
    %s212 = sphi 0, %s210
    %s213 = sphi 0, %s212
    %s227 = sphi 0, %s213
    %s231 = sphi 0, %s231
    %s233 = sphi 0, %s231
    %s234 = sphi 0, %s233
    %s248 = sphi 0, %s234
    %s252 = sphi 0, %s252
    %s254 = sphi 0, %s252
    %s255 = sphi 0, %s254
    %s269 = sphi 0, %s255
    %s273 = sphi 0, %s273
    %s275 = sphi 0, %s273
    %s276 = sphi 0, %s275
    %s290 = sphi 0, %s276
    %s294 = sphi 0, %s294
    %s296 = sphi 0, %s294
    %s297 = sphi 0, %s296
    %s311 = sphi 0, %s297
    %s315 = sphi 0, %s315
    %s317 = sphi 0, %s315
    %s318 = sphi 0, %s317
    %s332 = sphi 0, %s318
    %s336 = sphi 0, %s336
    %s338 = sphi 0, %s336
    %s339 = sphi 0, %s338
    %s353 = sphi 0, %s339
    %s357 = sphi 0, %s357
    %s359 = sphi 0, %s357
    %s360 = sphi 0, %s359
    %s374 = sphi 0, %s360
    %s378 = sphi 0, %s378
    %s380 = sphi 0, %s378
    %s381 = sphi 0, %s380
    %s395 = sphi 0, %s381
    %s399 = sphi 0, %s399
    %s401 = sphi 0, %s399
    %s402 = sphi 0, %s401
    %s416 = sphi 0, %s402
    %s420 = sphi 0, %s420
    %s422 = sphi 0, %s420
    %s423 = sphi 0, %s422
    %s437 = sphi 0, %s423
    %s441 = sphi 0, %s441
    %s443 = sphi 0, %s441
    %s444 = sphi 0, %s443
    %s458 = sphi 0, %s444
    %s462 = sphi 0, %s462
    %s464 = sphi 0, %s462
    %s465 = sphi 0, %s464
    %s479 = sphi 0, %s465
    %s483 = sphi 0, %s483
    %s485 = sphi 0, %s483
    %s486 = sphi 0, %s485
    %s500 = sphi 0, %s486
    %s504 = sphi 0, %s504
    %s506 = sphi 0, %s504
    %s507 = sphi 0, %s506
    %s521 = sphi 0, %s507
    %s527 = sphi 0, %s529
    %s530 = sphi 0, %s527
    %s531 = sphi 0, %s530
    %s547 = sphi 0, %s531
  $region4: #{complex_decoder_forward.1} parent=0 // loop_header_branch
    %32 = sbr.rel (%p30) target = $region8
  $region5: #{complex_decoder_forward.1} parent=0 // loop_body
    %s34 = ssub.s32 %s29, 1
    %s35 = ssub.s32 %s29, 2
    %s36 = sadd.s32 %s29, 1
    %s37 = ssub.s32 %s29, %s36
    %p38 = scmp.eq.s32.totalorder %s37, 0
    %s40 = sadd.s32 %s39, 1
    %s41 = scalar_select %p38, %s39, %s40
    %p44 = pneg %p38
    %p45 = scmp.eq.s32.totalorder %s29, 1
    %p46 = por %p44, %p45
    %p47 = scmp.ne.s32.totalorder %s39, %s42
    %p48 = scmp.eq.s32.totalorder %s29, 0
    %p49 = por %p47, %p48
    %p50 = scmp.ne.s32.totalorder %s39, %s42
    %p51 = scmp.eq.s32.totalorder %s34, 1
    %p52 = por %p50, %p51
    %p53 = scmp.ne.s32.totalorder %s42, %s43
    %p54 = scmp.eq.s32.totalorder %s34, 0
    %p55 = por %p53, %p54
    %p56 = scmp.ne.s32.totalorder %s42, %s43
    %p57 = scmp.eq.s32.totalorder %s35, 1
    %p58 = por %p56, %p57
    %p60 = scmp.ne.s32.totalorder %s43, %s59
    %p61 = scmp.eq.s32.totalorder %s35, 0
    %p62 = por %p60, %p61
    %s64 = sadd.s32 %s63, 1
    %p67 = scmp.eq.s32.totalorder %s29, 1
    %p68 = scmp.ne.s32.totalorder %s63, %s65
    %p69 = scmp.eq.s32.totalorder %s29, 0
    %p70 = por %p68, %p69
    %p71 = scmp.ne.s32.totalorder %s63, %s65
    %p72 = scmp.eq.s32.totalorder %s34, 1
    %p73 = por %p71, %p72
    %p74 = scmp.ne.s32.totalorder %s65, %s66
    %p75 = scmp.eq.s32.totalorder %s34, 0
    %p76 = por %p74, %p75
    %p77 = scmp.ne.s32.totalorder %s65, %s66
    %p78 = scmp.eq.s32.totalorder %s35, 1
    %p79 = por %p77, %p78
    %p81 = scmp.ne.s32.totalorder %s66, %s80
    %p82 = scmp.eq.s32.totalorder %s35, 0
    %p83 = por %p81, %p82
    %s85 = sadd.s32 %s84, 1
    %p88 = scmp.eq.s32.totalorder %s29, 1
    %p89 = scmp.ne.s32.totalorder %s84, %s86
    %p90 = scmp.eq.s32.totalorder %s29, 0
    %p91 = por %p89, %p90
    %p92 = scmp.ne.s32.totalorder %s84, %s86
    %p93 = scmp.eq.s32.totalorder %s34, 1
    %p94 = por %p92, %p93
    %p95 = scmp.ne.s32.totalorder %s86, %s87
    %p96 = scmp.eq.s32.totalorder %s34, 0
    %p97 = por %p95, %p96
    %p98 = scmp.ne.s32.totalorder %s86, %s87
    %p99 = scmp.eq.s32.totalorder %s35, 1
    %p100 = por %p98, %p99
    %p102 = scmp.ne.s32.totalorder %s87, %s101
    %p103 = scmp.eq.s32.totalorder %s35, 0
    %p104 = por %p102, %p103
    %s106 = sadd.s32 %s105, 1
    %p109 = scmp.eq.s32.totalorder %s29, 1
    %p110 = scmp.ne.s32.totalorder %s105, %s107
    %p111 = scmp.eq.s32.totalorder %s29, 0
    %p112 = por %p110, %p111
    %p113 = scmp.ne.s32.totalorder %s105, %s107
    %p114 = scmp.eq.s32.totalorder %s34, 1
    %p115 = por %p113, %p114
    %p116 = scmp.ne.s32.totalorder %s107, %s108
    %p117 = scmp.eq.s32.totalorder %s34, 0
    %p118 = por %p116, %p117
    %p119 = scmp.ne.s32.totalorder %s107, %s108
    %p120 = scmp.eq.s32.totalorder %s35, 1
    %p121 = por %p119, %p120
    %p123 = scmp.ne.s32.totalorder %s108, %s122
    %p124 = scmp.eq.s32.totalorder %s35, 0
    %p125 = por %p123, %p124
    %s127 = sadd.s32 %s126, 1
    %p130 = scmp.eq.s32.totalorder %s29, 1
    %p131 = scmp.ne.s32.totalorder %s126, %s128
    %p132 = scmp.eq.s32.totalorder %s29, 0
    %p133 = por %p131, %p132
    %p134 = scmp.ne.s32.totalorder %s126, %s128
    %p135 = scmp.eq.s32.totalorder %s34, 1
    %p136 = por %p134, %p135
    %p137 = scmp.ne.s32.totalorder %s128, %s129
    %p138 = scmp.eq.s32.totalorder %s34, 0
    %p139 = por %p137, %p138
    %p140 = scmp.ne.s32.totalorder %s128, %s129
    %p141 = scmp.eq.s32.totalorder %s35, 1
    %p142 = por %p140, %p141
    %p144 = scmp.ne.s32.totalorder %s129, %s143
    %p145 = scmp.eq.s32.totalorder %s35, 0
    %p146 = por %p144, %p145
    %s148 = sadd.s32 %s147, 1
    %p151 = scmp.eq.s32.totalorder %s29, 1
    %p152 = scmp.ne.s32.totalorder %s147, %s149
    %p153 = scmp.eq.s32.totalorder %s29, 0
    %p154 = por %p152, %p153
    %p155 = scmp.ne.s32.totalorder %s147, %s149
    %p156 = scmp.eq.s32.totalorder %s34, 1
    %p157 = por %p155, %p156
    %p158 = scmp.ne.s32.totalorder %s149, %s150
    %p159 = scmp.eq.s32.totalorder %s34, 0
    %p160 = por %p158, %p159
    %p161 = scmp.ne.s32.totalorder %s149, %s150
    %p162 = scmp.eq.s32.totalorder %s35, 1
    %p163 = por %p161, %p162
    %p165 = scmp.ne.s32.totalorder %s150, %s164
    %p166 = scmp.eq.s32.totalorder %s35, 0
    %p167 = por %p165, %p166
    %s169 = sadd.s32 %s168, 1
    %p172 = scmp.eq.s32.totalorder %s29, 1
    %p173 = scmp.ne.s32.totalorder %s168, %s170
    %p174 = scmp.eq.s32.totalorder %s29, 0
    %p175 = por %p173, %p174
    %p176 = scmp.ne.s32.totalorder %s168, %s170
    %p177 = scmp.eq.s32.totalorder %s34, 1
    %p178 = por %p176, %p177
    %p179 = scmp.ne.s32.totalorder %s170, %s171
    %p180 = scmp.eq.s32.totalorder %s34, 0
    %p181 = por %p179, %p180
    %p182 = scmp.ne.s32.totalorder %s170, %s171
    %p183 = scmp.eq.s32.totalorder %s35, 1
    %p184 = por %p182, %p183
    %p186 = scmp.ne.s32.totalorder %s171, %s185
    %p187 = scmp.eq.s32.totalorder %s35, 0
    %p188 = por %p186, %p187
    %s190 = sadd.s32 %s189, 1
    %p193 = scmp.eq.s32.totalorder %s29, 1
    %p194 = scmp.ne.s32.totalorder %s189, %s191
    %p195 = scmp.eq.s32.totalorder %s29, 0
    %p196 = por %p194, %p195
    %p197 = scmp.ne.s32.totalorder %s189, %s191
    %p198 = scmp.eq.s32.totalorder %s34, 1
    %p199 = por %p197, %p198
    %p200 = scmp.ne.s32.totalorder %s191, %s192
    %p201 = scmp.eq.s32.totalorder %s34, 0
    %p202 = por %p200, %p201
    %p203 = scmp.ne.s32.totalorder %s191, %s192
    %p204 = scmp.eq.s32.totalorder %s35, 1
    %p205 = por %p203, %p204
    %p207 = scmp.ne.s32.totalorder %s192, %s206
    %p208 = scmp.eq.s32.totalorder %s35, 0
    %p209 = por %p207, %p208
    %s211 = sadd.s32 %s210, 1
    %p214 = scmp.eq.s32.totalorder %s29, 1
    %p215 = scmp.ne.s32.totalorder %s210, %s212
    %p216 = scmp.eq.s32.totalorder %s29, 0
    %p217 = por %p215, %p216
    %p218 = scmp.ne.s32.totalorder %s210, %s212
    %p219 = scmp.eq.s32.totalorder %s34, 1
    %p220 = por %p218, %p219
    %p221 = scmp.ne.s32.totalorder %s212, %s213
    %p222 = scmp.eq.s32.totalorder %s34, 0
    %p223 = por %p221, %p222
    %p224 = scmp.ne.s32.totalorder %s212, %s213
    %p225 = scmp.eq.s32.totalorder %s35, 1
    %p226 = por %p224, %p225
    %p228 = scmp.ne.s32.totalorder %s213, %s227
    %p229 = scmp.eq.s32.totalorder %s35, 0
    %p230 = por %p228, %p229
    %s232 = sadd.s32 %s231, 1
    %p235 = scmp.eq.s32.totalorder %s29, 1
    %p236 = scmp.ne.s32.totalorder %s231, %s233
    %p237 = scmp.eq.s32.totalorder %s29, 0
    %p238 = por %p236, %p237
    %p239 = scmp.ne.s32.totalorder %s231, %s233
    %p240 = scmp.eq.s32.totalorder %s34, 1
    %p241 = por %p239, %p240
    %p242 = scmp.ne.s32.totalorder %s233, %s234
    %p243 = scmp.eq.s32.totalorder %s34, 0
    %p244 = por %p242, %p243
    %p245 = scmp.ne.s32.totalorder %s233, %s234
    %p246 = scmp.eq.s32.totalorder %s35, 1
    %p247 = por %p245, %p246
    %p249 = scmp.ne.s32.totalorder %s234, %s248
    %p250 = scmp.eq.s32.totalorder %s35, 0
    %p251 = por %p249, %p250
    %s253 = sadd.s32 %s252, 1
    %p256 = scmp.eq.s32.totalorder %s29, 1
    %p257 = scmp.ne.s32.totalorder %s252, %s254
    %p258 = scmp.eq.s32.totalorder %s29, 0
    %p259 = por %p257, %p258
    %p260 = scmp.ne.s32.totalorder %s252, %s254
    %p261 = scmp.eq.s32.totalorder %s34, 1
    %p262 = por %p260, %p261
    %p263 = scmp.ne.s32.totalorder %s254, %s255
    %p264 = scmp.eq.s32.totalorder %s34, 0
    %p265 = por %p263, %p264
    %p266 = scmp.ne.s32.totalorder %s254, %s255
    %p267 = scmp.eq.s32.totalorder %s35, 1
    %p268 = por %p266, %p267
    %p270 = scmp.ne.s32.totalorder %s255, %s269
    %p271 = scmp.eq.s32.totalorder %s35, 0
    %p272 = por %p270, %p271
    %s274 = sadd.s32 %s273, 1
    %p277 = scmp.eq.s32.totalorder %s29, 1
    %p278 = scmp.ne.s32.totalorder %s273, %s275
    %p279 = scmp.eq.s32.totalorder %s29, 0
    %p280 = por %p278, %p279
    %p281 = scmp.ne.s32.totalorder %s273, %s275
    %p282 = scmp.eq.s32.totalorder %s34, 1
    %p283 = por %p281, %p282
    %p284 = scmp.ne.s32.totalorder %s275, %s276
    %p285 = scmp.eq.s32.totalorder %s34, 0
    %p286 = por %p284, %p285
    %p287 = scmp.ne.s32.totalorder %s275, %s276
    %p288 = scmp.eq.s32.totalorder %s35, 1
    %p289 = por %p287, %p288
    %p291 = scmp.ne.s32.totalorder %s276, %s290
    %p292 = scmp.eq.s32.totalorder %s35, 0
    %p293 = por %p291, %p292
    %s295 = sadd.s32 %s294, 1
    %p298 = scmp.eq.s32.totalorder %s29, 1
    %p299 = scmp.ne.s32.totalorder %s294, %s296
    %p300 = scmp.eq.s32.totalorder %s29, 0
    %p301 = por %p299, %p300
    %p302 = scmp.ne.s32.totalorder %s294, %s296
    %p303 = scmp.eq.s32.totalorder %s34, 1
    %p304 = por %p302, %p303
    %p305 = scmp.ne.s32.totalorder %s296, %s297
    %p306 = scmp.eq.s32.totalorder %s34, 0
    %p307 = por %p305, %p306
    %p308 = scmp.ne.s32.totalorder %s296, %s297
    %p309 = scmp.eq.s32.totalorder %s35, 1
    %p310 = por %p308, %p309
    %p312 = scmp.ne.s32.totalorder %s297, %s311
    %p313 = scmp.eq.s32.totalorder %s35, 0
    %p314 = por %p312, %p313
    %s316 = sadd.s32 %s315, 1
    %p319 = scmp.eq.s32.totalorder %s29, 1
    %p320 = scmp.ne.s32.totalorder %s315, %s317
    %p321 = scmp.eq.s32.totalorder %s29, 0
    %p322 = por %p320, %p321
    %p323 = scmp.ne.s32.totalorder %s315, %s317
    %p324 = scmp.eq.s32.totalorder %s34, 1
    %p325 = por %p323, %p324
    %p326 = scmp.ne.s32.totalorder %s317, %s318
    %p327 = scmp.eq.s32.totalorder %s34, 0
    %p328 = por %p326, %p327
    %p329 = scmp.ne.s32.totalorder %s317, %s318
    %p330 = scmp.eq.s32.totalorder %s35, 1
    %p331 = por %p329, %p330
    %p333 = scmp.ne.s32.totalorder %s318, %s332
    %p334 = scmp.eq.s32.totalorder %s35, 0
    %p335 = por %p333, %p334
    %s337 = sadd.s32 %s336, 1
    %p340 = scmp.eq.s32.totalorder %s29, 1
    %p341 = scmp.ne.s32.totalorder %s336, %s338
    %p342 = scmp.eq.s32.totalorder %s29, 0
    %p343 = por %p341, %p342
    %p344 = scmp.ne.s32.totalorder %s336, %s338
    %p345 = scmp.eq.s32.totalorder %s34, 1
    %p346 = por %p344, %p345
    %p347 = scmp.ne.s32.totalorder %s338, %s339
    %p348 = scmp.eq.s32.totalorder %s34, 0
    %p349 = por %p347, %p348
    %p350 = scmp.ne.s32.totalorder %s338, %s339
    %p351 = scmp.eq.s32.totalorder %s35, 1
    %p352 = por %p350, %p351
    %p354 = scmp.ne.s32.totalorder %s339, %s353
    %p355 = scmp.eq.s32.totalorder %s35, 0
    %p356 = por %p354, %p355
    %s358 = sadd.s32 %s357, 1
    %p361 = scmp.eq.s32.totalorder %s29, 1
    %p362 = scmp.ne.s32.totalorder %s357, %s359
    %p363 = scmp.eq.s32.totalorder %s29, 0
    %p364 = por %p362, %p363
    %p365 = scmp.ne.s32.totalorder %s357, %s359
    %p366 = scmp.eq.s32.totalorder %s34, 1
    %p367 = por %p365, %p366
    %p368 = scmp.ne.s32.totalorder %s359, %s360
    %p369 = scmp.eq.s32.totalorder %s34, 0
    %p370 = por %p368, %p369
    %p371 = scmp.ne.s32.totalorder %s359, %s360
    %p372 = scmp.eq.s32.totalorder %s35, 1
    %p373 = por %p371, %p372
    %p375 = scmp.ne.s32.totalorder %s360, %s374
    %p376 = scmp.eq.s32.totalorder %s35, 0
    %p377 = por %p375, %p376
    %s379 = sadd.s32 %s378, 1
    %p382 = scmp.eq.s32.totalorder %s29, 1
    %p383 = scmp.ne.s32.totalorder %s378, %s380
    %p384 = scmp.eq.s32.totalorder %s29, 0
    %p385 = por %p383, %p384
    %p386 = scmp.ne.s32.totalorder %s378, %s380
    %p387 = scmp.eq.s32.totalorder %s34, 1
    %p388 = por %p386, %p387
    %p389 = scmp.ne.s32.totalorder %s380, %s381
    %p390 = scmp.eq.s32.totalorder %s34, 0
    %p391 = por %p389, %p390
    %p392 = scmp.ne.s32.totalorder %s380, %s381
    %p393 = scmp.eq.s32.totalorder %s35, 1
    %p394 = por %p392, %p393
    %p396 = scmp.ne.s32.totalorder %s381, %s395
    %p397 = scmp.eq.s32.totalorder %s35, 0
    %p398 = por %p396, %p397
    %s400 = sadd.s32 %s399, 1
    %p403 = scmp.eq.s32.totalorder %s29, 1
    %p404 = scmp.ne.s32.totalorder %s399, %s401
    %p405 = scmp.eq.s32.totalorder %s29, 0
    %p406 = por %p404, %p405
    %p407 = scmp.ne.s32.totalorder %s399, %s401
    %p408 = scmp.eq.s32.totalorder %s34, 1
    %p409 = por %p407, %p408
    %p410 = scmp.ne.s32.totalorder %s401, %s402
    %p411 = scmp.eq.s32.totalorder %s34, 0
    %p412 = por %p410, %p411
    %p413 = scmp.ne.s32.totalorder %s401, %s402
    %p414 = scmp.eq.s32.totalorder %s35, 1
    %p415 = por %p413, %p414
    %p417 = scmp.ne.s32.totalorder %s402, %s416
    %p418 = scmp.eq.s32.totalorder %s35, 0
    %p419 = por %p417, %p418
    %s421 = sadd.s32 %s420, 1
    %p424 = scmp.eq.s32.totalorder %s29, 1
    %p425 = scmp.ne.s32.totalorder %s420, %s422
    %p426 = scmp.eq.s32.totalorder %s29, 0
    %p427 = por %p425, %p426
    %p428 = scmp.ne.s32.totalorder %s420, %s422
    %p429 = scmp.eq.s32.totalorder %s34, 1
    %p430 = por %p428, %p429
    %p431 = scmp.ne.s32.totalorder %s422, %s423
    %p432 = scmp.eq.s32.totalorder %s34, 0
    %p433 = por %p431, %p432
    %p434 = scmp.ne.s32.totalorder %s422, %s423
    %p435 = scmp.eq.s32.totalorder %s35, 1
    %p436 = por %p434, %p435
    %p438 = scmp.ne.s32.totalorder %s423, %s437
    %p439 = scmp.eq.s32.totalorder %s35, 0
    %p440 = por %p438, %p439
    %s442 = sadd.s32 %s441, 1
    %p445 = scmp.eq.s32.totalorder %s29, 1
    %p446 = scmp.ne.s32.totalorder %s441, %s443
    %p447 = scmp.eq.s32.totalorder %s29, 0
    %p448 = por %p446, %p447
    %p449 = scmp.ne.s32.totalorder %s441, %s443
    %p450 = scmp.eq.s32.totalorder %s34, 1
    %p451 = por %p449, %p450
    %p452 = scmp.ne.s32.totalorder %s443, %s444
    %p453 = scmp.eq.s32.totalorder %s34, 0
    %p454 = por %p452, %p453
    %p455 = scmp.ne.s32.totalorder %s443, %s444
    %p456 = scmp.eq.s32.totalorder %s35, 1
    %p457 = por %p455, %p456
    %p459 = scmp.ne.s32.totalorder %s444, %s458
    %p460 = scmp.eq.s32.totalorder %s35, 0
    %p461 = por %p459, %p460
    %s463 = sadd.s32 %s462, 1
    %p466 = scmp.eq.s32.totalorder %s29, 1
    %p467 = scmp.ne.s32.totalorder %s462, %s464
    %p468 = scmp.eq.s32.totalorder %s29, 0
    %p469 = por %p467, %p468
    %p470 = scmp.ne.s32.totalorder %s462, %s464
    %p471 = scmp.eq.s32.totalorder %s34, 1
    %p472 = por %p470, %p471
    %p473 = scmp.ne.s32.totalorder %s464, %s465
    %p474 = scmp.eq.s32.totalorder %s34, 0
    %p475 = por %p473, %p474
    %p476 = scmp.ne.s32.totalorder %s464, %s465
    %p477 = scmp.eq.s32.totalorder %s35, 1
    %p478 = por %p476, %p477
    %p480 = scmp.ne.s32.totalorder %s465, %s479
    %p481 = scmp.eq.s32.totalorder %s35, 0
    %p482 = por %p480, %p481
    %s484 = sadd.s32 %s483, 1
    %p487 = scmp.eq.s32.totalorder %s29, 1
    %p488 = scmp.ne.s32.totalorder %s483, %s485
    %p489 = scmp.eq.s32.totalorder %s29, 0
    %p490 = por %p488, %p489
    %p491 = scmp.ne.s32.totalorder %s483, %s485
    %p492 = scmp.eq.s32.totalorder %s34, 1
    %p493 = por %p491, %p492
    %p494 = scmp.ne.s32.totalorder %s485, %s486
    %p495 = scmp.eq.s32.totalorder %s34, 0
    %p496 = por %p494, %p495
    %p497 = scmp.ne.s32.totalorder %s485, %s486
    %p498 = scmp.eq.s32.totalorder %s35, 1
    %p499 = por %p497, %p498
    %p501 = scmp.ne.s32.totalorder %s486, %s500
    %p502 = scmp.eq.s32.totalorder %s35, 0
    %p503 = por %p501, %p502
    %s505 = sadd.s32 %s504, 1
    %p508 = scmp.eq.s32.totalorder %s29, 1
    %p509 = scmp.ne.s32.totalorder %s504, %s506
    %p510 = scmp.eq.s32.totalorder %s29, 0
    %p511 = por %p509, %p510
    %p512 = scmp.ne.s32.totalorder %s504, %s506
    %p513 = scmp.eq.s32.totalorder %s34, 1
    %p514 = por %p512, %p513
    %p515 = scmp.ne.s32.totalorder %s506, %s507
    %p516 = scmp.eq.s32.totalorder %s34, 0
    %p517 = por %p515, %p516
    %p518 = scmp.ne.s32.totalorder %s506, %s507
    %p519 = scmp.eq.s32.totalorder %s35, 1
    %p520 = por %p518, %p519
    %p522 = scmp.ne.s32.totalorder %s507, %s521
    %p523 = scmp.eq.s32.totalorder %s35, 0
    %p524 = por %p522, %p523
    %s525 = ssub.s32 %s29, %s36
    %p526 = scmp.eq.s32.totalorder %s525, 0
    %s528 = sadd.s32 %s527, 1
    %s529 = scalar_select %p526, %s527, %s528
    %p532 = pneg %p526
    %p533 = scmp.eq.s32.totalorder %s29, 1
    %p534 = por %p532, %p533
    %p535 = scmp.ne.s32.totalorder %s527, %s530
    %p536 = scmp.eq.s32.totalorder %s29, 0
    %p537 = por %p535, %p536
    %p538 = scmp.ne.s32.totalorder %s527, %s530
    %p539 = scmp.eq.s32.totalorder %s34, 1
    %p540 = por %p538, %p539
    %p541 = scmp.ne.s32.totalorder %s530, %s531
    %p542 = scmp.eq.s32.totalorder %s34, 0
    %p543 = por %p541, %p542
    %p544 = scmp.ne.s32.totalorder %s530, %s531
    %p545 = scmp.eq.s32.totalorder %s35, 1
    %p546 = por %p544, %p545
    %p548 = scmp.ne.s32.totalorder %s531, %s547
    %p549 = scmp.eq.s32.totalorder %s35, 0
    %p550 = por %p548, %p549
    %p551 = scmp.le.s32.totalorder 1, %s29
    %p552 = scmp.lt.s32.totalorder %s29, 3
    %p553 = pnand %p551, %p552
    %p554 = pneg %p553
    // Predicated region
    $region9: #{complex_decoder_forward.1} parent=5 // pred_check
      _
    $region10: #{complex_decoder_forward.1} parent=5 // pred_check_branch
      %556 = sbr.rel (%p553) target = $region12
    $region11: #{complex_decoder_forward.1} parent=5 // pred_region
      %s557 = ssub.s32 %s29, 1
      // Predicated region
      $region13: #{complex_decoder_forward.1} parent=11 // pred_check
        %p558 = pneg %p76
      $region14: #{complex_decoder_forward.1} parent=11 // pred_check_branch
        %560 = sbr.rel (%p558) target = $region16
      $region15: #{complex_decoder_forward.1} parent=11 // pred_region
        _
      $region16: #{complex_decoder_forward.1} parent=11 // pred_fallthru
        _
      // Predicated region
      $region17: #{complex_decoder_forward.1} parent=11 // pred_check
        %p561 = pneg %p97
      $region18: #{complex_decoder_forward.1} parent=11 // pred_check_branch
        %563 = sbr.rel (%p561) target = $region20
      $region19: #{complex_decoder_forward.1} parent=11 // pred_region
        _
      $region20: #{complex_decoder_forward.1} parent=11 // pred_fallthru
        _
      // Predicated region
      $region21: #{complex_decoder_forward.1} parent=11 // pred_check
        %p564 = pneg %p118
      $region22: #{complex_decoder_forward.1} parent=11 // pred_check_branch
        %566 = sbr.rel (%p564) target = $region24
      $region23: #{complex_decoder_forward.1} parent=11 // pred_region
        _
      $region24: #{complex_decoder_forward.1} parent=11 // pred_fallthru
        _
      // Predicated region
      $region25: #{complex_decoder_forward.1} parent=11 // pred_check
        %p567 = pneg %p139
      $region26: #{complex_decoder_forward.1} parent=11 // pred_check_branch
        %569 = sbr.rel (%p567) target = $region28
      $region27: #{complex_decoder_forward.1} parent=11 // pred_region
        _
      $region28: #{complex_decoder_forward.1} parent=11 // pred_fallthru
        _
      // Predicated region
      $region29: #{complex_decoder_forward.1} parent=11 // pred_check
        %p570 = pneg %p160
      $region30: #{complex_decoder_forward.1} parent=11 // pred_check_branch
        %572 = sbr.rel (%p570) target = $region32
      $region31: #{complex_decoder_forward.1} parent=11 // pred_region
        _
      $region32: #{complex_decoder_forward.1} parent=11 // pred_fallthru
        _
      // Predicated region
      $region33: #{complex_decoder_forward.1} parent=11 // pred_check
        %p573 = pneg %p181
      $region34: #{complex_decoder_forward.1} parent=11 // pred_check_branch
        %575 = sbr.rel (%p573) target = $region36
      $region35: #{complex_decoder_forward.1} parent=11 // pred_region
        _
      $region36: #{complex_decoder_forward.1} parent=11 // pred_fallthru
        _
      // Predicated region
      $region37: #{complex_decoder_forward.1} parent=11 // pred_check
        %p576 = pneg %p202
      $region38: #{complex_decoder_forward.1} parent=11 // pred_check_branch
        %578 = sbr.rel (%p576) target = $region40
      $region39: #{complex_decoder_forward.1} parent=11 // pred_region
        _
      $region40: #{complex_decoder_forward.1} parent=11 // pred_fallthru
        _
      // Predicated region
      $region41: #{complex_decoder_forward.1} parent=11 // pred_check
        %p579 = pneg %p223
      $region42: #{complex_decoder_forward.1} parent=11 // pred_check_branch
        %581 = sbr.rel (%p579) target = $region44
      $region43: #{complex_decoder_forward.1} parent=11 // pred_region
        _
      $region44: #{complex_decoder_forward.1} parent=11 // pred_fallthru
        _
      // Predicated region
      $region45: #{complex_decoder_forward.1} parent=11 // pred_check
        %p582 = pneg %p244
      $region46: #{complex_decoder_forward.1} parent=11 // pred_check_branch
        %584 = sbr.rel (%p582) target = $region48
      $region47: #{complex_decoder_forward.1} parent=11 // pred_region
        _
      $region48: #{complex_decoder_forward.1} parent=11 // pred_fallthru
        _
      // Predicated region
      $region49: #{complex_decoder_forward.1} parent=11 // pred_check
        %p585 = pneg %p265
      $region50: #{complex_decoder_forward.1} parent=11 // pred_check_branch
        %587 = sbr.rel (%p585) target = $region52
      $region51: #{complex_decoder_forward.1} parent=11 // pred_region
        _
      $region52: #{complex_decoder_forward.1} parent=11 // pred_fallthru
        _
      // Predicated region
      $region53: #{complex_decoder_forward.1} parent=11 // pred_check
        %p588 = pneg %p286
      $region54: #{complex_decoder_forward.1} parent=11 // pred_check_branch
        %590 = sbr.rel (%p588) target = $region56
      $region55: #{complex_decoder_forward.1} parent=11 // pred_region
        _
      $region56: #{complex_decoder_forward.1} parent=11 // pred_fallthru
        _
      // Predicated region
      $region57: #{complex_decoder_forward.1} parent=11 // pred_check
        %p591 = pneg %p307
      $region58: #{complex_decoder_forward.1} parent=11 // pred_check_branch
        %593 = sbr.rel (%p591) target = $region60
      $region59: #{complex_decoder_forward.1} parent=11 // pred_region
        _
      $region60: #{complex_decoder_forward.1} parent=11 // pred_fallthru
        _
      // Predicated region
      $region61: #{complex_decoder_forward.1} parent=11 // pred_check
        %p594 = pneg %p328
      $region62: #{complex_decoder_forward.1} parent=11 // pred_check_branch
        %596 = sbr.rel (%p594) target = $region64
      $region63: #{complex_decoder_forward.1} parent=11 // pred_region
        _
      $region64: #{complex_decoder_forward.1} parent=11 // pred_fallthru
        _
      // Predicated region
      $region65: #{complex_decoder_forward.1} parent=11 // pred_check
        %p597 = pneg %p349
      $region66: #{complex_decoder_forward.1} parent=11 // pred_check_branch
        %599 = sbr.rel (%p597) target = $region68
      $region67: #{complex_decoder_forward.1} parent=11 // pred_region
        _
      $region68: #{complex_decoder_forward.1} parent=11 // pred_fallthru
        _
      // Predicated region
      $region69: #{complex_decoder_forward.1} parent=11 // pred_check
        %p600 = pneg %p370
      $region70: #{complex_decoder_forward.1} parent=11 // pred_check_branch
        %602 = sbr.rel (%p600) target = $region72
      $region71: #{complex_decoder_forward.1} parent=11 // pred_region
        _
      $region72: #{complex_decoder_forward.1} parent=11 // pred_fallthru
        _
      // Predicated region
      $region73: #{complex_decoder_forward.1} parent=11 // pred_check
        %p603 = pneg %p391
      $region74: #{complex_decoder_forward.1} parent=11 // pred_check_branch
        %605 = sbr.rel (%p603) target = $region76
      $region75: #{complex_decoder_forward.1} parent=11 // pred_region
        _
      $region76: #{complex_decoder_forward.1} parent=11 // pred_fallthru
        _
      // Predicated region
      $region77: #{complex_decoder_forward.1} parent=11 // pred_check
        %p606 = pneg %p412
      $region78: #{complex_decoder_forward.1} parent=11 // pred_check_branch
        %608 = sbr.rel (%p606) target = $region80
      $region79: #{complex_decoder_forward.1} parent=11 // pred_region
        _
      $region80: #{complex_decoder_forward.1} parent=11 // pred_fallthru
        _
      // Predicated region
      $region81: #{complex_decoder_forward.1} parent=11 // pred_check
        %p609 = pneg %p433
      $region82: #{complex_decoder_forward.1} parent=11 // pred_check_branch
        %611 = sbr.rel (%p609) target = $region84
      $region83: #{complex_decoder_forward.1} parent=11 // pred_region
        _
      $region84: #{complex_decoder_forward.1} parent=11 // pred_fallthru
        _
      // Predicated region
      $region85: #{complex_decoder_forward.1} parent=11 // pred_check
        %p612 = pneg %p454
      $region86: #{complex_decoder_forward.1} parent=11 // pred_check_branch
        %614 = sbr.rel (%p612) target = $region88
      $region87: #{complex_decoder_forward.1} parent=11 // pred_region
        _
      $region88: #{complex_decoder_forward.1} parent=11 // pred_fallthru
        _
      // Predicated region
      $region89: #{complex_decoder_forward.1} parent=11 // pred_check
        %p615 = pneg %p475
      $region90: #{complex_decoder_forward.1} parent=11 // pred_check_branch
        %617 = sbr.rel (%p615) target = $region92
      $region91: #{complex_decoder_forward.1} parent=11 // pred_region
        _
      $region92: #{complex_decoder_forward.1} parent=11 // pred_fallthru
        _
      // Predicated region
      $region93: #{complex_decoder_forward.1} parent=11 // pred_check
        %p618 = pneg %p496
      $region94: #{complex_decoder_forward.1} parent=11 // pred_check_branch
        %620 = sbr.rel (%p618) target = $region96
      $region95: #{complex_decoder_forward.1} parent=11 // pred_region
        _
      $region96: #{complex_decoder_forward.1} parent=11 // pred_fallthru
        _
      // Predicated region
      $region97: #{complex_decoder_forward.1} parent=11 // pred_check
        %p621 = pneg %p517
      $region98: #{complex_decoder_forward.1} parent=11 // pred_check_branch
        %623 = sbr.rel (%p621) target = $region100
      $region99: #{complex_decoder_forward.1} parent=11 // pred_region
        _
      $region100: #{complex_decoder_forward.1} parent=11 // pred_fallthru
        _
    $region12: #{complex_decoder_forward.1} parent=5 // pred_fallthru
      _
    %p624 = scmp.lt.s32.totalorder %s29, 2
    // Predicated region
    $region101: #{complex_decoder_forward.1} parent=5 // pred_check
      %p625 = pneg %p624
    $region102: #{complex_decoder_forward.1} parent=5 // pred_check_branch
      %627 = sbr.rel (%p625) target = $region104
    $region103: #{complex_decoder_forward.1} parent=5 // pred_region
      // Predicated region
      $region105: #{complex_decoder_forward.1} parent=103 // pred_check
        %p628 = pneg %p49
      $region106: #{complex_decoder_forward.1} parent=103 // pred_check_branch
        %630 = sbr.rel (%p628) target = $region108
      $region107: #{complex_decoder_forward.1} parent=103 // pred_region
        %p631 = scmp.lt.s32.totalorder %s29, 1
        %s632 = scalar_select %p631, %s29, 1
        %s633 = smul.addr %s632, 2
        %s634 = smul.addr %s633, 8
        %s635 = scalar_lea.vmem %s0, %s634
      $region108: #{complex_decoder_forward.1} parent=103 // pred_fallthru
        _
    $region104: #{complex_decoder_forward.1} parent=5 // pred_fallthru
      _
    %p636 = scmp.le.s32.totalorder 1, %s29
    %p637 = scmp.lt.s32.totalorder %s29, 3
    %p638 = pnand %p636, %p637
    %p639 = pneg %p638
    // Predicated region
    $region109: #{complex_decoder_forward.1} parent=5 // pred_check
      _
    $region110: #{complex_decoder_forward.1} parent=5 // pred_check_branch
      %641 = sbr.rel (%p638) target = $region112
    $region111: #{complex_decoder_forward.1} parent=5 // pred_region
      %s642 = ssub.s32 %s29, 1
      %p643 = scmp.lt.s32.totalorder %s34, 1
      %s644 = scalar_select %p643, %s34, 1
      %s645 = smul.addr %s644, 2
      %s646 = smul.addr %s645, 8
      %s647 = scalar_lea.vmem %s0, %s646
      %p648 = pneg %p55
      %p649 = pneg %p52
      %p650 = pneg %p76
      %p651 = pneg %p73
      %p652 = pneg %p97
      %p653 = pneg %p94
      %p654 = pneg %p118
      %p655 = pneg %p115
      %p656 = pneg %p139
      %p657 = pneg %p136
      %p658 = pneg %p160
      %p659 = pneg %p157
      %p660 = pneg %p181
      %p661 = pneg %p178
      %p662 = pneg %p202
      %p663 = pneg %p199
      %p664 = pneg %p223
      %p665 = pneg %p220
      %p666 = pneg %p244
      %p667 = pneg %p241
      %p668 = pneg %p265
      %p669 = pneg %p262
      %p670 = pneg %p286
      %p671 = pneg %p283
      %p672 = pneg %p307
      %p673 = pneg %p304
      %p674 = pneg %p328
      %p675 = pneg %p325
      %p676 = pneg %p349
      %p677 = pneg %p346
      %p678 = pneg %p370
      %p679 = pneg %p367
      %p680 = pneg %p391
      %p681 = pneg %p388
      %p682 = pneg %p412
      %p683 = pneg %p409
      %p684 = pneg %p433
      %p685 = pneg %p430
      %p686 = pneg %p454
      %p687 = pneg %p451
      %p688 = pneg %p475
      %p689 = pneg %p472
      %p690 = pneg %p496
      %p691 = pneg %p493
      %p692 = pneg %p517
      %p693 = pneg %p514
      %p694 = pneg %p543
      %p695 = pneg %p540
      %p696 = scmp.lt.s32.totalorder %s34, 1
      %s697 = scalar_select %p696, %s34, 1
      %s698 = smul.addr %s697, 2
      %s699 = smul.addr %s698, 4
      %s700 = scalar_lea.vmem %s23, %s699
      %p701 = scmp.lt.s32.totalorder %s34, 1
      %s702 = scalar_select %p701, %s34, 1
      %s703 = smul.addr %s702, 2
      %s704 = smul.addr %s703, 8
      %s705 = scalar_lea.vmem %s0, %s704
      %p706 = scmp.lt.s32.totalorder %s34, 1
      %s707 = scalar_select %p706, %s34, 1
      %s708 = smul.addr %s707, 2
      %s709 = smul.addr %s708, 4
      %s710 = scalar_lea.vmem %s23, %s709
      %v711 = vld [vmem:[%s705] sm:$0xff]
      %v712 = vld [vmem:[%s705 + $0x8] sm:$0xff]
      %713 = vst [vmem:[#allocation2 + $0x40] sm:$0xff] %v711
      %714 = vst [vmem:[#allocation2 + $0x48] sm:$0xff] %v712
      %v715 = vld [vmem:[#allocation2 + $0x40] sm:$0xff]
      %v716 = vld [vmem:[#allocation2 + $0x48] sm:$0xff]
      %s717 = scalar_lea.vmem %s2, 32
      %v718 = vld [vmem:[%s717] sm:$0xff]
      %719 = vrot.lane.b32.xlu0 %v715, 1
      %v720 = vpop.permute.xlu0 %719
      %721 = vrot.lane.b32.xlu0 %v716, 1
      %v722 = vpop.permute.xlu0 %721
      %v723 = vlaneseq
      %v724 = vand.u32 %v723, 127
      %vm725 = vcmp.lt.s32.totalorder %v724, 1
      %v726 = vsel %vm725, %v720, %v722
      %v727 = vsel %vm725, %v722, %v720
      %s728 = scalar_lea.vmem %s1, 3
      %v729 = vld [vmem:[%s728] ss:$8 sm:$0x3]
      %v731 = vlaneseq
      %v732 = vshrl.u32 %v731, 7
      %v733 = vsub.s32 0, %v732
      %v734 = vrot.slane %v729, %v733
      %v735 = vlaneseq
      %v736 = vshrl.u32 %v735, 7
      %v737 = vsub.s32 1, %v736
      %v738 = vrot.slane %v729, %v737
      %v741 = vmul.f32 %v727, %v734
      %v742 = vmul.f32 %v726, %v738
      %s743 = scalar_lea.vmem %s2, 24
      %v744 = vld [vmem:[%s743] sm:$0xff]
      %vm745 = vcmask 64512
      %v747 = vsel %vm745, %v744, 0
      %749 = vmatprep.subr.mxu0 %v742
      %750 = vmatpush1.msra.mxu0 %v741
      %751 = vmatprep.subr.mxu0 0.0
      %752 = vmatpush1.msra.mxu0 0.0
      %753 = vmatprep.subr.mxu0 0.0
      %754 = vmatpush1.msra.mxu0 0.0
      %755 = vmatprep.subr.mxu0 0.0
      %756 = vmatpush1.msra.mxu0 0.0
      %757 = vmatprep.subr.mxu0 0.0
      %758 = vmatpush1.msra.mxu0 0.0
      %759 = vmatprep.subr.mxu0 0.0
      %760 = vmatpush1.msra.mxu0 0.0
      %761 = vmatprep.subr.mxu0 0.0
      %762 = vmatpush1.msra.mxu0 0.0
      %763 = vmatprep.subr.mxu0 0.0
      %764 = vmatpush1.msra.mxu0 0.0
      %765 = vmatprep.subr.mxu0 0.0
      %766 = vmatpush1.msra.mxu0 0.0
      %767 = vmatprep.subr.mxu0 0.0
      %768 = vmatpush1.msra.mxu0 0.0
      %769 = vmatprep.subr.mxu0 0.0
      %770 = vmatpush1.msra.mxu0 0.0
      %771 = vmatprep.subr.mxu0 0.0
      %772 = vmatpush1.msra.mxu0 0.0
      %773 = vmatprep.subr.mxu0 0.0
      %774 = vmatpush1.msra.mxu0 0.0
      %775 = vmatprep.subr.mxu0 0.0
      %776 = vmatpush1.msra.mxu0 0.0
      %777 = vmatprep.subr.mxu0 0.0
      %778 = vmatpush1.msra.mxu0 0.0
      %779 = vmatprep.subr.mxu0 0.0
      %780 = vmatpush1.msra.mxu0 0.0
      %781 = vmatprep.subr.mxu0 0.0
      %782 = vmatpush1.msra.mxu0 0.0
      %783 = vmatprep.subr.mxu0 0.0
      %784 = vmatpush1.msra.mxu0 0.0
      %785 = vmatprep.subr.mxu0 0.0
      %786 = vmatpush1.msra.mxu0 0.0
      %787 = vmatprep.subr.mxu0 0.0
      %788 = vmatpush1.msra.mxu0 0.0
      %789 = vmatprep.subr.mxu0 0.0
      %790 = vmatpush1.msra.mxu0 0.0
      %791 = vmatprep.subr.mxu0 0.0
      %792 = vmatpush1.msra.mxu0 0.0
      %793 = vmatprep.subr.mxu0 0.0
      %794 = vmatpush1.msra.mxu0 0.0
      %795 = vmatprep.subr.mxu0 0.0
      %796 = vmatpush1.msra.mxu0 0.0
      %797 = vmatprep.subr.mxu0 0.0
      %798 = vmatpush1.msra.mxu0 0.0
      %799 = vmatprep.subr.mxu0 0.0
      %800 = vmatpush1.msra.mxu0 0.0
      %801 = vmatprep.subr.mxu0 0.0
      %802 = vmatpush1.msra.mxu0 0.0
      %803 = vmatprep.subr.mxu0 0.0
      %804 = vmatpush1.msra.mxu0 0.0
      %805 = vmatprep.subr.mxu0 0.0
      %806 = vmatpush1.msra.mxu0 0.0
      %807 = vmatprep.subr.mxu0 0.0
      %808 = vmatpush1.msra.mxu0 0.0
      %809 = vmatprep.subr.mxu0 0.0
      %810 = vmatpush1.msra.mxu0 0.0
      %811 = vmatprep.subr.mxu0 0.0
      %812 = vmatpush1.msra.mxu0 0.0
      %813 = vmatprep.mubr.f32.mxu0 0.0
      %814 = vmatmul.mubr.f32.gmra.mrb[0].mxu0 %v747
      %v815 = vpop.f32.mrb[0].mxu0
      %v816 = vadd.f32 0.0, %v815
      %v817 = vpop.f32.mrb[0].mxu0
      %v818 = vadd.f32 0.0, %v817
      %819 = vdwg.mxu0
      %v821 = vsel %vm745, %v718, 0
      %823 = vmatprep.subr.mxu0 %v716
      %824 = vmatpush1.msra.mxu0 %v715
      %825 = vmatprep.subr.mxu0 0.0
      %826 = vmatpush1.msra.mxu0 0.0
      %827 = vmatprep.subr.mxu0 0.0
      %828 = vmatpush1.msra.mxu0 0.0
      %829 = vmatprep.subr.mxu0 0.0
      %830 = vmatpush1.msra.mxu0 0.0
      %831 = vmatprep.subr.mxu0 0.0
      %832 = vmatpush1.msra.mxu0 0.0
      %833 = vmatprep.subr.mxu0 0.0
      %834 = vmatpush1.msra.mxu0 0.0
      %835 = vmatprep.subr.mxu0 0.0
      %836 = vmatpush1.msra.mxu0 0.0
      %837 = vmatprep.subr.mxu0 0.0
      %838 = vmatpush1.msra.mxu0 0.0
      %839 = vmatprep.subr.mxu0 0.0
      %840 = vmatpush1.msra.mxu0 0.0
      %841 = vmatprep.subr.mxu0 0.0
      %842 = vmatpush1.msra.mxu0 0.0
      %843 = vmatprep.subr.mxu0 0.0
      %844 = vmatpush1.msra.mxu0 0.0
      %845 = vmatprep.subr.mxu0 0.0
      %846 = vmatpush1.msra.mxu0 0.0
      %847 = vmatprep.subr.mxu0 0.0
      %848 = vmatpush1.msra.mxu0 0.0
      %849 = vmatprep.subr.mxu0 0.0
      %850 = vmatpush1.msra.mxu0 0.0
      %851 = vmatprep.subr.mxu0 0.0
      %852 = vmatpush1.msra.mxu0 0.0
      %853 = vmatprep.subr.mxu0 0.0
      %854 = vmatpush1.msra.mxu0 0.0
      %855 = vmatprep.subr.mxu0 0.0
      %856 = vmatpush1.msra.mxu0 0.0
      %857 = vmatprep.subr.mxu0 0.0
      %858 = vmatpush1.msra.mxu0 0.0
      %859 = vmatprep.subr.mxu0 0.0
      %860 = vmatpush1.msra.mxu0 0.0
      %861 = vmatprep.subr.mxu0 0.0
      %862 = vmatpush1.msra.mxu0 0.0
      %863 = vmatprep.subr.mxu0 0.0
      %864 = vmatpush1.msra.mxu0 0.0
      %865 = vmatprep.subr.mxu0 0.0
      %866 = vmatpush1.msra.mxu0 0.0
      %867 = vmatprep.subr.mxu0 0.0
      %868 = vmatpush1.msra.mxu0 0.0
      %869 = vmatprep.subr.mxu0 0.0
      %870 = vmatpush1.msra.mxu0 0.0
      %871 = vmatprep.subr.mxu0 0.0
      %872 = vmatpush1.msra.mxu0 0.0
      %873 = vmatprep.subr.mxu0 0.0
      %874 = vmatpush1.msra.mxu0 0.0
      %875 = vmatprep.subr.mxu0 0.0
      %876 = vmatpush1.msra.mxu0 0.0
      %877 = vmatprep.subr.mxu0 0.0
      %878 = vmatpush1.msra.mxu0 0.0
      %879 = vmatprep.subr.mxu0 0.0
      %880 = vmatpush1.msra.mxu0 0.0
      %881 = vmatprep.subr.mxu0 0.0
      %882 = vmatpush1.msra.mxu0 0.0
      %883 = vmatprep.subr.mxu0 0.0
      %884 = vmatpush1.msra.mxu0 0.0
      %885 = vmatprep.subr.mxu0 0.0
      %886 = vmatpush1.msra.mxu0 0.0
      %887 = vmatprep.mubr.f32.mxu0 0.0
      %888 = vmatmul.mubr.f32.gmra.mrb[0].mxu0 %v821
      %v889 = vpop.f32.mrb[0].mxu0
      %v890 = vadd.f32 %v816, %v889
      %v891 = vpop.f32.mrb[0].mxu0
      %v892 = vadd.f32 %v818, %v891
      %893 = vdwg.mxu0
      %894 = vrot.lane.b32.xlu0 %v715, 127
      %v895 = vpop.permute.xlu0 %894
      %896 = vrot.lane.b32.xlu0 %v716, 127
      %v897 = vpop.permute.xlu0 %896
      %vm898 = vcmp.lt.s32.totalorder %v724, 127
      %v899 = vsel %vm898, %v895, %v897
      %v900 = vsel %vm898, %v897, %v895
      %s901 = scalar_lea.vmem %s1, 5
      %v902 = vld [vmem:[%s901] ss:$8 sm:$0x3]
      %v904 = vlaneseq
      %v905 = vshrl.u32 %v904, 7
      %v906 = vsub.s32 0, %v905
      %v907 = vrot.slane %v902, %v906
      %v908 = vlaneseq
      %v909 = vshrl.u32 %v908, 7
      %v910 = vsub.s32 1, %v909
      %v911 = vrot.slane %v902, %v910
      %v914 = vmul.f32 %v899, %v907
      %v915 = vmul.f32 %v900, %v911
      %s916 = scalar_lea.vmem %s2, 40
      %v917 = vld [vmem:[%s916] sm:$0xff]
      %v919 = vsel %vm745, %v917, 0
      %921 = vmatprep.subr.mxu0 %v915
      %922 = vmatpush1.msra.mxu0 %v914
      %923 = vmatprep.subr.mxu0 0.0
      %924 = vmatpush1.msra.mxu0 0.0
      %925 = vmatprep.subr.mxu0 0.0
      %926 = vmatpush1.msra.mxu0 0.0
      %927 = vmatprep.subr.mxu0 0.0
      %928 = vmatpush1.msra.mxu0 0.0
      %929 = vmatprep.subr.mxu0 0.0
      %930 = vmatpush1.msra.mxu0 0.0
      %931 = vmatprep.subr.mxu0 0.0
      %932 = vmatpush1.msra.mxu0 0.0
      %933 = vmatprep.subr.mxu0 0.0
      %934 = vmatpush1.msra.mxu0 0.0
      %935 = vmatprep.subr.mxu0 0.0
      %936 = vmatpush1.msra.mxu0 0.0
      %937 = vmatprep.subr.mxu0 0.0
      %938 = vmatpush1.msra.mxu0 0.0
      %939 = vmatprep.subr.mxu0 0.0
      %940 = vmatpush1.msra.mxu0 0.0
      %941 = vmatprep.subr.mxu0 0.0
      %942 = vmatpush1.msra.mxu0 0.0
      %943 = vmatprep.subr.mxu0 0.0
      %944 = vmatpush1.msra.mxu0 0.0
      %945 = vmatprep.subr.mxu0 0.0
      %946 = vmatpush1.msra.mxu0 0.0
      %947 = vmatprep.subr.mxu0 0.0
      %948 = vmatpush1.msra.mxu0 0.0
      %949 = vmatprep.subr.mxu0 0.0
      %950 = vmatpush1.msra.mxu0 0.0
      %951 = vmatprep.subr.mxu0 0.0
      %952 = vmatpush1.msra.mxu0 0.0
      %953 = vmatprep.subr.mxu0 0.0
      %954 = vmatpush1.msra.mxu0 0.0
      %955 = vmatprep.subr.mxu0 0.0
      %956 = vmatpush1.msra.mxu0 0.0
      %957 = vmatprep.subr.mxu0 0.0
      %958 = vmatpush1.msra.mxu0 0.0
      %959 = vmatprep.subr.mxu0 0.0
      %960 = vmatpush1.msra.mxu0 0.0
      %961 = vmatprep.subr.mxu0 0.0
      %962 = vmatpush1.msra.mxu0 0.0
      %963 = vmatprep.subr.mxu0 0.0
      %964 = vmatpush1.msra.mxu0 0.0
      %965 = vmatprep.subr.mxu0 0.0
      %966 = vmatpush1.msra.mxu0 0.0
      %967 = vmatprep.subr.mxu0 0.0
      %968 = vmatpush1.msra.mxu0 0.0
      %969 = vmatprep.subr.mxu0 0.0
      %970 = vmatpush1.msra.mxu0 0.0
      %971 = vmatprep.subr.mxu0 0.0
      %972 = vmatpush1.msra.mxu0 0.0
      %973 = vmatprep.subr.mxu0 0.0
      %974 = vmatpush1.msra.mxu0 0.0
      %975 = vmatprep.subr.mxu0 0.0
      %976 = vmatpush1.msra.mxu0 0.0
      %977 = vmatprep.subr.mxu0 0.0
      %978 = vmatpush1.msra.mxu0 0.0
      %979 = vmatprep.subr.mxu0 0.0
      %980 = vmatpush1.msra.mxu0 0.0
      %981 = vmatprep.subr.mxu0 0.0
      %982 = vmatpush1.msra.mxu0 0.0
      %983 = vmatprep.subr.mxu0 0.0
      %984 = vmatpush1.msra.mxu0 0.0
      %985 = vmatprep.mubr.f32.mxu0 0.0
      %986 = vmatmul.mubr.f32.gmra.mrb[0].mxu0 %v919
      %v987 = vpop.f32.mrb[0].mxu0
      %v988 = vadd.f32 0.0, %v987
      %v989 = vpop.f32.mrb[0].mxu0
      %v990 = vadd.f32 0.0, %v989
      %991 = vdwg.mxu0
      %v992 = vadd.f32 %v890, %v988
      %v993 = vadd.f32 %v892, %v990
      %994 = vrot.lane.b32.xlu0 %v715, 16
      %v995 = vpop.permute.xlu0 %994
      %996 = vrot.lane.b32.xlu0 %v716, 16
      %v997 = vpop.permute.xlu0 %996
      %vm998 = vcmp.lt.s32.totalorder %v724, 16
      %v999 = vsel %vm998, %v995, %v997
      %v1000 = vsel %vm998, %v997, %v995
      %s1001 = scalar_lea.vmem %s1, 1
      %v1002 = vld [vmem:[%s1001] ss:$8 sm:$0x3]
      %v1004 = vlaneseq
      %v1005 = vshrl.u32 %v1004, 7
      %v1006 = vsub.s32 0, %v1005
      %v1007 = vrot.slane %v1002, %v1006
      %v1008 = vlaneseq
      %v1009 = vshrl.u32 %v1008, 7
      %v1010 = vsub.s32 1, %v1009
      %v1011 = vrot.slane %v1002, %v1010
      %v1014 = vmul.f32 %v1000, %v1007
      %v1015 = vmul.f32 %v999, %v1011
      %s1016 = scalar_lea.vmem %s2, 8
      %v1017 = vld [vmem:[%s1016] sm:$0xff]
      %v1019 = vsel %vm745, %v1017, 0
      %1021 = vmatprep.subr.mxu0 %v1015
      %1022 = vmatpush1.msra.mxu0 %v1014
      %1023 = vmatprep.subr.mxu0 0.0
      %1024 = vmatpush1.msra.mxu0 0.0
      %1025 = vmatprep.subr.mxu0 0.0
      %1026 = vmatpush1.msra.mxu0 0.0
      %1027 = vmatprep.subr.mxu0 0.0
      %1028 = vmatpush1.msra.mxu0 0.0
      %1029 = vmatprep.subr.mxu0 0.0
      %1030 = vmatpush1.msra.mxu0 0.0
      %1031 = vmatprep.subr.mxu0 0.0
      %1032 = vmatpush1.msra.mxu0 0.0
      %1033 = vmatprep.subr.mxu0 0.0
      %1034 = vmatpush1.msra.mxu0 0.0
      %1035 = vmatprep.subr.mxu0 0.0
      %1036 = vmatpush1.msra.mxu0 0.0
      %1037 = vmatprep.subr.mxu0 0.0
      %1038 = vmatpush1.msra.mxu0 0.0
      %1039 = vmatprep.subr.mxu0 0.0
      %1040 = vmatpush1.msra.mxu0 0.0
      %1041 = vmatprep.subr.mxu0 0.0
      %1042 = vmatpush1.msra.mxu0 0.0
      %1043 = vmatprep.subr.mxu0 0.0
      %1044 = vmatpush1.msra.mxu0 0.0
      %1045 = vmatprep.subr.mxu0 0.0
      %1046 = vmatpush1.msra.mxu0 0.0
      %1047 = vmatprep.subr.mxu0 0.0
      %1048 = vmatpush1.msra.mxu0 0.0
      %1049 = vmatprep.subr.mxu0 0.0
      %1050 = vmatpush1.msra.mxu0 0.0
      %1051 = vmatprep.subr.mxu0 0.0
      %1052 = vmatpush1.msra.mxu0 0.0
      %1053 = vmatprep.subr.mxu0 0.0
      %1054 = vmatpush1.msra.mxu0 0.0
      %1055 = vmatprep.subr.mxu0 0.0
      %1056 = vmatpush1.msra.mxu0 0.0
      %1057 = vmatprep.subr.mxu0 0.0
      %1058 = vmatpush1.msra.mxu0 0.0
      %1059 = vmatprep.subr.mxu0 0.0
      %1060 = vmatpush1.msra.mxu0 0.0
      %1061 = vmatprep.subr.mxu0 0.0
      %1062 = vmatpush1.msra.mxu0 0.0
      %1063 = vmatprep.subr.mxu0 0.0
      %1064 = vmatpush1.msra.mxu0 0.0
      %1065 = vmatprep.subr.mxu0 0.0
      %1066 = vmatpush1.msra.mxu0 0.0
      %1067 = vmatprep.subr.mxu0 0.0
      %1068 = vmatpush1.msra.mxu0 0.0
      %1069 = vmatprep.subr.mxu0 0.0
      %1070 = vmatpush1.msra.mxu0 0.0
      %1071 = vmatprep.subr.mxu0 0.0
      %1072 = vmatpush1.msra.mxu0 0.0
      %1073 = vmatprep.subr.mxu0 0.0
      %1074 = vmatpush1.msra.mxu0 0.0
      %1075 = vmatprep.subr.mxu0 0.0
      %1076 = vmatpush1.msra.mxu0 0.0
      %1077 = vmatprep.subr.mxu0 0.0
      %1078 = vmatpush1.msra.mxu0 0.0
      %1079 = vmatprep.subr.mxu0 0.0
      %1080 = vmatpush1.msra.mxu0 0.0
      %1081 = vmatprep.subr.mxu0 0.0
      %1082 = vmatpush1.msra.mxu0 0.0
      %1083 = vmatprep.subr.mxu0 0.0
      %1084 = vmatpush1.msra.mxu0 0.0
      %1085 = vmatprep.mubr.f32.mxu0 0.0
      %1086 = vmatmul.mubr.f32.gmra.mrb[0].mxu0 %v1019
      %v1087 = vpop.f32.mrb[0].mxu0
      %v1088 = vadd.f32 0.0, %v1087
      %v1089 = vpop.f32.mrb[0].mxu0
      %v1090 = vadd.f32 0.0, %v1089
      %1091 = vdwg.mxu0
      %v1092 = vadd.f32 %v992, %v1088
      %v1093 = vadd.f32 %v993, %v1090
      %1094 = vrot.lane.b32.xlu0 %v1000, 1
      %v1095 = vpop.permute.xlu0 %1094
      %1096 = vrot.lane.b32.xlu0 %v999, 1
      %v1097 = vpop.permute.xlu0 %1096
      %v1098 = vsel %vm725, %v1095, %v1097
      %v1099 = vsel %vm725, %v1097, %v1095
      %v1100 = vld [vmem:[%s1] ss:$8 sm:$0x3]
      %v1102 = vlaneseq
      %v1103 = vshrl.u32 %v1102, 7
      %v1104 = vsub.s32 0, %v1103
      %v1105 = vrot.slane %v1100, %v1104
      %v1106 = vlaneseq
      %v1107 = vshrl.u32 %v1106, 7
      %v1108 = vsub.s32 1, %v1107
      %v1109 = vrot.slane %v1100, %v1108
      %v1112 = vmul.f32 %v1099, %v1105
      %v1113 = vmul.f32 %v1098, %v1109
      %v1114 = vld [vmem:[%s2] sm:$0xff]
      %v1116 = vsel %vm745, %v1114, 0
      %1118 = vmatprep.subr.mxu0 %v1113
      %1119 = vmatpush1.msra.mxu0 %v1112
      %1120 = vmatprep.subr.mxu0 0.0
      %1121 = vmatpush1.msra.mxu0 0.0
      %1122 = vmatprep.subr.mxu0 0.0
      %1123 = vmatpush1.msra.mxu0 0.0
      %1124 = vmatprep.subr.mxu0 0.0
      %1125 = vmatpush1.msra.mxu0 0.0
      %1126 = vmatprep.subr.mxu0 0.0
      %1127 = vmatpush1.msra.mxu0 0.0
      %1128 = vmatprep.subr.mxu0 0.0
      %1129 = vmatpush1.msra.mxu0 0.0
      %1130 = vmatprep.subr.mxu0 0.0
      %1131 = vmatpush1.msra.mxu0 0.0
      %1132 = vmatprep.subr.mxu0 0.0
      %1133 = vmatpush1.msra.mxu0 0.0
      %1134 = vmatprep.subr.mxu0 0.0
      %1135 = vmatpush1.msra.mxu0 0.0
      %1136 = vmatprep.subr.mxu0 0.0
      %1137 = vmatpush1.msra.mxu0 0.0
      %1138 = vmatprep.subr.mxu0 0.0
      %1139 = vmatpush1.msra.mxu0 0.0
      %1140 = vmatprep.subr.mxu0 0.0
      %1141 = vmatpush1.msra.mxu0 0.0
      %1142 = vmatprep.subr.mxu0 0.0
      %1143 = vmatpush1.msra.mxu0 0.0
      %1144 = vmatprep.subr.mxu0 0.0
      %1145 = vmatpush1.msra.mxu0 0.0
      %1146 = vmatprep.subr.mxu0 0.0
      %1147 = vmatpush1.msra.mxu0 0.0
      %1148 = vmatprep.subr.mxu0 0.0
      %1149 = vmatpush1.msra.mxu0 0.0
      %1150 = vmatprep.subr.mxu0 0.0
      %1151 = vmatpush1.msra.mxu0 0.0
      %1152 = vmatprep.subr.mxu0 0.0
      %1153 = vmatpush1.msra.mxu0 0.0
      %1154 = vmatprep.subr.mxu0 0.0
      %1155 = vmatpush1.msra.mxu0 0.0
      %1156 = vmatprep.subr.mxu0 0.0
      %1157 = vmatpush1.msra.mxu0 0.0
      %1158 = vmatprep.subr.mxu0 0.0
      %1159 = vmatpush1.msra.mxu0 0.0
      %1160 = vmatprep.subr.mxu0 0.0
      %1161 = vmatpush1.msra.mxu0 0.0
      %1162 = vmatprep.subr.mxu0 0.0
      %1163 = vmatpush1.msra.mxu0 0.0
      %1164 = vmatprep.subr.mxu0 0.0
      %1165 = vmatpush1.msra.mxu0 0.0
      %1166 = vmatprep.subr.mxu0 0.0
      %1167 = vmatpush1.msra.mxu0 0.0
      %1168 = vmatprep.subr.mxu0 0.0
      %1169 = vmatpush1.msra.mxu0 0.0
      %1170 = vmatprep.subr.mxu0 0.0
      %1171 = vmatpush1.msra.mxu0 0.0
      %1172 = vmatprep.subr.mxu0 0.0
      %1173 = vmatpush1.msra.mxu0 0.0
      %1174 = vmatprep.subr.mxu0 0.0
      %1175 = vmatpush1.msra.mxu0 0.0
      %1176 = vmatprep.subr.mxu0 0.0
      %1177 = vmatpush1.msra.mxu0 0.0
      %1178 = vmatprep.subr.mxu0 0.0
      %1179 = vmatpush1.msra.mxu0 0.0
      %1180 = vmatprep.subr.mxu0 0.0
      %1181 = vmatpush1.msra.mxu0 0.0
      %1182 = vmatprep.mubr.f32.mxu0 0.0
      %1183 = vmatmul.mubr.f32.gmra.mrb[0].mxu0 %v1116
      %v1184 = vpop.f32.mrb[0].mxu0
      %v1185 = vadd.f32 0.0, %v1184
      %v1186 = vpop.f32.mrb[0].mxu0
      %v1187 = vadd.f32 0.0, %v1186
      %1188 = vdwg.mxu0
      %v1189 = vadd.f32 %v1092, %v1185
      %v1190 = vadd.f32 %v1093, %v1187
      %1191 = vrot.lane.b32.xlu0 %v1000, 127
      %v1192 = vpop.permute.xlu0 %1191
      %1193 = vrot.lane.b32.xlu0 %v999, 127
      %v1194 = vpop.permute.xlu0 %1193
      %v1195 = vsel %vm898, %v1192, %v1194
      %v1196 = vsel %vm898, %v1194, %v1192
      %s1197 = scalar_lea.vmem %s1, 2
      %v1198 = vld [vmem:[%s1197] ss:$8 sm:$0x3]
      %v1200 = vlaneseq
      %v1201 = vshrl.u32 %v1200, 7
      %v1202 = vsub.s32 0, %v1201
      %v1203 = vrot.slane %v1198, %v1202
      %v1204 = vlaneseq
      %v1205 = vshrl.u32 %v1204, 7
      %v1206 = vsub.s32 1, %v1205
      %v1207 = vrot.slane %v1198, %v1206
      %v1210 = vmul.f32 %v1195, %v1203
      %v1211 = vmul.f32 %v1196, %v1207
      %s1212 = scalar_lea.vmem %s2, 16
      %v1213 = vld [vmem:[%s1212] sm:$0xff]
      %v1215 = vsel %vm745, %v1213, 0
      %1217 = vmatprep.subr.mxu0 %v1211
      %1218 = vmatpush1.msra.mxu0 %v1210
      %1219 = vmatprep.subr.mxu0 0.0
      %1220 = vmatpush1.msra.mxu0 0.0
      %1221 = vmatprep.subr.mxu0 0.0
      %1222 = vmatpush1.msra.mxu0 0.0
      %1223 = vmatprep.subr.mxu0 0.0
      %1224 = vmatpush1.msra.mxu0 0.0
      %1225 = vmatprep.subr.mxu0 0.0
      %1226 = vmatpush1.msra.mxu0 0.0
      %1227 = vmatprep.subr.mxu0 0.0
      %1228 = vmatpush1.msra.mxu0 0.0
      %1229 = vmatprep.subr.mxu0 0.0
      %1230 = vmatpush1.msra.mxu0 0.0
      %1231 = vmatprep.subr.mxu0 0.0
      %1232 = vmatpush1.msra.mxu0 0.0
      %1233 = vmatprep.subr.mxu0 0.0
      %1234 = vmatpush1.msra.mxu0 0.0
      %1235 = vmatprep.subr.mxu0 0.0
      %1236 = vmatpush1.msra.mxu0 0.0
      %1237 = vmatprep.subr.mxu0 0.0
      %1238 = vmatpush1.msra.mxu0 0.0
      %1239 = vmatprep.subr.mxu0 0.0
      %1240 = vmatpush1.msra.mxu0 0.0
      %1241 = vmatprep.subr.mxu0 0.0
      %1242 = vmatpush1.msra.mxu0 0.0
      %1243 = vmatprep.subr.mxu0 0.0
      %1244 = vmatpush1.msra.mxu0 0.0
      %1245 = vmatprep.subr.mxu0 0.0
      %1246 = vmatpush1.msra.mxu0 0.0
      %1247 = vmatprep.subr.mxu0 0.0
      %1248 = vmatpush1.msra.mxu0 0.0
      %1249 = vmatprep.subr.mxu0 0.0
      %1250 = vmatpush1.msra.mxu0 0.0
      %1251 = vmatprep.subr.mxu0 0.0
      %1252 = vmatpush1.msra.mxu0 0.0
      %1253 = vmatprep.subr.mxu0 0.0
      %1254 = vmatpush1.msra.mxu0 0.0
      %1255 = vmatprep.subr.mxu0 0.0
      %1256 = vmatpush1.msra.mxu0 0.0
      %1257 = vmatprep.subr.mxu0 0.0
      %1258 = vmatpush1.msra.mxu0 0.0
      %1259 = vmatprep.subr.mxu0 0.0
      %1260 = vmatpush1.msra.mxu0 0.0
      %1261 = vmatprep.subr.mxu0 0.0
      %1262 = vmatpush1.msra.mxu0 0.0
      %1263 = vmatprep.subr.mxu0 0.0
      %1264 = vmatpush1.msra.mxu0 0.0
      %1265 = vmatprep.subr.mxu0 0.0
      %1266 = vmatpush1.msra.mxu0 0.0
      %1267 = vmatprep.subr.mxu0 0.0
      %1268 = vmatpush1.msra.mxu0 0.0
      %1269 = vmatprep.subr.mxu0 0.0
      %1270 = vmatpush1.msra.mxu0 0.0
      %1271 = vmatprep.subr.mxu0 0.0
      %1272 = vmatpush1.msra.mxu0 0.0
      %1273 = vmatprep.subr.mxu0 0.0
      %1274 = vmatpush1.msra.mxu0 0.0
      %1275 = vmatprep.subr.mxu0 0.0
      %1276 = vmatpush1.msra.mxu0 0.0
      %1277 = vmatprep.subr.mxu0 0.0
      %1278 = vmatpush1.msra.mxu0 0.0
      %1279 = vmatprep.subr.mxu0 0.0
      %1280 = vmatpush1.msra.mxu0 0.0
      %1281 = vmatprep.mubr.f32.mxu0 0.0
      %1282 = vmatmul.mubr.f32.gmra.mrb[0].mxu0 %v1215
      %v1283 = vpop.f32.mrb[0].mxu0
      %v1284 = vadd.f32 0.0, %v1283
      %v1285 = vpop.f32.mrb[0].mxu0
      %v1286 = vadd.f32 0.0, %v1285
      %1287 = vdwg.mxu0
      %v1288 = vadd.f32 %v1189, %v1284
      %v1289 = vadd.f32 %v1190, %v1286
      %v1290 = vadd.f32 %v1288, %v1289
      %1291 = vadd.xlane.f32.xlu0 %v1290
      %v1292 = vpop.xlane.xlu0 %1291
      %v1293 = vrcp.pop 256.0
      %v1294 = vmul.f32 %v1292, %v1293
      %v1295 = vsub.f32 %v1288, %v1294
      %v1296 = vsub.f32 %v1289, %v1294
      %v1297 = vmul.f32 %v1295, %v1295
      %v1298 = vmul.f32 %v1296, %v1296
      %v1299 = vadd.f32 %v1297, %v1298
      %1300 = vadd.xlane.f32.xlu0 %v1299
      %v1301 = vpop.xlane.xlu0 %1300
      %v1302 = vmul.f32 %v1301, %v1293
      %v1303 = vld [vmem:[%s3] sm:$0xff]
      %v1304 = vadd.f32 %v1302, 1e-05
      %v1305 = vrsqrt.pop %v1304
      %v1306 = vmul.f32 %v1303, %v1305
      %1308 = vset.pattern.permute.xlu0 0
      %1309 = vperm.xlu0 %1308, %v1306
      %v1310 = vpop.permute.xlu0 %1309
      %v1312 = vmul.f32 %v1295, %v1310
      %v1313 = vmul.f32 %v1296, %v1310
      %v1314 = vld [vmem:[%s4] sm:$0xff]
      %1316 = vset.pattern.permute.xlu0 0
      %1317 = vperm.xlu0 %1316, %v1314
      %v1318 = vpop.permute.xlu0 %1317
      %v1320 = vadd.f32 %v1312, %v1318
      %v1321 = vadd.f32 %v1313, %v1318
      %vm1322 = vcmp.ge.f32.partialorder %v1320, 0.0
      %vm1323 = vcmp.ge.f32.partialorder %v1321, 0.0
      %v1324 = vld [vmem:[%s5] sm:$0xff]
      %1326 = vset.pattern.permute.xlu0 0
      %1327 = vperm.xlu0 %1326, %v1324
      %v1328 = vpop.permute.xlu0 %1327
      %v1330 = vmul.f32 %v1328, %v1320
      %v1331 = vmul.f32 %v1328, %v1321
      %v1332 = vsel %vm1322, %v1320, %v1330
      %v1333 = vsel %vm1323, %v1321, %v1331
      %1334 = vst [vmem:[#allocation2 + $0x30] sm:$0xff] %v1332
      %1335 = vst [vmem:[#allocation2 + $0x38] sm:$0xff] %v1333
      %v1336 = vld [vmem:[#allocation2 + $0x30] sm:$0xff]
      %v1337 = vld [vmem:[#allocation2 + $0x38] sm:$0xff]
      %v1338 = vld [vmem:[#allocation2 + $0x40] sm:$0xff]
      %v1339 = vld [vmem:[#allocation2 + $0x48] sm:$0xff]
      %s1340 = scalar_lea.vmem %s6, 32
      %v1341 = vld [vmem:[%s1340] sm:$0xff]
      %1342 = vrot.lane.b32.xlu0 %v1336, 1
      %v1343 = vpop.permute.xlu0 %1342
      %1344 = vrot.lane.b32.xlu0 %v1338, 1
      %v1345 = vpop.permute.xlu0 %1344
      %1346 = vrot.lane.b32.xlu0 %v1337, 1
      %v1347 = vpop.permute.xlu0 %1346
      %1348 = vrot.lane.b32.xlu0 %v1339, 1
      %v1349 = vpop.permute.xlu0 %1348
      %v1350 = vsel %vm725, %v1343, %v1347
      %v1351 = vsel %vm725, %v1345, %v1349
      %v1352 = vsel %vm725, %v1347, %v1343
      %v1353 = vsel %vm725, %v1349, %v1345
      %s1354 = scalar_lea.vmem %s1, 17
      %v1355 = vld [vmem:[%s1354] ss:$8 sm:$0x3]
      %v1357 = vlaneseq
      %v1358 = vshrl.u32 %v1357, 7
      %v1359 = vsub.s32 0, %v1358
      %v1360 = vrot.slane %v1355, %v1359
      %v1361 = vlaneseq
      %v1362 = vshrl.u32 %v1361, 7
      %v1363 = vsub.s32 1, %v1362
      %v1364 = vrot.slane %v1355, %v1363
      %v1367 = vmul.f32 %v1352, %v1360
      %v1368 = vmul.f32 %v1350, %v1364
      %v1369 = vmul.f32 %v1353, %v1360
      %v1370 = vmul.f32 %v1351, %v1364
      %s1371 = scalar_lea.vmem %s6, 24
      %v1372 = vld [vmem:[%s1371] sm:$0xff]
      %vm1373 = vcmask 130048
      %v1375 = vsel %vm1373, %v1372, 0
      %1377 = vmatprep.subr.mxu0 %v1368
      %1378 = vmatpush1.msra.mxu0 %v1367
      %1379 = vmatprep.subr.mxu0 %v1370
      %1380 = vmatpush1.msra.mxu0 %v1369
      %1381 = vmatprep.subr.mxu0 0.0
      %1382 = vmatpush1.msra.mxu0 0.0
      %1383 = vmatprep.subr.mxu0 0.0
      %1384 = vmatpush1.msra.mxu0 0.0
      %1385 = vmatprep.subr.mxu0 0.0
      %1386 = vmatpush1.msra.mxu0 0.0
      %1387 = vmatprep.subr.mxu0 0.0
      %1388 = vmatpush1.msra.mxu0 0.0
      %1389 = vmatprep.subr.mxu0 0.0
      %1390 = vmatpush1.msra.mxu0 0.0
      %1391 = vmatprep.subr.mxu0 0.0
      %1392 = vmatpush1.msra.mxu0 0.0
      %1393 = vmatprep.subr.mxu0 0.0
      %1394 = vmatpush1.msra.mxu0 0.0
      %1395 = vmatprep.subr.mxu0 0.0
      %1396 = vmatpush1.msra.mxu0 0.0
      %1397 = vmatprep.subr.mxu0 0.0
      %1398 = vmatpush1.msra.mxu0 0.0
      %1399 = vmatprep.subr.mxu0 0.0
      %1400 = vmatpush1.msra.mxu0 0.0
      %1401 = vmatprep.subr.mxu0 0.0
      %1402 = vmatpush1.msra.mxu0 0.0
      %1403 = vmatprep.subr.mxu0 0.0
      %1404 = vmatpush1.msra.mxu0 0.0
      %1405 = vmatprep.subr.mxu0 0.0
      %1406 = vmatpush1.msra.mxu0 0.0
      %1407 = vmatprep.subr.mxu0 0.0
      %1408 = vmatpush1.msra.mxu0 0.0
      %1409 = vmatprep.subr.mxu0 0.0
      %1410 = vmatpush1.msra.mxu0 0.0
      %1411 = vmatprep.subr.mxu0 0.0
      %1412 = vmatpush1.msra.mxu0 0.0
      %1413 = vmatprep.subr.mxu0 0.0
      %1414 = vmatpush1.msra.mxu0 0.0
      %1415 = vmatprep.subr.mxu0 0.0
      %1416 = vmatpush1.msra.mxu0 0.0
      %1417 = vmatprep.subr.mxu0 0.0
      %1418 = vmatpush1.msra.mxu0 0.0
      %1419 = vmatprep.subr.mxu0 0.0
      %1420 = vmatpush1.msra.mxu0 0.0
      %1421 = vmatprep.subr.mxu0 0.0
      %1422 = vmatpush1.msra.mxu0 0.0
      %1423 = vmatprep.subr.mxu0 0.0
      %1424 = vmatpush1.msra.mxu0 0.0
      %1425 = vmatprep.subr.mxu0 0.0
      %1426 = vmatpush1.msra.mxu0 0.0
      %1427 = vmatprep.subr.mxu0 0.0
      %1428 = vmatpush1.msra.mxu0 0.0
      %1429 = vmatprep.subr.mxu0 0.0
      %1430 = vmatpush1.msra.mxu0 0.0
      %1431 = vmatprep.subr.mxu0 0.0
      %1432 = vmatpush1.msra.mxu0 0.0
      %1433 = vmatprep.subr.mxu0 0.0
      %1434 = vmatpush1.msra.mxu0 0.0
      %1435 = vmatprep.subr.mxu0 0.0
      %1436 = vmatpush1.msra.mxu0 0.0
      %1437 = vmatprep.subr.mxu0 0.0
      %1438 = vmatpush1.msra.mxu0 0.0
      %1439 = vmatprep.subr.mxu0 0.0
      %1440 = vmatpush1.msra.mxu0 0.0
      %1441 = vmatprep.mubr.f32.mxu0 0.0
      %1442 = vmatmul.mubr.f32.gmra.mrb[0].mxu0 %v1375
      %v1443 = vpop.f32.mrb[0].mxu0
      %v1444 = vadd.f32 0.0, %v1443
      %v1445 = vpop.f32.mrb[0].mxu0
      %v1446 = vadd.f32 0.0, %v1445
      %1447 = vdwg.mxu0
      %v1449 = vsel %vm1373, %v1341, 0
      %1451 = vmatprep.subr.mxu0 %v1337
      %1452 = vmatpush1.msra.mxu0 %v1336
      %1453 = vmatprep.subr.mxu0 %v1339
      %1454 = vmatpush1.msra.mxu0 %v1338
      %1455 = vmatprep.subr.mxu0 0.0
      %1456 = vmatpush1.msra.mxu0 0.0
      %1457 = vmatprep.subr.mxu0 0.0
      %1458 = vmatpush1.msra.mxu0 0.0
      %1459 = vmatprep.subr.mxu0 0.0
      %1460 = vmatpush1.msra.mxu0 0.0
      %1461 = vmatprep.subr.mxu0 0.0
      %1462 = vmatpush1.msra.mxu0 0.0
      %1463 = vmatprep.subr.mxu0 0.0
      %1464 = vmatpush1.msra.mxu0 0.0
      %1465 = vmatprep.subr.mxu0 0.0
      %1466 = vmatpush1.msra.mxu0 0.0
      %1467 = vmatprep.subr.mxu0 0.0
      %1468 = vmatpush1.msra.mxu0 0.0
      %1469 = vmatprep.subr.mxu0 0.0
      %1470 = vmatpush1.msra.mxu0 0.0
      %1471 = vmatprep.subr.mxu0 0.0
      %1472 = vmatpush1.msra.mxu0 0.0
      %1473 = vmatprep.subr.mxu0 0.0
      %1474 = vmatpush1.msra.mxu0 0.0
      %1475 = vmatprep.subr.mxu0 0.0
      %1476 = vmatpush1.msra.mxu0 0.0
      %1477 = vmatprep.subr.mxu0 0.0
      %1478 = vmatpush1.msra.mxu0 0.0
      %1479 = vmatprep.subr.mxu0 0.0
      %1480 = vmatpush1.msra.mxu0 0.0
      %1481 = vmatprep.subr.mxu0 0.0
      %1482 = vmatpush1.msra.mxu0 0.0
      %1483 = vmatprep.subr.mxu0 0.0
      %1484 = vmatpush1.msra.mxu0 0.0
      %1485 = vmatprep.subr.mxu0 0.0
      %1486 = vmatpush1.msra.mxu0 0.0
      %1487 = vmatprep.subr.mxu0 0.0
      %1488 = vmatpush1.msra.mxu0 0.0
      %1489 = vmatprep.subr.mxu0 0.0
      %1490 = vmatpush1.msra.mxu0 0.0
      %1491 = vmatprep.subr.mxu0 0.0
      %1492 = vmatpush1.msra.mxu0 0.0
      %1493 = vmatprep.subr.mxu0 0.0
      %1494 = vmatpush1.msra.mxu0 0.0
      %1495 = vmatprep.subr.mxu0 0.0
      %1496 = vmatpush1.msra.mxu0 0.0
      %1497 = vmatprep.subr.mxu0 0.0
      %1498 = vmatpush1.msra.mxu0 0.0
      %1499 = vmatprep.subr.mxu0 0.0
      %1500 = vmatpush1.msra.mxu0 0.0
      %1501 = vmatprep.subr.mxu0 0.0
      %1502 = vmatpush1.msra.mxu0 0.0
      %1503 = vmatprep.subr.mxu0 0.0
      %1504 = vmatpush1.msra.mxu0 0.0
      %1505 = vmatprep.subr.mxu0 0.0
      %1506 = vmatpush1.msra.mxu0 0.0
      %1507 = vmatprep.subr.mxu0 0.0
      %1508 = vmatpush1.msra.mxu0 0.0
      %1509 = vmatprep.subr.mxu0 0.0
      %1510 = vmatpush1.msra.mxu0 0.0
      %1511 = vmatprep.subr.mxu0 0.0
      %1512 = vmatpush1.msra.mxu0 0.0
      %1513 = vmatprep.subr.mxu0 0.0
      %1514 = vmatpush1.msra.mxu0 0.0
      %1515 = vmatprep.mubr.f32.mxu0 0.0
      %1516 = vmatmul.mubr.f32.gmra.mrb[0].mxu0 %v1449
      %v1517 = vpop.f32.mrb[0].mxu0
      %v1518 = vadd.f32 %v1444, %v1517
      %v1519 = vpop.f32.mrb[0].mxu0
      %v1520 = vadd.f32 %v1446, %v1519
      %1521 = vdwg.mxu0
      %1522 = vrot.lane.b32.xlu0 %v1336, 127
      %v1523 = vpop.permute.xlu0 %1522
      %1524 = vrot.lane.b32.xlu0 %v1338, 127
      %v1525 = vpop.permute.xlu0 %1524
      %1526 = vrot.lane.b32.xlu0 %v1337, 127
      %v1527 = vpop.permute.xlu0 %1526
      %1528 = vrot.lane.b32.xlu0 %v1339, 127
      %v1529 = vpop.permute.xlu0 %1528
      %v1530 = vsel %vm898, %v1523, %v1527
      %v1531 = vsel %vm898, %v1525, %v1529
      %v1532 = vsel %vm898, %v1527, %v1523
      %v1533 = vsel %vm898, %v1529, %v1525
      %s1534 = scalar_lea.vmem %s1, 19
      %v1535 = vld [vmem:[%s1534] ss:$8 sm:$0x3]
      %v1537 = vlaneseq
      %v1538 = vshrl.u32 %v1537, 7
      %v1539 = vsub.s32 0, %v1538
      %v1540 = vrot.slane %v1535, %v1539
      %v1541 = vlaneseq
      %v1542 = vshrl.u32 %v1541, 7
      %v1543 = vsub.s32 1, %v1542
      %v1544 = vrot.slane %v1535, %v1543
      %v1547 = vmul.f32 %v1530, %v1540
      %v1548 = vmul.f32 %v1532, %v1544
      %v1549 = vmul.f32 %v1531, %v1540
      %v1550 = vmul.f32 %v1533, %v1544
      %s1551 = scalar_lea.vmem %s6, 40
      %v1552 = vld [vmem:[%s1551] sm:$0xff]
      %v1554 = vsel %vm1373, %v1552, 0
      %1556 = vmatprep.subr.mxu0 %v1548
      %1557 = vmatpush1.msra.mxu0 %v1547
      %1558 = vmatprep.subr.mxu0 %v1550
      %1559 = vmatpush1.msra.mxu0 %v1549
      %1560 = vmatprep.subr.mxu0 0.0
      %1561 = vmatpush1.msra.mxu0 0.0
      %1562 = vmatprep.subr.mxu0 0.0
      %1563 = vmatpush1.msra.mxu0 0.0
      %1564 = vmatprep.subr.mxu0 0.0
      %1565 = vmatpush1.msra.mxu0 0.0
      %1566 = vmatprep.subr.mxu0 0.0
      %1567 = vmatpush1.msra.mxu0 0.0
      %1568 = vmatprep.subr.mxu0 0.0
      %1569 = vmatpush1.msra.mxu0 0.0
      %1570 = vmatprep.subr.mxu0 0.0
      %1571 = vmatpush1.msra.mxu0 0.0
      %1572 = vmatprep.subr.mxu0 0.0
      %1573 = vmatpush1.msra.mxu0 0.0
      %1574 = vmatprep.subr.mxu0 0.0
      %1575 = vmatpush1.msra.mxu0 0.0
      %1576 = vmatprep.subr.mxu0 0.0
      %1577 = vmatpush1.msra.mxu0 0.0
      %1578 = vmatprep.subr.mxu0 0.0
      %1579 = vmatpush1.msra.mxu0 0.0
      %1580 = vmatprep.subr.mxu0 0.0
      %1581 = vmatpush1.msra.mxu0 0.0
      %1582 = vmatprep.subr.mxu0 0.0
      %1583 = vmatpush1.msra.mxu0 0.0
      %1584 = vmatprep.subr.mxu0 0.0
      %1585 = vmatpush1.msra.mxu0 0.0
      %1586 = vmatprep.subr.mxu0 0.0
      %1587 = vmatpush1.msra.mxu0 0.0
      %1588 = vmatprep.subr.mxu0 0.0
      %1589 = vmatpush1.msra.mxu0 0.0
      %1590 = vmatprep.subr.mxu0 0.0
      %1591 = vmatpush1.msra.mxu0 0.0
      %1592 = vmatprep.subr.mxu0 0.0
      %1593 = vmatpush1.msra.mxu0 0.0
      %1594 = vmatprep.subr.mxu0 0.0
      %1595 = vmatpush1.msra.mxu0 0.0
      %1596 = vmatprep.subr.mxu0 0.0
      %1597 = vmatpush1.msra.mxu0 0.0
      %1598 = vmatprep.subr.mxu0 0.0
      %1599 = vmatpush1.msra.mxu0 0.0
      %1600 = vmatprep.subr.mxu0 0.0
      %1601 = vmatpush1.msra.mxu0 0.0
      %1602 = vmatprep.subr.mxu0 0.0
      %1603 = vmatpush1.msra.mxu0 0.0
      %1604 = vmatprep.subr.mxu0 0.0
      %1605 = vmatpush1.msra.mxu0 0.0
      %1606 = vmatprep.subr.mxu0 0.0
      %1607 = vmatpush1.msra.mxu0 0.0
      %1608 = vmatprep.subr.mxu0 0.0
      %1609 = vmatpush1.msra.mxu0 0.0
      %1610 = vmatprep.subr.mxu0 0.0
      %1611 = vmatpush1.msra.mxu0 0.0
      %1612 = vmatprep.subr.mxu0 0.0
      %1613 = vmatpush1.msra.mxu0 0.0
      %1614 = vmatprep.subr.mxu0 0.0
      %1615 = vmatpush1.msra.mxu0 0.0
      %1616 = vmatprep.subr.mxu0 0.0
      %1617 = vmatpush1.msra.mxu0 0.0
      %1618 = vmatprep.subr.mxu0 0.0
      %1619 = vmatpush1.msra.mxu0 0.0
      %1620 = vmatprep.mubr.f32.mxu0 0.0
      %1621 = vmatmul.mubr.f32.gmra.mrb[0].mxu0 %v1554
      %v1622 = vpop.f32.mrb[0].mxu0
      %v1623 = vadd.f32 0.0, %v1622
      %v1624 = vpop.f32.mrb[0].mxu0
      %v1625 = vadd.f32 0.0, %v1624
      %1626 = vdwg.mxu0
      %v1627 = vadd.f32 %v1518, %v1623
      %v1628 = vadd.f32 %v1520, %v1625
      %1629 = vrot.lane.b32.xlu0 %v1336, 32
      %v1630 = vpop.permute.xlu0 %1629
      %1631 = vrot.lane.b32.xlu0 %v1338, 32
      %v1632 = vpop.permute.xlu0 %1631
      %1633 = vrot.lane.b32.xlu0 %v1337, 32
      %v1634 = vpop.permute.xlu0 %1633
      %1635 = vrot.lane.b32.xlu0 %v1339, 32
      %v1636 = vpop.permute.xlu0 %1635
      %vm1637 = vcmp.lt.s32.totalorder %v724, 32
      %v1638 = vsel %vm1637, %v1630, %v1634
      %v1639 = vsel %vm1637, %v1632, %v1636
      %v1640 = vsel %vm1637, %v1634, %v1630
      %v1641 = vsel %vm1637, %v1636, %v1632
      %s1642 = scalar_lea.vmem %s1, 7
      %v1643 = vld [vmem:[%s1642] ss:$8 sm:$0x3]
      %v1645 = vlaneseq
      %v1646 = vshrl.u32 %v1645, 7
      %v1647 = vsub.s32 0, %v1646
      %v1648 = vrot.slane %v1643, %v1647
      %v1649 = vlaneseq
      %v1650 = vshrl.u32 %v1649, 7
      %v1651 = vsub.s32 1, %v1650
      %v1652 = vrot.slane %v1643, %v1651
      %v1655 = vmul.f32 %v1640, %v1648
      %v1656 = vmul.f32 %v1638, %v1652
      %v1657 = vmul.f32 %v1641, %v1648
      %v1658 = vmul.f32 %v1639, %v1652
      %s1659 = scalar_lea.vmem %s6, 8
      %v1660 = vld [vmem:[%s1659] sm:$0xff]
      %v1662 = vsel %vm1373, %v1660, 0
      %1664 = vmatprep.subr.mxu0 %v1656
      %1665 = vmatpush1.msra.mxu0 %v1655
      %1666 = vmatprep.subr.mxu0 %v1658
      %1667 = vmatpush1.msra.mxu0 %v1657
      %1668 = vmatprep.subr.mxu0 0.0
      %1669 = vmatpush1.msra.mxu0 0.0
      %1670 = vmatprep.subr.mxu0 0.0
      %1671 = vmatpush1.msra.mxu0 0.0
      %1672 = vmatprep.subr.mxu0 0.0
      %1673 = vmatpush1.msra.mxu0 0.0
      %1674 = vmatprep.subr.mxu0 0.0
      %1675 = vmatpush1.msra.mxu0 0.0
      %1676 = vmatprep.subr.mxu0 0.0
      %1677 = vmatpush1.msra.mxu0 0.0
      %1678 = vmatprep.subr.mxu0 0.0
      %1679 = vmatpush1.msra.mxu0 0.0
      %1680 = vmatprep.subr.mxu0 0.0
      %1681 = vmatpush1.msra.mxu0 0.0
      %1682 = vmatprep.subr.mxu0 0.0
      %1683 = vmatpush1.msra.mxu0 0.0
      %1684 = vmatprep.subr.mxu0 0.0
      %1685 = vmatpush1.msra.mxu0 0.0
      %1686 = vmatprep.subr.mxu0 0.0
      %1687 = vmatpush1.msra.mxu0 0.0
      %1688 = vmatprep.subr.mxu0 0.0
      %1689 = vmatpush1.msra.mxu0 0.0
      %1690 = vmatprep.subr.mxu0 0.0
      %1691 = vmatpush1.msra.mxu0 0.0
      %1692 = vmatprep.subr.mxu0 0.0
      %1693 = vmatpush1.msra.mxu0 0.0
      %1694 = vmatprep.subr.mxu0 0.0
      %1695 = vmatpush1.msra.mxu0 0.0
      %1696 = vmatprep.subr.mxu0 0.0
      %1697 = vmatpush1.msra.mxu0 0.0
      %1698 = vmatprep.subr.mxu0 0.0
      %1699 = vmatpush1.msra.mxu0 0.0
      %1700 = vmatprep.subr.mxu0 0.0
      %1701 = vmatpush1.msra.mxu0 0.0
      %1702 = vmatprep.subr.mxu0 0.0
      %1703 = vmatpush1.msra.mxu0 0.0
      %1704 = vmatprep.subr.mxu0 0.0
      %1705 = vmatpush1.msra.mxu0 0.0
      %1706 = vmatprep.subr.mxu0 0.0
      %1707 = vmatpush1.msra.mxu0 0.0
      %1708 = vmatprep.subr.mxu0 0.0
      %1709 = vmatpush1.msra.mxu0 0.0
      %1710 = vmatprep.subr.mxu0 0.0
      %1711 = vmatpush1.msra.mxu0 0.0
      %1712 = vmatprep.subr.mxu0 0.0
      %1713 = vmatpush1.msra.mxu0 0.0
      %1714 = vmatprep.subr.mxu0 0.0
      %1715 = vmatpush1.msra.mxu0 0.0
      %1716 = vmatprep.subr.mxu0 0.0
      %1717 = vmatpush1.msra.mxu0 0.0
      %1718 = vmatprep.subr.mxu0 0.0
      %1719 = vmatpush1.msra.mxu0 0.0
      %1720 = vmatprep.subr.mxu0 0.0
      %1721 = vmatpush1.msra.mxu0 0.0
      %1722 = vmatprep.subr.mxu0 0.0
      %1723 = vmatpush1.msra.mxu0 0.0
      %1724 = vmatprep.subr.mxu0 0.0
      %1725 = vmatpush1.msra.mxu0 0.0
      %1726 = vmatprep.subr.mxu0 0.0
      %1727 = vmatpush1.msra.mxu0 0.0
      %1728 = vmatprep.mubr.f32.mxu0 0.0
      %1729 = vmatmul.mubr.f32.gmra.mrb[0].mxu0 %v1662
      %v1730 = vpop.f32.mrb[0].mxu0
      %v1731 = vadd.f32 0.0, %v1730
      %v1732 = vpop.f32.mrb[0].mxu0
      %v1733 = vadd.f32 0.0, %v1732
      %1734 = vdwg.mxu0
      %v1735 = vadd.f32 %v1627, %v1731
      %v1736 = vadd.f32 %v1628, %v1733
      %1737 = vrot.lane.b32.xlu0 %v1640, 1
      %v1738 = vpop.permute.xlu0 %1737
      %1739 = vrot.lane.b32.xlu0 %v1641, 1
      %v1740 = vpop.permute.xlu0 %1739
      %1741 = vrot.lane.b32.xlu0 %v1638, 1
      %v1742 = vpop.permute.xlu0 %1741
      %1743 = vrot.lane.b32.xlu0 %v1639, 1
      %v1744 = vpop.permute.xlu0 %1743
      %v1745 = vsel %vm725, %v1738, %v1742
      %v1746 = vsel %vm725, %v1740, %v1744
      %v1747 = vsel %vm725, %v1742, %v1738
      %v1748 = vsel %vm725, %v1744, %v1740
      %s1749 = scalar_lea.vmem %s1, 6
      %v1750 = vld [vmem:[%s1749] ss:$8 sm:$0x3]
      %v1752 = vlaneseq
      %v1753 = vshrl.u32 %v1752, 7
      %v1754 = vsub.s32 0, %v1753
      %v1755 = vrot.slane %v1750, %v1754
      %v1756 = vlaneseq
      %v1757 = vshrl.u32 %v1756, 7
      %v1758 = vsub.s32 1, %v1757
      %v1759 = vrot.slane %v1750, %v1758
      %v1762 = vmul.f32 %v1747, %v1755
      %v1763 = vmul.f32 %v1745, %v1759
      %v1764 = vmul.f32 %v1748, %v1755
      %v1765 = vmul.f32 %v1746, %v1759
      %v1766 = vld [vmem:[%s6] sm:$0xff]
      %v1768 = vsel %vm1373, %v1766, 0
      %1770 = vmatprep.subr.mxu0 %v1763
      %1771 = vmatpush1.msra.mxu0 %v1762
      %1772 = vmatprep.subr.mxu0 %v1765
      %1773 = vmatpush1.msra.mxu0 %v1764
      %1774 = vmatprep.subr.mxu0 0.0
      %1775 = vmatpush1.msra.mxu0 0.0
      %1776 = vmatprep.subr.mxu0 0.0
      %1777 = vmatpush1.msra.mxu0 0.0
      %1778 = vmatprep.subr.mxu0 0.0
      %1779 = vmatpush1.msra.mxu0 0.0
      %1780 = vmatprep.subr.mxu0 0.0
      %1781 = vmatpush1.msra.mxu0 0.0
      %1782 = vmatprep.subr.mxu0 0.0
      %1783 = vmatpush1.msra.mxu0 0.0
      %1784 = vmatprep.subr.mxu0 0.0
      %1785 = vmatpush1.msra.mxu0 0.0
      %1786 = vmatprep.subr.mxu0 0.0
      %1787 = vmatpush1.msra.mxu0 0.0
      %1788 = vmatprep.subr.mxu0 0.0
      %1789 = vmatpush1.msra.mxu0 0.0
      %1790 = vmatprep.subr.mxu0 0.0
      %1791 = vmatpush1.msra.mxu0 0.0
      %1792 = vmatprep.subr.mxu0 0.0
      %1793 = vmatpush1.msra.mxu0 0.0
      %1794 = vmatprep.subr.mxu0 0.0
      %1795 = vmatpush1.msra.mxu0 0.0
      %1796 = vmatprep.subr.mxu0 0.0
      %1797 = vmatpush1.msra.mxu0 0.0
      %1798 = vmatprep.subr.mxu0 0.0
      %1799 = vmatpush1.msra.mxu0 0.0
      %1800 = vmatprep.subr.mxu0 0.0
      %1801 = vmatpush1.msra.mxu0 0.0
      %1802 = vmatprep.subr.mxu0 0.0
      %1803 = vmatpush1.msra.mxu0 0.0
      %1804 = vmatprep.subr.mxu0 0.0
      %1805 = vmatpush1.msra.mxu0 0.0
      %1806 = vmatprep.subr.mxu0 0.0
      %1807 = vmatpush1.msra.mxu0 0.0
      %1808 = vmatprep.subr.mxu0 0.0
      %1809 = vmatpush1.msra.mxu0 0.0
      %1810 = vmatprep.subr.mxu0 0.0
      %1811 = vmatpush1.msra.mxu0 0.0
      %1812 = vmatprep.subr.mxu0 0.0
      %1813 = vmatpush1.msra.mxu0 0.0
      %1814 = vmatprep.subr.mxu0 0.0
      %1815 = vmatpush1.msra.mxu0 0.0
      %1816 = vmatprep.subr.mxu0 0.0
      %1817 = vmatpush1.msra.mxu0 0.0
      %1818 = vmatprep.subr.mxu0 0.0
      %1819 = vmatpush1.msra.mxu0 0.0
      %1820 = vmatprep.subr.mxu0 0.0
      %1821 = vmatpush1.msra.mxu0 0.0
      %1822 = vmatprep.subr.mxu0 0.0
      %1823 = vmatpush1.msra.mxu0 0.0
      %1824 = vmatprep.subr.mxu0 0.0
      %1825 = vmatpush1.msra.mxu0 0.0
      %1826 = vmatprep.subr.mxu0 0.0
      %1827 = vmatpush1.msra.mxu0 0.0
      %1828 = vmatprep.subr.mxu0 0.0
      %1829 = vmatpush1.msra.mxu0 0.0
      %1830 = vmatprep.subr.mxu0 0.0
      %1831 = vmatpush1.msra.mxu0 0.0
      %1832 = vmatprep.subr.mxu0 0.0
      %1833 = vmatpush1.msra.mxu0 0.0
      %1834 = vmatprep.mubr.f32.mxu0 0.0
      %1835 = vmatmul.mubr.f32.gmra.mrb[0].mxu0 %v1768
      %v1836 = vpop.f32.mrb[0].mxu0
      %v1837 = vadd.f32 0.0, %v1836
      %v1838 = vpop.f32.mrb[0].mxu0
      %v1839 = vadd.f32 0.0, %v1838
      %1840 = vdwg.mxu0
      %v1841 = vadd.f32 %v1735, %v1837
      %v1842 = vadd.f32 %v1736, %v1839
      %1843 = vrot.lane.b32.xlu0 %v1640, 127
      %v1844 = vpop.permute.xlu0 %1843
      %1845 = vrot.lane.b32.xlu0 %v1641, 127
      %v1846 = vpop.permute.xlu0 %1845
      %1847 = vrot.lane.b32.xlu0 %v1638, 127
      %v1848 = vpop.permute.xlu0 %1847
      %1849 = vrot.lane.b32.xlu0 %v1639, 127
      %v1850 = vpop.permute.xlu0 %1849
      %v1851 = vsel %vm898, %v1844, %v1848
      %v1852 = vsel %vm898, %v1846, %v1850
      %v1853 = vsel %vm898, %v1848, %v1844
      %v1854 = vsel %vm898, %v1850, %v1846
      %s1855 = scalar_lea.vmem %s1, 16
      %v1856 = vld [vmem:[%s1855] ss:$8 sm:$0x3]
      %v1858 = vlaneseq
      %v1859 = vshrl.u32 %v1858, 7
      %v1860 = vsub.s32 0, %v1859
      %v1861 = vrot.slane %v1856, %v1860
      %v1862 = vlaneseq
      %v1863 = vshrl.u32 %v1862, 7
      %v1864 = vsub.s32 1, %v1863
      %v1865 = vrot.slane %v1856, %v1864
      %v1868 = vmul.f32 %v1851, %v1861
      %v1869 = vmul.f32 %v1853, %v1865
      %v1870 = vmul.f32 %v1852, %v1861
      %v1871 = vmul.f32 %v1854, %v1865
      %s1872 = scalar_lea.vmem %s6, 16
      %v1873 = vld [vmem:[%s1872] sm:$0xff]
      %v1875 = vsel %vm1373, %v1873, 0
      %1877 = vmatprep.subr.mxu0 %v1869
      %1878 = vmatpush1.msra.mxu0 %v1868
      %1879 = vmatprep.subr.mxu0 %v1871
      %1880 = vmatpush1.msra.mxu0 %v1870
      %1881 = vmatprep.subr.mxu0 0.0
      %1882 = vmatpush1.msra.mxu0 0.0
      %1883 = vmatprep.subr.mxu0 0.0
      %1884 = vmatpush1.msra.mxu0 0.0
      %1885 = vmatprep.subr.mxu0 0.0
      %1886 = vmatpush1.msra.mxu0 0.0
      %1887 = vmatprep.subr.mxu0 0.0
      %1888 = vmatpush1.msra.mxu0 0.0
      %1889 = vmatprep.subr.mxu0 0.0
      %1890 = vmatpush1.msra.mxu0 0.0
      %1891 = vmatprep.subr.mxu0 0.0
      %1892 = vmatpush1.msra.mxu0 0.0
      %1893 = vmatprep.subr.mxu0 0.0
      %1894 = vmatpush1.msra.mxu0 0.0
      %1895 = vmatprep.subr.mxu0 0.0
      %1896 = vmatpush1.msra.mxu0 0.0
      %1897 = vmatprep.subr.mxu0 0.0
      %1898 = vmatpush1.msra.mxu0 0.0
      %1899 = vmatprep.subr.mxu0 0.0
      %1900 = vmatpush1.msra.mxu0 0.0
      %1901 = vmatprep.subr.mxu0 0.0
      %1902 = vmatpush1.msra.mxu0 0.0
      %1903 = vmatprep.subr.mxu0 0.0
      %1904 = vmatpush1.msra.mxu0 0.0
      %1905 = vmatprep.subr.mxu0 0.0
      %1906 = vmatpush1.msra.mxu0 0.0
      %1907 = vmatprep.subr.mxu0 0.0
      %1908 = vmatpush1.msra.mxu0 0.0
      %1909 = vmatprep.subr.mxu0 0.0
      %1910 = vmatpush1.msra.mxu0 0.0
      %1911 = vmatprep.subr.mxu0 0.0
      %1912 = vmatpush1.msra.mxu0 0.0
      %1913 = vmatprep.subr.mxu0 0.0
      %1914 = vmatpush1.msra.mxu0 0.0
      %1915 = vmatprep.subr.mxu0 0.0
      %1916 = vmatpush1.msra.mxu0 0.0
      %1917 = vmatprep.subr.mxu0 0.0
      %1918 = vmatpush1.msra.mxu0 0.0
      %1919 = vmatprep.subr.mxu0 0.0
      %1920 = vmatpush1.msra.mxu0 0.0
      %1921 = vmatprep.subr.mxu0 0.0
      %1922 = vmatpush1.msra.mxu0 0.0
      %1923 = vmatprep.subr.mxu0 0.0
      %1924 = vmatpush1.msra.mxu0 0.0
      %1925 = vmatprep.subr.mxu0 0.0
      %1926 = vmatpush1.msra.mxu0 0.0
      %1927 = vmatprep.subr.mxu0 0.0
      %1928 = vmatpush1.msra.mxu0 0.0
      %1929 = vmatprep.subr.mxu0 0.0
      %1930 = vmatpush1.msra.mxu0 0.0
      %1931 = vmatprep.subr.mxu0 0.0
      %1932 = vmatpush1.msra.mxu0 0.0
      %1933 = vmatprep.subr.mxu0 0.0
      %1934 = vmatpush1.msra.mxu0 0.0
      %1935 = vmatprep.subr.mxu0 0.0
      %1936 = vmatpush1.msra.mxu0 0.0
      %1937 = vmatprep.subr.mxu0 0.0
      %1938 = vmatpush1.msra.mxu0 0.0
      %1939 = vmatprep.subr.mxu0 0.0
      %1940 = vmatpush1.msra.mxu0 0.0
      %1941 = vmatprep.mubr.f32.mxu0 0.0
      %1942 = vmatmul.mubr.f32.gmra.mrb[0].mxu0 %v1875
      %v1943 = vpop.f32.mrb[0].mxu0
      %v1944 = vadd.f32 0.0, %v1943
      %v1945 = vpop.f32.mrb[0].mxu0
      %v1946 = vadd.f32 0.0, %v1945
      %1947 = vdwg.mxu0
      %v1948 = vadd.f32 %v1841, %v1944
      %v1949 = vadd.f32 %v1842, %v1946
      %v1950 = vadd.f32 %v1948, %v1949
      %1951 = vadd.xlane.f32.xlu0 %v1950
      %v1952 = vpop.xlane.xlu0 %1951
      %v1953 = vmul.f32 %v1952, %v1293
      %v1954 = vsub.f32 %v1948, %v1953
      %v1955 = vsub.f32 %v1949, %v1953
      %v1956 = vmul.f32 %v1954, %v1954
      %v1957 = vmul.f32 %v1955, %v1955
      %v1958 = vadd.f32 %v1956, %v1957
      %1959 = vadd.xlane.f32.xlu0 %v1958
      %v1960 = vpop.xlane.xlu0 %1959
      %v1961 = vmul.f32 %v1960, %v1293
      %v1962 = vld [vmem:[%s7] sm:$0xff]
      %v1963 = vadd.f32 %v1961, 1e-05
      %v1964 = vrsqrt.pop %v1963
      %v1965 = vmul.f32 %v1962, %v1964
      %1967 = vset.pattern.permute.xlu0 0
      %1968 = vperm.xlu0 %1967, %v1965
      %v1969 = vpop.permute.xlu0 %1968
      %v1971 = vmul.f32 %v1954, %v1969
      %v1972 = vmul.f32 %v1955, %v1969
      %v1973 = vld [vmem:[%s8] sm:$0xff]
      %1975 = vset.pattern.permute.xlu0 0
      %1976 = vperm.xlu0 %1975, %v1973
      %v1977 = vpop.permute.xlu0 %1976
      %v1979 = vadd.f32 %v1971, %v1977
      %v1980 = vadd.f32 %v1972, %v1977
      %vm1981 = vcmp.ge.f32.partialorder %v1979, 0.0
      %vm1982 = vcmp.ge.f32.partialorder %v1980, 0.0
      %v1983 = vld [vmem:[%s9] sm:$0xff]
      %1985 = vset.pattern.permute.xlu0 0
      %1986 = vperm.xlu0 %1985, %v1983
      %v1987 = vpop.permute.xlu0 %1986
      %v1989 = vmul.f32 %v1987, %v1979
      %v1990 = vmul.f32 %v1987, %v1980
      %v1991 = vsel %vm1981, %v1979, %v1989
      %v1992 = vsel %vm1982, %v1980, %v1990
      %1993 = vst [vmem:[#allocation2 + $0x20] sm:$0xff] %v1991
      %1994 = vst [vmem:[#allocation2 + $0x28] sm:$0xff] %v1992
      %v1995 = vld [vmem:[#allocation2 + $0x20] sm:$0xff]
      %v1996 = vld [vmem:[#allocation2 + $0x28] sm:$0xff]
      %v1997 = vld [vmem:[#allocation2 + $0x30] sm:$0xff]
      %v1998 = vld [vmem:[#allocation2 + $0x38] sm:$0xff]
      %v1999 = vld [vmem:[#allocation2 + $0x40] sm:$0xff]
      %v2000 = vld [vmem:[#allocation2 + $0x48] sm:$0xff]
      %s2001 = scalar_lea.vmem %s10, 32
      %v2002 = vld [vmem:[%s2001] sm:$0xff]
      %2003 = vrot.lane.b32.xlu0 %v1995, 1
      %v2004 = vpop.permute.xlu0 %2003
      %2005 = vrot.lane.b32.xlu0 %v1997, 1
      %v2006 = vpop.permute.xlu0 %2005
      %2007 = vrot.lane.b32.xlu0 %v1999, 1
      %v2008 = vpop.permute.xlu0 %2007
      %2009 = vrot.lane.b32.xlu0 %v1996, 1
      %v2010 = vpop.permute.xlu0 %2009
      %2011 = vrot.lane.b32.xlu0 %v1998, 1
      %v2012 = vpop.permute.xlu0 %2011
      %2013 = vrot.lane.b32.xlu0 %v2000, 1
      %v2014 = vpop.permute.xlu0 %2013
      %v2015 = vsel %vm725, %v2004, %v2010
      %v2016 = vsel %vm725, %v2006, %v2012
      %v2017 = vsel %vm725, %v2008, %v2014
      %v2018 = vsel %vm725, %v2010, %v2004
      %v2019 = vsel %vm725, %v2012, %v2006
      %v2020 = vsel %vm725, %v2014, %v2008
      %s2021 = scalar_lea.vmem %s1, 23
      %v2022 = vld [vmem:[%s2021] ss:$8 sm:$0x3]
      %v2024 = vlaneseq
      %v2025 = vshrl.u32 %v2024, 7
      %v2026 = vsub.s32 0, %v2025
      %v2027 = vrot.slane %v2022, %v2026
      %v2028 = vlaneseq
      %v2029 = vshrl.u32 %v2028, 7
      %v2030 = vsub.s32 1, %v2029
      %v2031 = vrot.slane %v2022, %v2030
      %v2034 = vmul.f32 %v2018, %v2027
      %v2035 = vmul.f32 %v2015, %v2031
      %v2036 = vmul.f32 %v2019, %v2027
      %v2037 = vmul.f32 %v2016, %v2031
      %v2038 = vmul.f32 %v2020, %v2027
      %v2039 = vmul.f32 %v2017, %v2031
      %s2040 = scalar_lea.vmem %s10, 24
      %v2041 = vld [vmem:[%s2040] sm:$0xff]
      %vm2042 = vcmask 195584
      %v2044 = vsel %vm2042, %v2041, 0
      %2046 = vmatprep.subr.mxu0 %v2035
      %2047 = vmatpush1.msra.mxu0 %v2034
      %2048 = vmatprep.subr.mxu0 %v2037
      %2049 = vmatpush1.msra.mxu0 %v2036
      %2050 = vmatprep.subr.mxu0 %v2039
      %2051 = vmatpush1.msra.mxu0 %v2038
      %2052 = vmatprep.subr.mxu0 0.0
      %2053 = vmatpush1.msra.mxu0 0.0
      %2054 = vmatprep.subr.mxu0 0.0
      %2055 = vmatpush1.msra.mxu0 0.0
      %2056 = vmatprep.subr.mxu0 0.0
      %2057 = vmatpush1.msra.mxu0 0.0
      %2058 = vmatprep.subr.mxu0 0.0
      %2059 = vmatpush1.msra.mxu0 0.0
      %2060 = vmatprep.subr.mxu0 0.0
      %2061 = vmatpush1.msra.mxu0 0.0
      %2062 = vmatprep.subr.mxu0 0.0
      %2063 = vmatpush1.msra.mxu0 0.0
      %2064 = vmatprep.subr.mxu0 0.0
      %2065 = vmatpush1.msra.mxu0 0.0
      %2066 = vmatprep.subr.mxu0 0.0
      %2067 = vmatpush1.msra.mxu0 0.0
      %2068 = vmatprep.subr.mxu0 0.0
      %2069 = vmatpush1.msra.mxu0 0.0
      %2070 = vmatprep.subr.mxu0 0.0
      %2071 = vmatpush1.msra.mxu0 0.0
      %2072 = vmatprep.subr.mxu0 0.0
      %2073 = vmatpush1.msra.mxu0 0.0
      %2074 = vmatprep.subr.mxu0 0.0
      %2075 = vmatpush1.msra.mxu0 0.0
      %2076 = vmatprep.subr.mxu0 0.0
      %2077 = vmatpush1.msra.mxu0 0.0
      %2078 = vmatprep.subr.mxu0 0.0
      %2079 = vmatpush1.msra.mxu0 0.0
      %2080 = vmatprep.subr.mxu0 0.0
      %2081 = vmatpush1.msra.mxu0 0.0
      %2082 = vmatprep.subr.mxu0 0.0
      %2083 = vmatpush1.msra.mxu0 0.0
      %2084 = vmatprep.subr.mxu0 0.0
      %2085 = vmatpush1.msra.mxu0 0.0
      %2086 = vmatprep.subr.mxu0 0.0
      %2087 = vmatpush1.msra.mxu0 0.0
      %2088 = vmatprep.subr.mxu0 0.0
      %2089 = vmatpush1.msra.mxu0 0.0
      %2090 = vmatprep.subr.mxu0 0.0
      %2091 = vmatpush1.msra.mxu0 0.0
      %2092 = vmatprep.subr.mxu0 0.0
      %2093 = vmatpush1.msra.mxu0 0.0
      %2094 = vmatprep.subr.mxu0 0.0
      %2095 = vmatpush1.msra.mxu0 0.0
      %2096 = vmatprep.subr.mxu0 0.0
      %2097 = vmatpush1.msra.mxu0 0.0
      %2098 = vmatprep.subr.mxu0 0.0
      %2099 = vmatpush1.msra.mxu0 0.0
      %2100 = vmatprep.subr.mxu0 0.0
      %2101 = vmatpush1.msra.mxu0 0.0
      %2102 = vmatprep.subr.mxu0 0.0
      %2103 = vmatpush1.msra.mxu0 0.0
      %2104 = vmatprep.subr.mxu0 0.0
      %2105 = vmatpush1.msra.mxu0 0.0
      %2106 = vmatprep.subr.mxu0 0.0
      %2107 = vmatpush1.msra.mxu0 0.0
      %2108 = vmatprep.subr.mxu0 0.0
      %2109 = vmatpush1.msra.mxu0 0.0
      %2110 = vmatprep.mubr.f32.mxu0 0.0
      %2111 = vmatmul.mubr.f32.gmra.mrb[0].mxu0 %v2044
      %v2112 = vpop.f32.mrb[0].mxu0
      %v2113 = vadd.f32 0.0, %v2112
      %v2114 = vpop.f32.mrb[0].mxu0
      %v2115 = vadd.f32 0.0, %v2114
      %2116 = vdwg.mxu0
      %v2118 = vsel %vm2042, %v2002, 0
      %2120 = vmatprep.subr.mxu0 %v1996
      %2121 = vmatpush1.msra.mxu0 %v1995
      %2122 = vmatprep.subr.mxu0 %v1998
      %2123 = vmatpush1.msra.mxu0 %v1997
      %2124 = vmatprep.subr.mxu0 %v2000
      %2125 = vmatpush1.msra.mxu0 %v1999
      %2126 = vmatprep.subr.mxu0 0.0
      %2127 = vmatpush1.msra.mxu0 0.0
      %2128 = vmatprep.subr.mxu0 0.0
      %2129 = vmatpush1.msra.mxu0 0.0
      %2130 = vmatprep.subr.mxu0 0.0
      %2131 = vmatpush1.msra.mxu0 0.0
      %2132 = vmatprep.subr.mxu0 0.0
      %2133 = vmatpush1.msra.mxu0 0.0
      %2134 = vmatprep.subr.mxu0 0.0
      %2135 = vmatpush1.msra.mxu0 0.0
      %2136 = vmatprep.subr.mxu0 0.0
      %2137 = vmatpush1.msra.mxu0 0.0
      %2138 = vmatprep.subr.mxu0 0.0
      %2139 = vmatpush1.msra.mxu0 0.0
      %2140 = vmatprep.subr.mxu0 0.0
      %2141 = vmatpush1.msra.mxu0 0.0
      %2142 = vmatprep.subr.mxu0 0.0
      %2143 = vmatpush1.msra.mxu0 0.0
      %2144 = vmatprep.subr.mxu0 0.0
      %2145 = vmatpush1.msra.mxu0 0.0
      %2146 = vmatprep.subr.mxu0 0.0
      %2147 = vmatpush1.msra.mxu0 0.0
      %2148 = vmatprep.subr.mxu0 0.0
      %2149 = vmatpush1.msra.mxu0 0.0
      %2150 = vmatprep.subr.mxu0 0.0
      %2151 = vmatpush1.msra.mxu0 0.0
      %2152 = vmatprep.subr.mxu0 0.0
      %2153 = vmatpush1.msra.mxu0 0.0
      %2154 = vmatprep.subr.mxu0 0.0
      %2155 = vmatpush1.msra.mxu0 0.0
      %2156 = vmatprep.subr.mxu0 0.0
      %2157 = vmatpush1.msra.mxu0 0.0
      %2158 = vmatprep.subr.mxu0 0.0
      %2159 = vmatpush1.msra.mxu0 0.0
      %2160 = vmatprep.subr.mxu0 0.0
      %2161 = vmatpush1.msra.mxu0 0.0
      %2162 = vmatprep.subr.mxu0 0.0
      %2163 = vmatpush1.msra.mxu0 0.0
      %2164 = vmatprep.subr.mxu0 0.0
      %2165 = vmatpush1.msra.mxu0 0.0
      %2166 = vmatprep.subr.mxu0 0.0
      %2167 = vmatpush1.msra.mxu0 0.0
      %2168 = vmatprep.subr.mxu0 0.0
      %2169 = vmatpush1.msra.mxu0 0.0
      %2170 = vmatprep.subr.mxu0 0.0
      %2171 = vmatpush1.msra.mxu0 0.0
      %2172 = vmatprep.subr.mxu0 0.0
      %2173 = vmatpush1.msra.mxu0 0.0
      %2174 = vmatprep.subr.mxu0 0.0
      %2175 = vmatpush1.msra.mxu0 0.0
      %2176 = vmatprep.subr.mxu0 0.0
      %2177 = vmatpush1.msra.mxu0 0.0
      %2178 = vmatprep.subr.mxu0 0.0
      %2179 = vmatpush1.msra.mxu0 0.0
      %2180 = vmatprep.subr.mxu0 0.0
      %2181 = vmatpush1.msra.mxu0 0.0
      %2182 = vmatprep.subr.mxu0 0.0
      %2183 = vmatpush1.msra.mxu0 0.0
      %2184 = vmatprep.mubr.f32.mxu0 0.0
      %2185 = vmatmul.mubr.f32.gmra.mrb[0].mxu0 %v2118
      %v2186 = vpop.f32.mrb[0].mxu0
      %v2187 = vadd.f32 %v2113, %v2186
      %v2188 = vpop.f32.mrb[0].mxu0
      %v2189 = vadd.f32 %v2115, %v2188
      %2190 = vdwg.mxu0
      %2191 = vrot.lane.b32.xlu0 %v1995, 127
      %v2192 = vpop.permute.xlu0 %2191
      %2193 = vrot.lane.b32.xlu0 %v1997, 127
      %v2194 = vpop.permute.xlu0 %2193
      %2195 = vrot.lane.b32.xlu0 %v1999, 127
      %v2196 = vpop.permute.xlu0 %2195
      %2197 = vrot.lane.b32.xlu0 %v1996, 127
      %v2198 = vpop.permute.xlu0 %2197
      %2199 = vrot.lane.b32.xlu0 %v1998, 127
      %v2200 = vpop.permute.xlu0 %2199
      %2201 = vrot.lane.b32.xlu0 %v2000, 127
      %v2202 = vpop.permute.xlu0 %2201
      %v2203 = vsel %vm898, %v2192, %v2198
      %v2204 = vsel %vm898, %v2194, %v2200
      %v2205 = vsel %vm898, %v2196, %v2202
      %v2206 = vsel %vm898, %v2198, %v2192
      %v2207 = vsel %vm898, %v2200, %v2194
      %v2208 = vsel %vm898, %v2202, %v2196
      %s2209 = scalar_lea.vmem %s1, 33
      %v2210 = vld [vmem:[%s2209] ss:$8 sm:$0x3]
      %v2212 = vlaneseq
      %v2213 = vshrl.u32 %v2212, 7
      %v2214 = vsub.s32 0, %v2213
      %v2215 = vrot.slane %v2210, %v2214
      %v2216 = vlaneseq
      %v2217 = vshrl.u32 %v2216, 7
      %v2218 = vsub.s32 1, %v2217
      %v2219 = vrot.slane %v2210, %v2218
      %v2222 = vmul.f32 %v2203, %v2215
      %v2223 = vmul.f32 %v2206, %v2219
      %v2224 = vmul.f32 %v2204, %v2215
      %v2225 = vmul.f32 %v2207, %v2219
      %v2226 = vmul.f32 %v2205, %v2215
      %v2227 = vmul.f32 %v2208, %v2219
      %s2228 = scalar_lea.vmem %s10, 40
      %v2229 = vld [vmem:[%s2228] sm:$0xff]
      %v2231 = vsel %vm2042, %v2229, 0
      %2233 = vmatprep.subr.mxu0 %v2223
      %2234 = vmatpush1.msra.mxu0 %v2222
      %2235 = vmatprep.subr.mxu0 %v2225
      %2236 = vmatpush1.msra.mxu0 %v2224
      %2237 = vmatprep.subr.mxu0 %v2227
      %2238 = vmatpush1.msra.mxu0 %v2226
      %2239 = vmatprep.subr.mxu0 0.0
      %2240 = vmatpush1.msra.mxu0 0.0
      %2241 = vmatprep.subr.mxu0 0.0
      %2242 = vmatpush1.msra.mxu0 0.0
      %2243 = vmatprep.subr.mxu0 0.0
      %2244 = vmatpush1.msra.mxu0 0.0
      %2245 = vmatprep.subr.mxu0 0.0
      %2246 = vmatpush1.msra.mxu0 0.0
      %2247 = vmatprep.subr.mxu0 0.0
      %2248 = vmatpush1.msra.mxu0 0.0
      %2249 = vmatprep.subr.mxu0 0.0
      %2250 = vmatpush1.msra.mxu0 0.0
      %2251 = vmatprep.subr.mxu0 0.0
      %2252 = vmatpush1.msra.mxu0 0.0
      %2253 = vmatprep.subr.mxu0 0.0
      %2254 = vmatpush1.msra.mxu0 0.0
      %2255 = vmatprep.subr.mxu0 0.0
      %2256 = vmatpush1.msra.mxu0 0.0
      %2257 = vmatprep.subr.mxu0 0.0
      %2258 = vmatpush1.msra.mxu0 0.0
      %2259 = vmatprep.subr.mxu0 0.0
      %2260 = vmatpush1.msra.mxu0 0.0
      %2261 = vmatprep.subr.mxu0 0.0
      %2262 = vmatpush1.msra.mxu0 0.0
      %2263 = vmatprep.subr.mxu0 0.0
      %2264 = vmatpush1.msra.mxu0 0.0
      %2265 = vmatprep.subr.mxu0 0.0
      %2266 = vmatpush1.msra.mxu0 0.0
      %2267 = vmatprep.subr.mxu0 0.0
      %2268 = vmatpush1.msra.mxu0 0.0
      %2269 = vmatprep.subr.mxu0 0.0
      %2270 = vmatpush1.msra.mxu0 0.0
      %2271 = vmatprep.subr.mxu0 0.0
      %2272 = vmatpush1.msra.mxu0 0.0
      %2273 = vmatprep.subr.mxu0 0.0
      %2274 = vmatpush1.msra.mxu0 0.0
      %2275 = vmatprep.subr.mxu0 0.0
      %2276 = vmatpush1.msra.mxu0 0.0
      %2277 = vmatprep.subr.mxu0 0.0
      %2278 = vmatpush1.msra.mxu0 0.0
      %2279 = vmatprep.subr.mxu0 0.0
      %2280 = vmatpush1.msra.mxu0 0.0
      %2281 = vmatprep.subr.mxu0 0.0
      %2282 = vmatpush1.msra.mxu0 0.0
      %2283 = vmatprep.subr.mxu0 0.0
      %2284 = vmatpush1.msra.mxu0 0.0
      %2285 = vmatprep.subr.mxu0 0.0
      %2286 = vmatpush1.msra.mxu0 0.0
      %2287 = vmatprep.subr.mxu0 0.0
      %2288 = vmatpush1.msra.mxu0 0.0
      %2289 = vmatprep.subr.mxu0 0.0
      %2290 = vmatpush1.msra.mxu0 0.0
      %2291 = vmatprep.subr.mxu0 0.0
      %2292 = vmatpush1.msra.mxu0 0.0
      %2293 = vmatprep.subr.mxu0 0.0
      %2294 = vmatpush1.msra.mxu0 0.0
      %2295 = vmatprep.subr.mxu0 0.0
      %2296 = vmatpush1.msra.mxu0 0.0
      %2297 = vmatprep.mubr.f32.mxu0 0.0
      %2298 = vmatmul.mubr.f32.gmra.mrb[0].mxu0 %v2231
      %v2299 = vpop.f32.mrb[0].mxu0
      %v2300 = vadd.f32 0.0, %v2299
      %v2301 = vpop.f32.mrb[0].mxu0
      %v2302 = vadd.f32 0.0, %v2301
      %2303 = vdwg.mxu0
      %v2304 = vadd.f32 %v2187, %v2300
      %v2305 = vadd.f32 %v2189, %v2302
      %2306 = vrot.lane.b32.xlu0 %v1995, 64
      %v2307 = vpop.permute.xlu0 %2306
      %2308 = vrot.lane.b32.xlu0 %v1997, 64
      %v2309 = vpop.permute.xlu0 %2308
      %2310 = vrot.lane.b32.xlu0 %v1999, 64
      %v2311 = vpop.permute.xlu0 %2310
      %2312 = vrot.lane.b32.xlu0 %v1996, 64
      %v2313 = vpop.permute.xlu0 %2312
      %2314 = vrot.lane.b32.xlu0 %v1998, 64
      %v2315 = vpop.permute.xlu0 %2314
      %2316 = vrot.lane.b32.xlu0 %v2000, 64
      %v2317 = vpop.permute.xlu0 %2316
      %vm2318 = vcmp.lt.s32.totalorder %v724, 64
      %v2319 = vsel %vm2318, %v2307, %v2313
      %v2320 = vsel %vm2318, %v2309, %v2315
      %v2321 = vsel %vm2318, %v2311, %v2317
      %v2322 = vsel %vm2318, %v2313, %v2307
      %v2323 = vsel %vm2318, %v2315, %v2309
      %v2324 = vsel %vm2318, %v2317, %v2311
      %s2325 = scalar_lea.vmem %s1, 21
      %v2326 = vld [vmem:[%s2325] ss:$8 sm:$0x3]
      %v2328 = vlaneseq
      %v2329 = vshrl.u32 %v2328, 7
      %v2330 = vsub.s32 0, %v2329
      %v2331 = vrot.slane %v2326, %v2330
      %v2332 = vlaneseq
      %v2333 = vshrl.u32 %v2332, 7
      %v2334 = vsub.s32 1, %v2333
      %v2335 = vrot.slane %v2326, %v2334
      %v2338 = vmul.f32 %v2322, %v2331
      %v2339 = vmul.f32 %v2319, %v2335
      %v2340 = vmul.f32 %v2323, %v2331
      %v2341 = vmul.f32 %v2320, %v2335
      %v2342 = vmul.f32 %v2324, %v2331
      %v2343 = vmul.f32 %v2321, %v2335
      %s2344 = scalar_lea.vmem %s10, 8
      %v2345 = vld [vmem:[%s2344] sm:$0xff]
      %v2347 = vsel %vm2042, %v2345, 0
      %2349 = vmatprep.subr.mxu0 %v2339
      %2350 = vmatpush1.msra.mxu0 %v2338
      %2351 = vmatprep.subr.mxu0 %v2341
      %2352 = vmatpush1.msra.mxu0 %v2340
      %2353 = vmatprep.subr.mxu0 %v2343
      %2354 = vmatpush1.msra.mxu0 %v2342
      %2355 = vmatprep.subr.mxu0 0.0
      %2356 = vmatpush1.msra.mxu0 0.0
      %2357 = vmatprep.subr.mxu0 0.0
      %2358 = vmatpush1.msra.mxu0 0.0
      %2359 = vmatprep.subr.mxu0 0.0
      %2360 = vmatpush1.msra.mxu0 0.0
      %2361 = vmatprep.subr.mxu0 0.0
      %2362 = vmatpush1.msra.mxu0 0.0
      %2363 = vmatprep.subr.mxu0 0.0
      %2364 = vmatpush1.msra.mxu0 0.0
      %2365 = vmatprep.subr.mxu0 0.0
      %2366 = vmatpush1.msra.mxu0 0.0
      %2367 = vmatprep.subr.mxu0 0.0
      %2368 = vmatpush1.msra.mxu0 0.0
      %2369 = vmatprep.subr.mxu0 0.0
      %2370 = vmatpush1.msra.mxu0 0.0
      %2371 = vmatprep.subr.mxu0 0.0
      %2372 = vmatpush1.msra.mxu0 0.0
      %2373 = vmatprep.subr.mxu0 0.0
      %2374 = vmatpush1.msra.mxu0 0.0
      %2375 = vmatprep.subr.mxu0 0.0
      %2376 = vmatpush1.msra.mxu0 0.0
      %2377 = vmatprep.subr.mxu0 0.0
      %2378 = vmatpush1.msra.mxu0 0.0
      %2379 = vmatprep.subr.mxu0 0.0
      %2380 = vmatpush1.msra.mxu0 0.0
      %2381 = vmatprep.subr.mxu0 0.0
      %2382 = vmatpush1.msra.mxu0 0.0
      %2383 = vmatprep.subr.mxu0 0.0
      %2384 = vmatpush1.msra.mxu0 0.0
      %2385 = vmatprep.subr.mxu0 0.0
      %2386 = vmatpush1.msra.mxu0 0.0
      %2387 = vmatprep.subr.mxu0 0.0
      %2388 = vmatpush1.msra.mxu0 0.0
      %2389 = vmatprep.subr.mxu0 0.0
      %2390 = vmatpush1.msra.mxu0 0.0
      %2391 = vmatprep.subr.mxu0 0.0
      %2392 = vmatpush1.msra.mxu0 0.0
      %2393 = vmatprep.subr.mxu0 0.0
      %2394 = vmatpush1.msra.mxu0 0.0
      %2395 = vmatprep.subr.mxu0 0.0
      %2396 = vmatpush1.msra.mxu0 0.0
      %2397 = vmatprep.subr.mxu0 0.0
      %2398 = vmatpush1.msra.mxu0 0.0
      %2399 = vmatprep.subr.mxu0 0.0
      %2400 = vmatpush1.msra.mxu0 0.0
      %2401 = vmatprep.subr.mxu0 0.0
      %2402 = vmatpush1.msra.mxu0 0.0
      %2403 = vmatprep.subr.mxu0 0.0
      %2404 = vmatpush1.msra.mxu0 0.0
      %2405 = vmatprep.subr.mxu0 0.0
      %2406 = vmatpush1.msra.mxu0 0.0
      %2407 = vmatprep.subr.mxu0 0.0
      %2408 = vmatpush1.msra.mxu0 0.0
      %2409 = vmatprep.subr.mxu0 0.0
      %2410 = vmatpush1.msra.mxu0 0.0
      %2411 = vmatprep.subr.mxu0 0.0
      %2412 = vmatpush1.msra.mxu0 0.0
      %2413 = vmatprep.mubr.f32.mxu0 0.0
      %2414 = vmatmul.mubr.f32.gmra.mrb[0].mxu0 %v2347
      %v2415 = vpop.f32.mrb[0].mxu0
      %v2416 = vadd.f32 0.0, %v2415
      %v2417 = vpop.f32.mrb[0].mxu0
      %v2418 = vadd.f32 0.0, %v2417
      %2419 = vdwg.mxu0
      %v2420 = vadd.f32 %v2304, %v2416
      %v2421 = vadd.f32 %v2305, %v2418
      %2422 = vrot.lane.b32.xlu0 %v2322, 1
      %v2423 = vpop.permute.xlu0 %2422
      %2424 = vrot.lane.b32.xlu0 %v2323, 1
      %v2425 = vpop.permute.xlu0 %2424
      %2426 = vrot.lane.b32.xlu0 %v2324, 1
      %v2427 = vpop.permute.xlu0 %2426
      %2428 = vrot.lane.b32.xlu0 %v2319, 1
      %v2429 = vpop.permute.xlu0 %2428
      %2430 = vrot.lane.b32.xlu0 %v2320, 1
      %v2431 = vpop.permute.xlu0 %2430
      %2432 = vrot.lane.b32.xlu0 %v2321, 1
      %v2433 = vpop.permute.xlu0 %2432
      %v2434 = vsel %vm725, %v2423, %v2429
      %v2435 = vsel %vm725, %v2425, %v2431
      %v2436 = vsel %vm725, %v2427, %v2433
      %v2437 = vsel %vm725, %v2429, %v2423
      %v2438 = vsel %vm725, %v2431, %v2425
      %v2439 = vsel %vm725, %v2433, %v2427
      %s2440 = scalar_lea.vmem %s1, 20
      %v2441 = vld [vmem:[%s2440] ss:$8 sm:$0x3]
      %v2443 = vlaneseq
      %v2444 = vshrl.u32 %v2443, 7
      %v2445 = vsub.s32 0, %v2444
      %v2446 = vrot.slane %v2441, %v2445
      %v2447 = vlaneseq
      %v2448 = vshrl.u32 %v2447, 7
      %v2449 = vsub.s32 1, %v2448
      %v2450 = vrot.slane %v2441, %v2449
      %v2453 = vmul.f32 %v2437, %v2446
      %v2454 = vmul.f32 %v2434, %v2450
      %v2455 = vmul.f32 %v2438, %v2446
      %v2456 = vmul.f32 %v2435, %v2450
      %v2457 = vmul.f32 %v2439, %v2446
      %v2458 = vmul.f32 %v2436, %v2450
      %v2459 = vld [vmem:[%s10] sm:$0xff]
      %v2461 = vsel %vm2042, %v2459, 0
      %2463 = vmatprep.subr.mxu0 %v2454
      %2464 = vmatpush1.msra.mxu0 %v2453
      %2465 = vmatprep.subr.mxu0 %v2456
      %2466 = vmatpush1.msra.mxu0 %v2455
      %2467 = vmatprep.subr.mxu0 %v2458
      %2468 = vmatpush1.msra.mxu0 %v2457
      %2469 = vmatprep.subr.mxu0 0.0
      %2470 = vmatpush1.msra.mxu0 0.0
      %2471 = vmatprep.subr.mxu0 0.0
      %2472 = vmatpush1.msra.mxu0 0.0
      %2473 = vmatprep.subr.mxu0 0.0
      %2474 = vmatpush1.msra.mxu0 0.0
      %2475 = vmatprep.subr.mxu0 0.0
      %2476 = vmatpush1.msra.mxu0 0.0
      %2477 = vmatprep.subr.mxu0 0.0
      %2478 = vmatpush1.msra.mxu0 0.0
      %2479 = vmatprep.subr.mxu0 0.0
      %2480 = vmatpush1.msra.mxu0 0.0
      %2481 = vmatprep.subr.mxu0 0.0
      %2482 = vmatpush1.msra.mxu0 0.0
      %2483 = vmatprep.subr.mxu0 0.0
      %2484 = vmatpush1.msra.mxu0 0.0
      %2485 = vmatprep.subr.mxu0 0.0
      %2486 = vmatpush1.msra.mxu0 0.0
      %2487 = vmatprep.subr.mxu0 0.0
      %2488 = vmatpush1.msra.mxu0 0.0
      %2489 = vmatprep.subr.mxu0 0.0
      %2490 = vmatpush1.msra.mxu0 0.0
      %2491 = vmatprep.subr.mxu0 0.0
      %2492 = vmatpush1.msra.mxu0 0.0
      %2493 = vmatprep.subr.mxu0 0.0
      %2494 = vmatpush1.msra.mxu0 0.0
      %2495 = vmatprep.subr.mxu0 0.0
      %2496 = vmatpush1.msra.mxu0 0.0
      %2497 = vmatprep.subr.mxu0 0.0
      %2498 = vmatpush1.msra.mxu0 0.0
      %2499 = vmatprep.subr.mxu0 0.0
      %2500 = vmatpush1.msra.mxu0 0.0
      %2501 = vmatprep.subr.mxu0 0.0
      %2502 = vmatpush1.msra.mxu0 0.0
      %2503 = vmatprep.subr.mxu0 0.0
      %2504 = vmatpush1.msra.mxu0 0.0
      %2505 = vmatprep.subr.mxu0 0.0
      %2506 = vmatpush1.msra.mxu0 0.0
      %2507 = vmatprep.subr.mxu0 0.0
      %2508 = vmatpush1.msra.mxu0 0.0
      %2509 = vmatprep.subr.mxu0 0.0
      %2510 = vmatpush1.msra.mxu0 0.0
      %2511 = vmatprep.subr.mxu0 0.0
      %2512 = vmatpush1.msra.mxu0 0.0
      %2513 = vmatprep.subr.mxu0 0.0
      %2514 = vmatpush1.msra.mxu0 0.0
      %2515 = vmatprep.subr.mxu0 0.0
      %2516 = vmatpush1.msra.mxu0 0.0
      %2517 = vmatprep.subr.mxu0 0.0
      %2518 = vmatpush1.msra.mxu0 0.0
      %2519 = vmatprep.subr.mxu0 0.0
      %2520 = vmatpush1.msra.mxu0 0.0
      %2521 = vmatprep.subr.mxu0 0.0
      %2522 = vmatpush1.msra.mxu0 0.0
      %2523 = vmatprep.subr.mxu0 0.0
      %2524 = vmatpush1.msra.mxu0 0.0
      %2525 = vmatprep.subr.mxu0 0.0
      %2526 = vmatpush1.msra.mxu0 0.0
      %2527 = vmatprep.mubr.f32.mxu0 0.0
      %2528 = vmatmul.mubr.f32.gmra.mrb[0].mxu0 %v2461
      %v2529 = vpop.f32.mrb[0].mxu0
      %v2530 = vadd.f32 0.0, %v2529
      %v2531 = vpop.f32.mrb[0].mxu0
      %v2532 = vadd.f32 0.0, %v2531
      %2533 = vdwg.mxu0
      %v2534 = vadd.f32 %v2420, %v2530
      %v2535 = vadd.f32 %v2421, %v2532
      %2536 = vrot.lane.b32.xlu0 %v2322, 127
      %v2537 = vpop.permute.xlu0 %2536
      %2538 = vrot.lane.b32.xlu0 %v2323, 127
      %v2539 = vpop.permute.xlu0 %2538
      %2540 = vrot.lane.b32.xlu0 %v2324, 127
      %v2541 = vpop.permute.xlu0 %2540
      %2542 = vrot.lane.b32.xlu0 %v2319, 127
      %v2543 = vpop.permute.xlu0 %2542
      %2544 = vrot.lane.b32.xlu0 %v2320, 127
      %v2545 = vpop.permute.xlu0 %2544
      %2546 = vrot.lane.b32.xlu0 %v2321, 127
      %v2547 = vpop.permute.xlu0 %2546
      %v2548 = vsel %vm898, %v2537, %v2543
      %v2549 = vsel %vm898, %v2539, %v2545
      %v2550 = vsel %vm898, %v2541, %v2547
      %v2551 = vsel %vm898, %v2543, %v2537
      %v2552 = vsel %vm898, %v2545, %v2539
      %v2553 = vsel %vm898, %v2547, %v2541
      %s2554 = scalar_lea.vmem %s1, 22
      %v2555 = vld [vmem:[%s2554] ss:$8 sm:$0x3]
      %v2557 = vlaneseq
      %v2558 = vshrl.u32 %v2557, 7
      %v2559 = vsub.s32 0, %v2558
      %v2560 = vrot.slane %v2555, %v2559
      %v2561 = vlaneseq
      %v2562 = vshrl.u32 %v2561, 7
      %v2563 = vsub.s32 1, %v2562
      %v2564 = vrot.slane %v2555, %v2563
      %v2567 = vmul.f32 %v2548, %v2560
      %v2568 = vmul.f32 %v2551, %v2564
      %v2569 = vmul.f32 %v2549, %v2560
      %v2570 = vmul.f32 %v2552, %v2564
      %v2571 = vmul.f32 %v2550, %v2560
      %v2572 = vmul.f32 %v2553, %v2564
      %s2573 = scalar_lea.vmem %s10, 16
      %v2574 = vld [vmem:[%s2573] sm:$0xff]
      %v2576 = vsel %vm2042, %v2574, 0
      %2578 = vmatprep.subr.mxu0 %v2568
      %2579 = vmatpush1.msra.mxu0 %v2567
      %2580 = vmatprep.subr.mxu0 %v2570
      %2581 = vmatpush1.msra.mxu0 %v2569
      %2582 = vmatprep.subr.mxu0 %v2572
      %2583 = vmatpush1.msra.mxu0 %v2571
      %2584 = vmatprep.subr.mxu0 0.0
      %2585 = vmatpush1.msra.mxu0 0.0
      %2586 = vmatprep.subr.mxu0 0.0
      %2587 = vmatpush1.msra.mxu0 0.0
      %2588 = vmatprep.subr.mxu0 0.0
      %2589 = vmatpush1.msra.mxu0 0.0
      %2590 = vmatprep.subr.mxu0 0.0
      %2591 = vmatpush1.msra.mxu0 0.0
      %2592 = vmatprep.subr.mxu0 0.0
      %2593 = vmatpush1.msra.mxu0 0.0
      %2594 = vmatprep.subr.mxu0 0.0
      %2595 = vmatpush1.msra.mxu0 0.0
      %2596 = vmatprep.subr.mxu0 0.0
      %2597 = vmatpush1.msra.mxu0 0.0
      %2598 = vmatprep.subr.mxu0 0.0
      %2599 = vmatpush1.msra.mxu0 0.0
      %2600 = vmatprep.subr.mxu0 0.0
      %2601 = vmatpush1.msra.mxu0 0.0
      %2602 = vmatprep.subr.mxu0 0.0
      %2603 = vmatpush1.msra.mxu0 0.0
      %2604 = vmatprep.subr.mxu0 0.0
      %2605 = vmatpush1.msra.mxu0 0.0
      %2606 = vmatprep.subr.mxu0 0.0
      %2607 = vmatpush1.msra.mxu0 0.0
      %2608 = vmatprep.subr.mxu0 0.0
      %2609 = vmatpush1.msra.mxu0 0.0
      %2610 = vmatprep.subr.mxu0 0.0
      %2611 = vmatpush1.msra.mxu0 0.0
      %2612 = vmatprep.subr.mxu0 0.0
      %2613 = vmatpush1.msra.mxu0 0.0
      %2614 = vmatprep.subr.mxu0 0.0
      %2615 = vmatpush1.msra.mxu0 0.0
      %2616 = vmatprep.subr.mxu0 0.0
      %2617 = vmatpush1.msra.mxu0 0.0
      %2618 = vmatprep.subr.mxu0 0.0
      %2619 = vmatpush1.msra.mxu0 0.0
      %2620 = vmatprep.subr.mxu0 0.0
      %2621 = vmatpush1.msra.mxu0 0.0
      %2622 = vmatprep.subr.mxu0 0.0
      %2623 = vmatpush1.msra.mxu0 0.0
      %2624 = vmatprep.subr.mxu0 0.0
      %2625 = vmatpush1.msra.mxu0 0.0
      %2626 = vmatprep.subr.mxu0 0.0
      %2627 = vmatpush1.msra.mxu0 0.0
      %2628 = vmatprep.subr.mxu0 0.0
      %2629 = vmatpush1.msra.mxu0 0.0
      %2630 = vmatprep.subr.mxu0 0.0
      %2631 = vmatpush1.msra.mxu0 0.0
      %2632 = vmatprep.subr.mxu0 0.0
      %2633 = vmatpush1.msra.mxu0 0.0
      %2634 = vmatprep.subr.mxu0 0.0
      %2635 = vmatpush1.msra.mxu0 0.0
      %2636 = vmatprep.subr.mxu0 0.0
      %2637 = vmatpush1.msra.mxu0 0.0
      %2638 = vmatprep.subr.mxu0 0.0
      %2639 = vmatpush1.msra.mxu0 0.0
      %2640 = vmatprep.subr.mxu0 0.0
      %2641 = vmatpush1.msra.mxu0 0.0
      %2642 = vmatprep.mubr.f32.mxu0 0.0
      %2643 = vmatmul.mubr.f32.gmra.mrb[0].mxu0 %v2576
      %v2644 = vpop.f32.mrb[0].mxu0
      %v2645 = vadd.f32 0.0, %v2644
      %v2646 = vpop.f32.mrb[0].mxu0
      %v2647 = vadd.f32 0.0, %v2646
      %2648 = vdwg.mxu0
      %v2649 = vadd.f32 %v2534, %v2645
      %v2650 = vadd.f32 %v2535, %v2647
      %v2651 = vadd.f32 %v2649, %v2650
      %2652 = vadd.xlane.f32.xlu0 %v2651
      %v2653 = vpop.xlane.xlu0 %2652
      %v2654 = vmul.f32 %v2653, %v1293
      %v2655 = vsub.f32 %v2649, %v2654
      %v2656 = vsub.f32 %v2650, %v2654
      %v2657 = vmul.f32 %v2655, %v2655
      %v2658 = vmul.f32 %v2656, %v2656
      %v2659 = vadd.f32 %v2657, %v2658
      %2660 = vadd.xlane.f32.xlu0 %v2659
      %v2661 = vpop.xlane.xlu0 %2660
      %v2662 = vmul.f32 %v2661, %v1293
      %v2663 = vld [vmem:[%s11] sm:$0xff]
      %v2664 = vadd.f32 %v2662, 1e-05
      %v2665 = vrsqrt.pop %v2664
      %v2666 = vmul.f32 %v2663, %v2665
      %2668 = vset.pattern.permute.xlu0 0
      %2669 = vperm.xlu0 %2668, %v2666
      %v2670 = vpop.permute.xlu0 %2669
      %v2672 = vmul.f32 %v2655, %v2670
      %v2673 = vmul.f32 %v2656, %v2670
      %v2674 = vld [vmem:[%s12] sm:$0xff]
      %2676 = vset.pattern.permute.xlu0 0
      %2677 = vperm.xlu0 %2676, %v2674
      %v2678 = vpop.permute.xlu0 %2677
      %v2680 = vadd.f32 %v2672, %v2678
      %v2681 = vadd.f32 %v2673, %v2678
      %vm2682 = vcmp.ge.f32.partialorder %v2680, 0.0
      %vm2683 = vcmp.ge.f32.partialorder %v2681, 0.0
      %v2684 = vld [vmem:[%s13] sm:$0xff]
      %2686 = vset.pattern.permute.xlu0 0
      %2687 = vperm.xlu0 %2686, %v2684
      %v2688 = vpop.permute.xlu0 %2687
      %v2690 = vmul.f32 %v2688, %v2680
      %v2691 = vmul.f32 %v2688, %v2681
      %v2692 = vsel %vm2682, %v2680, %v2690
      %v2693 = vsel %vm2683, %v2681, %v2691
      %2694 = vst [vmem:[#allocation2 + $0x10] sm:$0xff] %v2692
      %2695 = vst [vmem:[#allocation2 + $0x18] sm:$0xff] %v2693
      %v2696 = vld [vmem:[#allocation2 + $0x10] sm:$0xff]
      %v2697 = vld [vmem:[#allocation2 + $0x18] sm:$0xff]
      %v2698 = vld [vmem:[#allocation2 + $0x20] sm:$0xff]
      %v2699 = vld [vmem:[#allocation2 + $0x28] sm:$0xff]
      %v2700 = vld [vmem:[#allocation2 + $0x30] sm:$0xff]
      %v2701 = vld [vmem:[#allocation2 + $0x38] sm:$0xff]
      %v2702 = vld [vmem:[#allocation2 + $0x40] sm:$0xff]
      %v2703 = vld [vmem:[#allocation2 + $0x48] sm:$0xff]
      %s2704 = scalar_lea.vmem %s14, 32
      %v2705 = vld [vmem:[%s2704] sm:$0xff]
      %2706 = vrot.lane.b32.xlu0 %v2696, 1
      %v2707 = vpop.permute.xlu0 %2706
      %2708 = vrot.lane.b32.xlu0 %v2698, 1
      %v2709 = vpop.permute.xlu0 %2708
      %2710 = vrot.lane.b32.xlu0 %v2700, 1
      %v2711 = vpop.permute.xlu0 %2710
      %2712 = vrot.lane.b32.xlu0 %v2702, 1
      %v2713 = vpop.permute.xlu0 %2712
      %2714 = vrot.lane.b32.xlu0 %v2697, 1
      %v2715 = vpop.permute.xlu0 %2714
      %2716 = vrot.lane.b32.xlu0 %v2699, 1
      %v2717 = vpop.permute.xlu0 %2716
      %2718 = vrot.lane.b32.xlu0 %v2701, 1
      %v2719 = vpop.permute.xlu0 %2718
      %2720 = vrot.lane.b32.xlu0 %v2703, 1
      %v2721 = vpop.permute.xlu0 %2720
      %v2722 = vsel %vm725, %v2707, %v2715
      %v2723 = vsel %vm725, %v2709, %v2717
      %v2724 = vsel %vm725, %v2711, %v2719
      %v2725 = vsel %vm725, %v2713, %v2721
      %v2726 = vsel %vm725, %v2715, %v2707
      %v2727 = vsel %vm725, %v2717, %v2709
      %v2728 = vsel %vm725, %v2719, %v2711
      %v2729 = vsel %vm725, %v2721, %v2713
      %s2730 = scalar_lea.vmem %s1, 37
      %v2731 = vld [vmem:[%s2730] ss:$8 sm:$0x3]
      %v2733 = vlaneseq
      %v2734 = vshrl.u32 %v2733, 7
      %v2735 = vsub.s32 0, %v2734
      %v2736 = vrot.slane %v2731, %v2735
      %v2737 = vlaneseq
      %v2738 = vshrl.u32 %v2737, 7
      %v2739 = vsub.s32 1, %v2738
      %v2740 = vrot.slane %v2731, %v2739
      %v2743 = vmul.f32 %v2726, %v2736
      %v2744 = vmul.f32 %v2722, %v2740
      %v2745 = vmul.f32 %v2727, %v2736
      %v2746 = vmul.f32 %v2723, %v2740
      %v2747 = vmul.f32 %v2728, %v2736
      %v2748 = vmul.f32 %v2724, %v2740
      %v2749 = vmul.f32 %v2729, %v2736
      %v2750 = vmul.f32 %v2725, %v2740
      %s2751 = scalar_lea.vmem %s14, 24
      %v2752 = vld [vmem:[%s2751] sm:$0xff]
      %vm2753 = vcmask 261120
      %v2755 = vsel %vm2753, %v2752, 0
      %2757 = vmatprep.subr.mxu0 %v2744
      %2758 = vmatpush1.msra.mxu0 %v2743
      %2759 = vmatprep.subr.mxu0 %v2746
      %2760 = vmatpush1.msra.mxu0 %v2745
      %2761 = vmatprep.subr.mxu0 %v2748
      %2762 = vmatpush1.msra.mxu0 %v2747
      %2763 = vmatprep.subr.mxu0 %v2750
      %2764 = vmatpush1.msra.mxu0 %v2749
      %2765 = vmatprep.subr.mxu0 0.0
      %2766 = vmatpush1.msra.mxu0 0.0
      %2767 = vmatprep.subr.mxu0 0.0
      %2768 = vmatpush1.msra.mxu0 0.0
      %2769 = vmatprep.subr.mxu0 0.0
      %2770 = vmatpush1.msra.mxu0 0.0
      %2771 = vmatprep.subr.mxu0 0.0
      %2772 = vmatpush1.msra.mxu0 0.0
      %2773 = vmatprep.subr.mxu0 0.0
      %2774 = vmatpush1.msra.mxu0 0.0
      %2775 = vmatprep.subr.mxu0 0.0
      %2776 = vmatpush1.msra.mxu0 0.0
      %2777 = vmatprep.subr.mxu0 0.0
      %2778 = vmatpush1.msra.mxu0 0.0
      %2779 = vmatprep.subr.mxu0 0.0
      %2780 = vmatpush1.msra.mxu0 0.0
      %2781 = vmatprep.subr.mxu0 0.0
      %2782 = vmatpush1.msra.mxu0 0.0
      %2783 = vmatprep.subr.mxu0 0.0
      %2784 = vmatpush1.msra.mxu0 0.0
      %2785 = vmatprep.subr.mxu0 0.0
      %2786 = vmatpush1.msra.mxu0 0.0
      %2787 = vmatprep.subr.mxu0 0.0
      %2788 = vmatpush1.msra.mxu0 0.0
      %2789 = vmatprep.subr.mxu0 0.0
      %2790 = vmatpush1.msra.mxu0 0.0
      %2791 = vmatprep.subr.mxu0 0.0
      %2792 = vmatpush1.msra.mxu0 0.0
      %2793 = vmatprep.subr.mxu0 0.0
      %2794 = vmatpush1.msra.mxu0 0.0
      %2795 = vmatprep.subr.mxu0 0.0
      %2796 = vmatpush1.msra.mxu0 0.0
      %2797 = vmatprep.subr.mxu0 0.0
      %2798 = vmatpush1.msra.mxu0 0.0
      %2799 = vmatprep.subr.mxu0 0.0
      %2800 = vmatpush1.msra.mxu0 0.0
      %2801 = vmatprep.subr.mxu0 0.0
      %2802 = vmatpush1.msra.mxu0 0.0
      %2803 = vmatprep.subr.mxu0 0.0
      %2804 = vmatpush1.msra.mxu0 0.0
      %2805 = vmatprep.subr.mxu0 0.0
      %2806 = vmatpush1.msra.mxu0 0.0
      %2807 = vmatprep.subr.mxu0 0.0
      %2808 = vmatpush1.msra.mxu0 0.0
      %2809 = vmatprep.subr.mxu0 0.0
      %2810 = vmatpush1.msra.mxu0 0.0
      %2811 = vmatprep.subr.mxu0 0.0
      %2812 = vmatpush1.msra.mxu0 0.0
      %2813 = vmatprep.subr.mxu0 0.0
      %2814 = vmatpush1.msra.mxu0 0.0
      %2815 = vmatprep.subr.mxu0 0.0
      %2816 = vmatpush1.msra.mxu0 0.0
      %2817 = vmatprep.subr.mxu0 0.0
      %2818 = vmatpush1.msra.mxu0 0.0
      %2819 = vmatprep.subr.mxu0 0.0
      %2820 = vmatpush1.msra.mxu0 0.0
      %2821 = vmatprep.mubr.f32.mxu0 0.0
      %2822 = vmatmul.mubr.f32.gmra.mrb[0].mxu0 %v2755
      %v2823 = vpop.f32.mrb[0].mxu0
      %v2824 = vadd.f32 0.0, %v2823
      %v2825 = vpop.f32.mrb[0].mxu0
      %v2826 = vadd.f32 0.0, %v2825
      %2827 = vdwg.mxu0
      %v2829 = vsel %vm2753, %v2705, 0
      %2831 = vmatprep.subr.mxu0 %v2697
      %2832 = vmatpush1.msra.mxu0 %v2696
      %2833 = vmatprep.subr.mxu0 %v2699
      %2834 = vmatpush1.msra.mxu0 %v2698
      %2835 = vmatprep.subr.mxu0 %v2701
      %2836 = vmatpush1.msra.mxu0 %v2700
      %2837 = vmatprep.subr.mxu0 %v2703
      %2838 = vmatpush1.msra.mxu0 %v2702
      %2839 = vmatprep.subr.mxu0 0.0
      %2840 = vmatpush1.msra.mxu0 0.0
      %2841 = vmatprep.subr.mxu0 0.0
      %2842 = vmatpush1.msra.mxu0 0.0
      %2843 = vmatprep.subr.mxu0 0.0
      %2844 = vmatpush1.msra.mxu0 0.0
      %2845 = vmatprep.subr.mxu0 0.0
      %2846 = vmatpush1.msra.mxu0 0.0
      %2847 = vmatprep.subr.mxu0 0.0
      %2848 = vmatpush1.msra.mxu0 0.0
      %2849 = vmatprep.subr.mxu0 0.0
      %2850 = vmatpush1.msra.mxu0 0.0
      %2851 = vmatprep.subr.mxu0 0.0
      %2852 = vmatpush1.msra.mxu0 0.0
      %2853 = vmatprep.subr.mxu0 0.0
      %2854 = vmatpush1.msra.mxu0 0.0
      %2855 = vmatprep.subr.mxu0 0.0
      %2856 = vmatpush1.msra.mxu0 0.0
      %2857 = vmatprep.subr.mxu0 0.0
      %2858 = vmatpush1.msra.mxu0 0.0
      %2859 = vmatprep.subr.mxu0 0.0
      %2860 = vmatpush1.msra.mxu0 0.0
      %2861 = vmatprep.subr.mxu0 0.0
      %2862 = vmatpush1.msra.mxu0 0.0
      %2863 = vmatprep.subr.mxu0 0.0
      %2864 = vmatpush1.msra.mxu0 0.0
      %2865 = vmatprep.subr.mxu0 0.0
      %2866 = vmatpush1.msra.mxu0 0.0
      %2867 = vmatprep.subr.mxu0 0.0
      %2868 = vmatpush1.msra.mxu0 0.0
      %2869 = vmatprep.subr.mxu0 0.0
      %2870 = vmatpush1.msra.mxu0 0.0
      %2871 = vmatprep.subr.mxu0 0.0
      %2872 = vmatpush1.msra.mxu0 0.0
      %2873 = vmatprep.subr.mxu0 0.0
      %2874 = vmatpush1.msra.mxu0 0.0
      %2875 = vmatprep.subr.mxu0 0.0
      %2876 = vmatpush1.msra.mxu0 0.0
      %2877 = vmatprep.subr.mxu0 0.0
      %2878 = vmatpush1.msra.mxu0 0.0
      %2879 = vmatprep.subr.mxu0 0.0
      %2880 = vmatpush1.msra.mxu0 0.0
      %2881 = vmatprep.subr.mxu0 0.0
      %2882 = vmatpush1.msra.mxu0 0.0
      %2883 = vmatprep.subr.mxu0 0.0
      %2884 = vmatpush1.msra.mxu0 0.0
      %2885 = vmatprep.subr.mxu0 0.0
      %2886 = vmatpush1.msra.mxu0 0.0
      %2887 = vmatprep.subr.mxu0 0.0
      %2888 = vmatpush1.msra.mxu0 0.0
      %2889 = vmatprep.subr.mxu0 0.0
      %2890 = vmatpush1.msra.mxu0 0.0
      %2891 = vmatprep.subr.mxu0 0.0
      %2892 = vmatpush1.msra.mxu0 0.0
      %2893 = vmatprep.subr.mxu0 0.0
      %2894 = vmatpush1.msra.mxu0 0.0
      %2895 = vmatprep.mubr.f32.mxu0 0.0
      %2896 = vmatmul.mubr.f32.gmra.mrb[0].mxu0 %v2829
      %v2897 = vpop.f32.mrb[0].mxu0
      %v2898 = vadd.f32 %v2824, %v2897
      %v2899 = vpop.f32.mrb[0].mxu0
      %v2900 = vadd.f32 %v2826, %v2899
      %2901 = vdwg.mxu0
      %2902 = vrot.lane.b32.xlu0 %v2696, 127
      %v2903 = vpop.permute.xlu0 %2902
      %2904 = vrot.lane.b32.xlu0 %v2698, 127
      %v2905 = vpop.permute.xlu0 %2904
      %2906 = vrot.lane.b32.xlu0 %v2700, 127
      %v2907 = vpop.permute.xlu0 %2906
      %2908 = vrot.lane.b32.xlu0 %v2702, 127
      %v2909 = vpop.permute.xlu0 %2908
      %2910 = vrot.lane.b32.xlu0 %v2697, 127
      %v2911 = vpop.permute.xlu0 %2910
      %2912 = vrot.lane.b32.xlu0 %v2699, 127
      %v2913 = vpop.permute.xlu0 %2912
      %2914 = vrot.lane.b32.xlu0 %v2701, 127
      %v2915 = vpop.permute.xlu0 %2914
      %2916 = vrot.lane.b32.xlu0 %v2703, 127
      %v2917 = vpop.permute.xlu0 %2916
      %v2918 = vsel %vm898, %v2903, %v2911
      %v2919 = vsel %vm898, %v2905, %v2913
      %v2920 = vsel %vm898, %v2907, %v2915
      %v2921 = vsel %vm898, %v2909, %v2917
      %v2922 = vsel %vm898, %v2911, %v2903
      %v2923 = vsel %vm898, %v2913, %v2905
      %v2924 = vsel %vm898, %v2915, %v2907
      %v2925 = vsel %vm898, %v2917, %v2909
      %s2926 = scalar_lea.vmem %s1, 39
      %v2927 = vld [vmem:[%s2926] ss:$8 sm:$0x3]
      %v2929 = vlaneseq
      %v2930 = vshrl.u32 %v2929, 7
      %v2931 = vsub.s32 0, %v2930
      %v2932 = vrot.slane %v2927, %v2931
      %v2933 = vlaneseq
      %v2934 = vshrl.u32 %v2933, 7
      %v2935 = vsub.s32 1, %v2934
      %v2936 = vrot.slane %v2927, %v2935
      %v2939 = vmul.f32 %v2918, %v2932
      %v2940 = vmul.f32 %v2922, %v2936
      %v2941 = vmul.f32 %v2919, %v2932
      %v2942 = vmul.f32 %v2923, %v2936
      %v2943 = vmul.f32 %v2920, %v2932
      %v2944 = vmul.f32 %v2924, %v2936
      %v2945 = vmul.f32 %v2921, %v2932
      %v2946 = vmul.f32 %v2925, %v2936
      %s2947 = scalar_lea.vmem %s14, 40
      %v2948 = vld [vmem:[%s2947] sm:$0xff]
      %v2950 = vsel %vm2753, %v2948, 0
      %2952 = vmatprep.subr.mxu0 %v2940
      %2953 = vmatpush1.msra.mxu0 %v2939
      %2954 = vmatprep.subr.mxu0 %v2942
      %2955 = vmatpush1.msra.mxu0 %v2941
      %2956 = vmatprep.subr.mxu0 %v2944
      %2957 = vmatpush1.msra.mxu0 %v2943
      %2958 = vmatprep.subr.mxu0 %v2946
      %2959 = vmatpush1.msra.mxu0 %v2945
      %2960 = vmatprep.subr.mxu0 0.0
      %2961 = vmatpush1.msra.mxu0 0.0
      %2962 = vmatprep.subr.mxu0 0.0
      %2963 = vmatpush1.msra.mxu0 0.0
      %2964 = vmatprep.subr.mxu0 0.0
      %2965 = vmatpush1.msra.mxu0 0.0
      %2966 = vmatprep.subr.mxu0 0.0
      %2967 = vmatpush1.msra.mxu0 0.0
      %2968 = vmatprep.subr.mxu0 0.0
      %2969 = vmatpush1.msra.mxu0 0.0
      %2970 = vmatprep.subr.mxu0 0.0
      %2971 = vmatpush1.msra.mxu0 0.0
      %2972 = vmatprep.subr.mxu0 0.0
      %2973 = vmatpush1.msra.mxu0 0.0
      %2974 = vmatprep.subr.mxu0 0.0
      %2975 = vmatpush1.msra.mxu0 0.0
      %2976 = vmatprep.subr.mxu0 0.0
      %2977 = vmatpush1.msra.mxu0 0.0
      %2978 = vmatprep.subr.mxu0 0.0
      %2979 = vmatpush1.msra.mxu0 0.0
      %2980 = vmatprep.subr.mxu0 0.0
      %2981 = vmatpush1.msra.mxu0 0.0
      %2982 = vmatprep.subr.mxu0 0.0
      %2983 = vmatpush1.msra.mxu0 0.0
      %2984 = vmatprep.subr.mxu0 0.0
      %2985 = vmatpush1.msra.mxu0 0.0
      %2986 = vmatprep.subr.mxu0 0.0
      %2987 = vmatpush1.msra.mxu0 0.0
      %2988 = vmatprep.subr.mxu0 0.0
      %2989 = vmatpush1.msra.mxu0 0.0
      %2990 = vmatprep.subr.mxu0 0.0
      %2991 = vmatpush1.msra.mxu0 0.0
      %2992 = vmatprep.subr.mxu0 0.0
      %2993 = vmatpush1.msra.mxu0 0.0
      %2994 = vmatprep.subr.mxu0 0.0
      %2995 = vmatpush1.msra.mxu0 0.0
      %2996 = vmatprep.subr.mxu0 0.0
      %2997 = vmatpush1.msra.mxu0 0.0
      %2998 = vmatprep.subr.mxu0 0.0
      %2999 = vmatpush1.msra.mxu0 0.0
      %3000 = vmatprep.subr.mxu0 0.0
      %3001 = vmatpush1.msra.mxu0 0.0
      %3002 = vmatprep.subr.mxu0 0.0
      %3003 = vmatpush1.msra.mxu0 0.0
      %3004 = vmatprep.subr.mxu0 0.0
      %3005 = vmatpush1.msra.mxu0 0.0
      %3006 = vmatprep.subr.mxu0 0.0
      %3007 = vmatpush1.msra.mxu0 0.0
      %3008 = vmatprep.subr.mxu0 0.0
      %3009 = vmatpush1.msra.mxu0 0.0
      %3010 = vmatprep.subr.mxu0 0.0
      %3011 = vmatpush1.msra.mxu0 0.0
      %3012 = vmatprep.subr.mxu0 0.0
      %3013 = vmatpush1.msra.mxu0 0.0
      %3014 = vmatprep.subr.mxu0 0.0
      %3015 = vmatpush1.msra.mxu0 0.0
      %3016 = vmatprep.mubr.f32.mxu0 0.0
      %3017 = vmatmul.mubr.f32.gmra.mrb[0].mxu0 %v2950
      %v3018 = vpop.f32.mrb[0].mxu0
      %v3019 = vadd.f32 0.0, %v3018
      %v3020 = vpop.f32.mrb[0].mxu0
      %v3021 = vadd.f32 0.0, %v3020
      %3022 = vdwg.mxu0
      %v3023 = vadd.f32 %v2898, %v3019
      %v3024 = vadd.f32 %v2900, %v3021
      %s3025 = scalar_lea.vmem %s1, 35
      %v3026 = vld [vmem:[%s3025] ss:$8 sm:$0x3]
      %v3028 = vlaneseq
      %v3029 = vshrl.u32 %v3028, 7
      %v3030 = vsub.s32 0, %v3029
      %v3031 = vrot.slane %v3026, %v3030
      %v3032 = vlaneseq
      %v3033 = vshrl.u32 %v3032, 7
      %v3034 = vsub.s32 1, %v3033
      %v3035 = vrot.slane %v3026, %v3034
      %v3038 = vmul.f32 %v2697, %v3031
      %v3039 = vmul.f32 %v2696, %v3035
      %v3040 = vmul.f32 %v2699, %v3031
      %v3041 = vmul.f32 %v2698, %v3035
      %v3042 = vmul.f32 %v2701, %v3031
      %v3043 = vmul.f32 %v2700, %v3035
      %v3044 = vmul.f32 %v2703, %v3031
      %v3045 = vmul.f32 %v2702, %v3035
      %s3046 = scalar_lea.vmem %s14, 8
      %v3047 = vld [vmem:[%s3046] sm:$0xff]
      %v3049 = vsel %vm2753, %v3047, 0
      %3051 = vmatprep.subr.mxu0 %v3039
      %3052 = vmatpush1.msra.mxu0 %v3038
      %3053 = vmatprep.subr.mxu0 %v3041
      %3054 = vmatpush1.msra.mxu0 %v3040
      %3055 = vmatprep.subr.mxu0 %v3043
      %3056 = vmatpush1.msra.mxu0 %v3042
      %3057 = vmatprep.subr.mxu0 %v3045
      %3058 = vmatpush1.msra.mxu0 %v3044
      %3059 = vmatprep.subr.mxu0 0.0
      %3060 = vmatpush1.msra.mxu0 0.0
      %3061 = vmatprep.subr.mxu0 0.0
      %3062 = vmatpush1.msra.mxu0 0.0
      %3063 = vmatprep.subr.mxu0 0.0
      %3064 = vmatpush1.msra.mxu0 0.0
      %3065 = vmatprep.subr.mxu0 0.0
      %3066 = vmatpush1.msra.mxu0 0.0
      %3067 = vmatprep.subr.mxu0 0.0
      %3068 = vmatpush1.msra.mxu0 0.0
      %3069 = vmatprep.subr.mxu0 0.0
      %3070 = vmatpush1.msra.mxu0 0.0
      %3071 = vmatprep.subr.mxu0 0.0
      %3072 = vmatpush1.msra.mxu0 0.0
      %3073 = vmatprep.subr.mxu0 0.0
      %3074 = vmatpush1.msra.mxu0 0.0
      %3075 = vmatprep.subr.mxu0 0.0
      %3076 = vmatpush1.msra.mxu0 0.0
      %3077 = vmatprep.subr.mxu0 0.0
      %3078 = vmatpush1.msra.mxu0 0.0
      %3079 = vmatprep.subr.mxu0 0.0
      %3080 = vmatpush1.msra.mxu0 0.0
      %3081 = vmatprep.subr.mxu0 0.0
      %3082 = vmatpush1.msra.mxu0 0.0
      %3083 = vmatprep.subr.mxu0 0.0
      %3084 = vmatpush1.msra.mxu0 0.0
      %3085 = vmatprep.subr.mxu0 0.0
      %3086 = vmatpush1.msra.mxu0 0.0
      %3087 = vmatprep.subr.mxu0 0.0
      %3088 = vmatpush1.msra.mxu0 0.0
      %3089 = vmatprep.subr.mxu0 0.0
      %3090 = vmatpush1.msra.mxu0 0.0
      %3091 = vmatprep.subr.mxu0 0.0
      %3092 = vmatpush1.msra.mxu0 0.0
      %3093 = vmatprep.subr.mxu0 0.0
      %3094 = vmatpush1.msra.mxu0 0.0
      %3095 = vmatprep.subr.mxu0 0.0
      %3096 = vmatpush1.msra.mxu0 0.0
      %3097 = vmatprep.subr.mxu0 0.0
      %3098 = vmatpush1.msra.mxu0 0.0
      %3099 = vmatprep.subr.mxu0 0.0
      %3100 = vmatpush1.msra.mxu0 0.0
      %3101 = vmatprep.subr.mxu0 0.0
      %3102 = vmatpush1.msra.mxu0 0.0
      %3103 = vmatprep.subr.mxu0 0.0
      %3104 = vmatpush1.msra.mxu0 0.0
      %3105 = vmatprep.subr.mxu0 0.0
      %3106 = vmatpush1.msra.mxu0 0.0
      %3107 = vmatprep.subr.mxu0 0.0
      %3108 = vmatpush1.msra.mxu0 0.0
      %3109 = vmatprep.subr.mxu0 0.0
      %3110 = vmatpush1.msra.mxu0 0.0
      %3111 = vmatprep.subr.mxu0 0.0
      %3112 = vmatpush1.msra.mxu0 0.0
      %3113 = vmatprep.subr.mxu0 0.0
      %3114 = vmatpush1.msra.mxu0 0.0
      %3115 = vmatprep.mubr.f32.mxu0 0.0
      %3116 = vmatmul.mubr.f32.gmra.mrb[0].mxu0 %v3049
      %v3117 = vpop.f32.mrb[0].mxu0
      %v3118 = vadd.f32 0.0, %v3117
      %v3119 = vpop.f32.mrb[0].mxu0
      %v3120 = vadd.f32 0.0, %v3119
      %3121 = vdwg.mxu0
      %v3122 = vadd.f32 %v3023, %v3118
      %v3123 = vadd.f32 %v3024, %v3120
      %s3124 = scalar_lea.vmem %s1, 34
      %v3125 = vld [vmem:[%s3124] ss:$8 sm:$0x3]
      %v3127 = vlaneseq
      %v3128 = vshrl.u32 %v3127, 7
      %v3129 = vsub.s32 0, %v3128
      %v3130 = vrot.slane %v3125, %v3129
      %v3131 = vlaneseq
      %v3132 = vshrl.u32 %v3131, 7
      %v3133 = vsub.s32 1, %v3132
      %v3134 = vrot.slane %v3125, %v3133
      %v3137 = vmul.f32 %v2722, %v3130
      %v3138 = vmul.f32 %v2726, %v3134
      %v3139 = vmul.f32 %v2723, %v3130
      %v3140 = vmul.f32 %v2727, %v3134
      %v3141 = vmul.f32 %v2724, %v3130
      %v3142 = vmul.f32 %v2728, %v3134
      %v3143 = vmul.f32 %v2725, %v3130
      %v3144 = vmul.f32 %v2729, %v3134
      %v3145 = vld [vmem:[%s14] sm:$0xff]
      %v3147 = vsel %vm2753, %v3145, 0
      %3149 = vmatprep.subr.mxu0 %v3138
      %3150 = vmatpush1.msra.mxu0 %v3137
      %3151 = vmatprep.subr.mxu0 %v3140
      %3152 = vmatpush1.msra.mxu0 %v3139
      %3153 = vmatprep.subr.mxu0 %v3142
      %3154 = vmatpush1.msra.mxu0 %v3141
      %3155 = vmatprep.subr.mxu0 %v3144
      %3156 = vmatpush1.msra.mxu0 %v3143
      %3157 = vmatprep.subr.mxu0 0.0
      %3158 = vmatpush1.msra.mxu0 0.0
      %3159 = vmatprep.subr.mxu0 0.0
      %3160 = vmatpush1.msra.mxu0 0.0
      %3161 = vmatprep.subr.mxu0 0.0
      %3162 = vmatpush1.msra.mxu0 0.0
      %3163 = vmatprep.subr.mxu0 0.0
      %3164 = vmatpush1.msra.mxu0 0.0
      %3165 = vmatprep.subr.mxu0 0.0
      %3166 = vmatpush1.msra.mxu0 0.0
      %3167 = vmatprep.subr.mxu0 0.0
      %3168 = vmatpush1.msra.mxu0 0.0
      %3169 = vmatprep.subr.mxu0 0.0
      %3170 = vmatpush1.msra.mxu0 0.0
      %3171 = vmatprep.subr.mxu0 0.0
      %3172 = vmatpush1.msra.mxu0 0.0
      %3173 = vmatprep.subr.mxu0 0.0
      %3174 = vmatpush1.msra.mxu0 0.0
      %3175 = vmatprep.subr.mxu0 0.0
      %3176 = vmatpush1.msra.mxu0 0.0
      %3177 = vmatprep.subr.mxu0 0.0
      %3178 = vmatpush1.msra.mxu0 0.0
      %3179 = vmatprep.subr.mxu0 0.0
      %3180 = vmatpush1.msra.mxu0 0.0
      %3181 = vmatprep.subr.mxu0 0.0
      %3182 = vmatpush1.msra.mxu0 0.0
      %3183 = vmatprep.subr.mxu0 0.0
      %3184 = vmatpush1.msra.mxu0 0.0
      %3185 = vmatprep.subr.mxu0 0.0
      %3186 = vmatpush1.msra.mxu0 0.0
      %3187 = vmatprep.subr.mxu0 0.0
      %3188 = vmatpush1.msra.mxu0 0.0
      %3189 = vmatprep.subr.mxu0 0.0
      %3190 = vmatpush1.msra.mxu0 0.0
      %3191 = vmatprep.subr.mxu0 0.0
      %3192 = vmatpush1.msra.mxu0 0.0
      %3193 = vmatprep.subr.mxu0 0.0
      %3194 = vmatpush1.msra.mxu0 0.0
      %3195 = vmatprep.subr.mxu0 0.0
      %3196 = vmatpush1.msra.mxu0 0.0
      %3197 = vmatprep.subr.mxu0 0.0
      %3198 = vmatpush1.msra.mxu0 0.0
      %3199 = vmatprep.subr.mxu0 0.0
      %3200 = vmatpush1.msra.mxu0 0.0
      %3201 = vmatprep.subr.mxu0 0.0
      %3202 = vmatpush1.msra.mxu0 0.0
      %3203 = vmatprep.subr.mxu0 0.0
      %3204 = vmatpush1.msra.mxu0 0.0
      %3205 = vmatprep.subr.mxu0 0.0
      %3206 = vmatpush1.msra.mxu0 0.0
      %3207 = vmatprep.subr.mxu0 0.0
      %3208 = vmatpush1.msra.mxu0 0.0
      %3209 = vmatprep.subr.mxu0 0.0
      %3210 = vmatpush1.msra.mxu0 0.0
      %3211 = vmatprep.subr.mxu0 0.0
      %3212 = vmatpush1.msra.mxu0 0.0
      %3213 = vmatprep.mubr.f32.mxu0 0.0
      %3214 = vmatmul.mubr.f32.gmra.mrb[0].mxu0 %v3147
      %v3215 = vpop.f32.mrb[0].mxu0
      %v3216 = vadd.f32 0.0, %v3215
      %v3217 = vpop.f32.mrb[0].mxu0
      %v3218 = vadd.f32 0.0, %v3217
      %3219 = vdwg.mxu0
      %v3220 = vadd.f32 %v3122, %v3216
      %v3221 = vadd.f32 %v3123, %v3218
      %s3222 = scalar_lea.vmem %s1, 36
      %v3223 = vld [vmem:[%s3222] ss:$8 sm:$0x3]
      %v3225 = vlaneseq
      %v3226 = vshrl.u32 %v3225, 7
      %v3227 = vsub.s32 0, %v3226
      %v3228 = vrot.slane %v3223, %v3227
      %v3229 = vlaneseq
      %v3230 = vshrl.u32 %v3229, 7
      %v3231 = vsub.s32 1, %v3230
      %v3232 = vrot.slane %v3223, %v3231
      %v3235 = vmul.f32 %v2922, %v3228
      %v3236 = vmul.f32 %v2918, %v3232
      %v3237 = vmul.f32 %v2923, %v3228
      %v3238 = vmul.f32 %v2919, %v3232
      %v3239 = vmul.f32 %v2924, %v3228
      %v3240 = vmul.f32 %v2920, %v3232
      %v3241 = vmul.f32 %v2925, %v3228
      %v3242 = vmul.f32 %v2921, %v3232
      %s3243 = scalar_lea.vmem %s14, 16
      %v3244 = vld [vmem:[%s3243] sm:$0xff]
      %v3246 = vsel %vm2753, %v3244, 0
      %3248 = vmatprep.subr.mxu0 %v3236
      %3249 = vmatpush1.msra.mxu0 %v3235
      %3250 = vmatprep.subr.mxu0 %v3238
      %3251 = vmatpush1.msra.mxu0 %v3237
      %3252 = vmatprep.subr.mxu0 %v3240
      %3253 = vmatpush1.msra.mxu0 %v3239
      %3254 = vmatprep.subr.mxu0 %v3242
      %3255 = vmatpush1.msra.mxu0 %v3241
      %3256 = vmatprep.subr.mxu0 0.0
      %3257 = vmatpush1.msra.mxu0 0.0
      %3258 = vmatprep.subr.mxu0 0.0
      %3259 = vmatpush1.msra.mxu0 0.0
      %3260 = vmatprep.subr.mxu0 0.0
      %3261 = vmatpush1.msra.mxu0 0.0
      %3262 = vmatprep.subr.mxu0 0.0
      %3263 = vmatpush1.msra.mxu0 0.0
      %3264 = vmatprep.subr.mxu0 0.0
      %3265 = vmatpush1.msra.mxu0 0.0
      %3266 = vmatprep.subr.mxu0 0.0
      %3267 = vmatpush1.msra.mxu0 0.0
      %3268 = vmatprep.subr.mxu0 0.0
      %3269 = vmatpush1.msra.mxu0 0.0
      %3270 = vmatprep.subr.mxu0 0.0
      %3271 = vmatpush1.msra.mxu0 0.0
      %3272 = vmatprep.subr.mxu0 0.0
      %3273 = vmatpush1.msra.mxu0 0.0
      %3274 = vmatprep.subr.mxu0 0.0
      %3275 = vmatpush1.msra.mxu0 0.0
      %3276 = vmatprep.subr.mxu0 0.0
      %3277 = vmatpush1.msra.mxu0 0.0
      %3278 = vmatprep.subr.mxu0 0.0
      %3279 = vmatpush1.msra.mxu0 0.0
      %3280 = vmatprep.subr.mxu0 0.0
      %3281 = vmatpush1.msra.mxu0 0.0
      %3282 = vmatprep.subr.mxu0 0.0
      %3283 = vmatpush1.msra.mxu0 0.0
      %3284 = vmatprep.subr.mxu0 0.0
      %3285 = vmatpush1.msra.mxu0 0.0
      %3286 = vmatprep.subr.mxu0 0.0
      %3287 = vmatpush1.msra.mxu0 0.0
      %3288 = vmatprep.subr.mxu0 0.0
      %3289 = vmatpush1.msra.mxu0 0.0
      %3290 = vmatprep.subr.mxu0 0.0
      %3291 = vmatpush1.msra.mxu0 0.0
      %3292 = vmatprep.subr.mxu0 0.0
      %3293 = vmatpush1.msra.mxu0 0.0
      %3294 = vmatprep.subr.mxu0 0.0
      %3295 = vmatpush1.msra.mxu0 0.0
      %3296 = vmatprep.subr.mxu0 0.0
      %3297 = vmatpush1.msra.mxu0 0.0
      %3298 = vmatprep.subr.mxu0 0.0
      %3299 = vmatpush1.msra.mxu0 0.0
      %3300 = vmatprep.subr.mxu0 0.0
      %3301 = vmatpush1.msra.mxu0 0.0
      %3302 = vmatprep.subr.mxu0 0.0
      %3303 = vmatpush1.msra.mxu0 0.0
      %3304 = vmatprep.subr.mxu0 0.0
      %3305 = vmatpush1.msra.mxu0 0.0
      %3306 = vmatprep.subr.mxu0 0.0
      %3307 = vmatpush1.msra.mxu0 0.0
      %3308 = vmatprep.subr.mxu0 0.0
      %3309 = vmatpush1.msra.mxu0 0.0
      %3310 = vmatprep.subr.mxu0 0.0
      %3311 = vmatpush1.msra.mxu0 0.0
      %3312 = vmatprep.mubr.f32.mxu0 0.0
      %3313 = vmatmul.mubr.f32.gmra.mrb[0].mxu0 %v3246
      %v3314 = vpop.f32.mrb[0].mxu0
      %v3315 = vadd.f32 0.0, %v3314
      %v3316 = vpop.f32.mrb[0].mxu0
      %v3317 = vadd.f32 0.0, %v3316
      %3318 = vdwg.mxu0
      %v3319 = vadd.f32 %v3220, %v3315
      %v3320 = vadd.f32 %v3221, %v3317
      %v3321 = vadd.f32 %v3319, %v3320
      %3322 = vadd.xlane.f32.xlu0 %v3321
      %v3323 = vpop.xlane.xlu0 %3322
      %v3324 = vmul.f32 %v3323, %v1293
      %v3325 = vsub.f32 %v3319, %v3324
      %v3326 = vsub.f32 %v3320, %v3324
      %v3327 = vmul.f32 %v3325, %v3325
      %v3328 = vmul.f32 %v3326, %v3326
      %v3329 = vadd.f32 %v3327, %v3328
      %3330 = vadd.xlane.f32.xlu0 %v3329
      %v3331 = vpop.xlane.xlu0 %3330
      %v3332 = vmul.f32 %v3331, %v1293
      %v3333 = vld [vmem:[%s15] sm:$0xff]
      %v3334 = vadd.f32 %v3332, 1e-05
      %v3335 = vrsqrt.pop %v3334
      %v3336 = vmul.f32 %v3333, %v3335
      %3338 = vset.pattern.permute.xlu0 0
      %3339 = vperm.xlu0 %3338, %v3336
      %v3340 = vpop.permute.xlu0 %3339
      %v3342 = vmul.f32 %v3325, %v3340
      %v3343 = vmul.f32 %v3326, %v3340
      %v3344 = vld [vmem:[%s16] sm:$0xff]
      %3346 = vset.pattern.permute.xlu0 0
      %3347 = vperm.xlu0 %3346, %v3344
      %v3348 = vpop.permute.xlu0 %3347
      %v3350 = vadd.f32 %v3342, %v3348
      %v3351 = vadd.f32 %v3343, %v3348
      %vm3352 = vcmp.ge.f32.partialorder %v3350, 0.0
      %vm3353 = vcmp.ge.f32.partialorder %v3351, 0.0
      %v3354 = vld [vmem:[%s17] sm:$0xff]
      %3356 = vset.pattern.permute.xlu0 0
      %3357 = vperm.xlu0 %3356, %v3354
      %v3358 = vpop.permute.xlu0 %3357
      %v3360 = vmul.f32 %v3358, %v3350
      %v3361 = vmul.f32 %v3358, %v3351
      %v3362 = vsel %vm3352, %v3350, %v3360
      %v3363 = vsel %vm3353, %v3351, %v3361
      %3364 = vst [vmem:[#allocation2] sm:$0xff] %v3362
      %3365 = vst [vmem:[#allocation2 + $0x8] sm:$0xff] %v3363
      %v3366 = vld [vmem:[#allocation2] sm:$0xff]
      %v3367 = vld [vmem:[#allocation2 + $0x8] sm:$0xff]
      %s3368 = scalar_lea.vmem %s18, 16
      %v3369 = vld [vmem:[%s3368] sm:$0xff]
      %v3370 = vld [vmem:[%s3368 + $0x8] sm:$0xff]
      %v3371 = vld [vmem:[%s19] sm:$0xff]
      %v3372 = vld [vmem:[%s19 + $0x8] sm:$0xff]
      %3374 = vset.pattern.permute.xlu0 0
      %3375 = vperm.xlu0 %3374, %v3371
      %v3376 = vpop.permute.xlu0 %3375
      %3379 = vset.pattern.permute.xlu0 0
      %3380 = vperm.xlu0 %3379, %v3372
      %v3381 = vpop.permute.xlu0 %3380
      %v3384 = vsel %vm745, %v3369, 0
      %v3387 = vsel %vm745, %v3370, 0
      %3389 = vmatprep.subr.mxu0 %v3367
      %3390 = vmatpush1.msra.mxu0 %v3366
      %3391 = vmatprep.subr.mxu0 0.0
      %3392 = vmatpush1.msra.mxu0 0.0
      %3393 = vmatprep.subr.mxu0 0.0
      %3394 = vmatpush1.msra.mxu0 0.0
      %3395 = vmatprep.subr.mxu0 0.0
      %3396 = vmatpush1.msra.mxu0 0.0
      %3397 = vmatprep.subr.mxu0 0.0
      %3398 = vmatpush1.msra.mxu0 0.0
      %3399 = vmatprep.subr.mxu0 0.0
      %3400 = vmatpush1.msra.mxu0 0.0
      %3401 = vmatprep.subr.mxu0 0.0
      %3402 = vmatpush1.msra.mxu0 0.0
      %3403 = vmatprep.subr.mxu0 0.0
      %3404 = vmatpush1.msra.mxu0 0.0
      %3405 = vmatprep.subr.mxu0 0.0
      %3406 = vmatpush1.msra.mxu0 0.0
      %3407 = vmatprep.subr.mxu0 0.0
      %3408 = vmatpush1.msra.mxu0 0.0
      %3409 = vmatprep.subr.mxu0 0.0
      %3410 = vmatpush1.msra.mxu0 0.0
      %3411 = vmatprep.subr.mxu0 0.0
      %3412 = vmatpush1.msra.mxu0 0.0
      %3413 = vmatprep.subr.mxu0 0.0
      %3414 = vmatpush1.msra.mxu0 0.0
      %3415 = vmatprep.subr.mxu0 0.0
      %3416 = vmatpush1.msra.mxu0 0.0
      %3417 = vmatprep.subr.mxu0 0.0
      %3418 = vmatpush1.msra.mxu0 0.0
      %3419 = vmatprep.subr.mxu0 0.0
      %3420 = vmatpush1.msra.mxu0 0.0
      %3421 = vmatprep.subr.mxu0 0.0
      %3422 = vmatpush1.msra.mxu0 0.0
      %3423 = vmatprep.subr.mxu0 0.0
      %3424 = vmatpush1.msra.mxu0 0.0
      %3425 = vmatprep.subr.mxu0 0.0
      %3426 = vmatpush1.msra.mxu0 0.0
      %3427 = vmatprep.subr.mxu0 0.0
      %3428 = vmatpush1.msra.mxu0 0.0
      %3429 = vmatprep.subr.mxu0 0.0
      %3430 = vmatpush1.msra.mxu0 0.0
      %3431 = vmatprep.subr.mxu0 0.0
      %3432 = vmatpush1.msra.mxu0 0.0
      %3433 = vmatprep.subr.mxu0 0.0
      %3434 = vmatpush1.msra.mxu0 0.0
      %3435 = vmatprep.subr.mxu0 0.0
      %3436 = vmatpush1.msra.mxu0 0.0
      %3437 = vmatprep.subr.mxu0 0.0
      %3438 = vmatpush1.msra.mxu0 0.0
      %3439 = vmatprep.subr.mxu0 0.0
      %3440 = vmatpush1.msra.mxu0 0.0
      %3441 = vmatprep.subr.mxu0 0.0
      %3442 = vmatpush1.msra.mxu0 0.0
      %3443 = vmatprep.subr.mxu0 0.0
      %3444 = vmatpush1.msra.mxu0 0.0
      %3445 = vmatprep.subr.mxu0 0.0
      %3446 = vmatpush1.msra.mxu0 0.0
      %3447 = vmatprep.subr.mxu0 0.0
      %3448 = vmatpush1.msra.mxu0 0.0
      %3449 = vmatprep.subr.mxu0 0.0
      %3450 = vmatpush1.msra.mxu0 0.0
      %3451 = vmatprep.subr.mxu0 0.0
      %3452 = vmatpush1.msra.mxu0 0.0
      %3453 = vmatprep.mubr.f32.mxu0 0.0
      %3454 = vmatmul.mubr.f32.gmra.mrb[0].mxu0 %v3384
      %v3455 = vpop.f32.mrb[0].mxu0
      %v3456 = vadd.f32 %v3376, %v3455
      %v3457 = vpop.f32.mrb[0].mxu0
      %v3458 = vadd.f32 %v3376, %v3457
      %3459 = vmatprep.mubr.f32.mxu0 0.0
      %3460 = vmatmul.mubr.f32.gmra.mrb[0].mxu0 %v3387
      %v3461 = vpop.f32.mrb[0].mxu0
      %v3462 = vadd.f32 %v3381, %v3461
      %v3463 = vpop.f32.mrb[0].mxu0
      %v3464 = vadd.f32 %v3381, %v3463
      %3465 = vdwg.mxu0
      %3466 = vrot.lane.b32.xlu0 %v3366, 1
      %v3467 = vpop.permute.xlu0 %3466
      %3468 = vrot.lane.b32.xlu0 %v3367, 1
      %v3469 = vpop.permute.xlu0 %3468
      %v3470 = vsel %vm725, %v3467, %v3469
      %v3471 = vsel %vm725, %v3469, %v3467
      %v3472 = vld [vmem:[%s728] ss:$8 sm:$0x3]
      %v3474 = vlaneseq
      %v3475 = vshrl.u32 %v3474, 7
      %v3476 = vsub.s32 0, %v3475
      %v3477 = vrot.slane %v3472, %v3476
      %v3478 = vlaneseq
      %v3479 = vshrl.u32 %v3478, 7
      %v3480 = vsub.s32 1, %v3479
      %v3481 = vrot.slane %v3472, %v3480
      %v3484 = vmul.f32 %v3471, %v3477
      %v3485 = vmul.f32 %v3470, %v3481
      %v3486 = vld [vmem:[%s18] sm:$0xff]
      %v3487 = vld [vmem:[%s18 + $0x8] sm:$0xff]
      %v3489 = vsel %vm745, %v3486, 0
      %v3492 = vsel %vm745, %v3487, 0
      %3494 = vmatprep.subr.mxu0 %v3485
      %3495 = vmatpush1.msra.mxu0 %v3484
      %3496 = vmatprep.subr.mxu0 0.0
      %3497 = vmatpush1.msra.mxu0 0.0
      %3498 = vmatprep.subr.mxu0 0.0
      %3499 = vmatpush1.msra.mxu0 0.0
      %3500 = vmatprep.subr.mxu0 0.0
      %3501 = vmatpush1.msra.mxu0 0.0
      %3502 = vmatprep.subr.mxu0 0.0
      %3503 = vmatpush1.msra.mxu0 0.0
      %3504 = vmatprep.subr.mxu0 0.0
      %3505 = vmatpush1.msra.mxu0 0.0
      %3506 = vmatprep.subr.mxu0 0.0
      %3507 = vmatpush1.msra.mxu0 0.0
      %3508 = vmatprep.subr.mxu0 0.0
      %3509 = vmatpush1.msra.mxu0 0.0
      %3510 = vmatprep.subr.mxu0 0.0
      %3511 = vmatpush1.msra.mxu0 0.0
      %3512 = vmatprep.subr.mxu0 0.0
      %3513 = vmatpush1.msra.mxu0 0.0
      %3514 = vmatprep.subr.mxu0 0.0
      %3515 = vmatpush1.msra.mxu0 0.0
      %3516 = vmatprep.subr.mxu0 0.0
      %3517 = vmatpush1.msra.mxu0 0.0
      %3518 = vmatprep.subr.mxu0 0.0
      %3519 = vmatpush1.msra.mxu0 0.0
      %3520 = vmatprep.subr.mxu0 0.0
      %3521 = vmatpush1.msra.mxu0 0.0
      %3522 = vmatprep.subr.mxu0 0.0
      %3523 = vmatpush1.msra.mxu0 0.0
      %3524 = vmatprep.subr.mxu0 0.0
      %3525 = vmatpush1.msra.mxu0 0.0
      %3526 = vmatprep.subr.mxu0 0.0
      %3527 = vmatpush1.msra.mxu0 0.0
      %3528 = vmatprep.subr.mxu0 0.0
      %3529 = vmatpush1.msra.mxu0 0.0
      %3530 = vmatprep.subr.mxu0 0.0
      %3531 = vmatpush1.msra.mxu0 0.0
      %3532 = vmatprep.subr.mxu0 0.0
      %3533 = vmatpush1.msra.mxu0 0.0
      %3534 = vmatprep.subr.mxu0 0.0
      %3535 = vmatpush1.msra.mxu0 0.0
      %3536 = vmatprep.subr.mxu0 0.0
      %3537 = vmatpush1.msra.mxu0 0.0
      %3538 = vmatprep.subr.mxu0 0.0
      %3539 = vmatpush1.msra.mxu0 0.0
      %3540 = vmatprep.subr.mxu0 0.0
      %3541 = vmatpush1.msra.mxu0 0.0
      %3542 = vmatprep.subr.mxu0 0.0
      %3543 = vmatpush1.msra.mxu0 0.0
      %3544 = vmatprep.subr.mxu0 0.0
      %3545 = vmatpush1.msra.mxu0 0.0
      %3546 = vmatprep.subr.mxu0 0.0
      %3547 = vmatpush1.msra.mxu0 0.0
      %3548 = vmatprep.subr.mxu0 0.0
      %3549 = vmatpush1.msra.mxu0 0.0
      %3550 = vmatprep.subr.mxu0 0.0
      %3551 = vmatpush1.msra.mxu0 0.0
      %3552 = vmatprep.subr.mxu0 0.0
      %3553 = vmatpush1.msra.mxu0 0.0
      %3554 = vmatprep.subr.mxu0 0.0
      %3555 = vmatpush1.msra.mxu0 0.0
      %3556 = vmatprep.subr.mxu0 0.0
      %3557 = vmatpush1.msra.mxu0 0.0
      %3558 = vmatprep.mubr.f32.mxu0 0.0
      %3559 = vmatmul.mubr.f32.gmra.mrb[0].mxu0 %v3489
      %v3560 = vpop.f32.mrb[0].mxu0
      %v3561 = vadd.f32 0.0, %v3560
      %v3562 = vpop.f32.mrb[0].mxu0
      %v3563 = vadd.f32 0.0, %v3562
      %3564 = vmatprep.mubr.f32.mxu0 0.0
      %3565 = vmatmul.mubr.f32.gmra.mrb[0].mxu0 %v3492
      %v3566 = vpop.f32.mrb[0].mxu0
      %v3567 = vadd.f32 0.0, %v3566
      %v3568 = vpop.f32.mrb[0].mxu0
      %v3569 = vadd.f32 0.0, %v3568
      %3570 = vdwg.mxu0
      %v3571 = vadd.f32 %v3456, %v3561
      %v3572 = vadd.f32 %v3458, %v3563
      %v3573 = vadd.f32 %v3462, %v3567
      %v3574 = vadd.f32 %v3464, %v3569
      %3575 = vrot.lane.b32.xlu0 %v3366, 127
      %v3576 = vpop.permute.xlu0 %3575
      %3577 = vrot.lane.b32.xlu0 %v3367, 127
      %v3578 = vpop.permute.xlu0 %3577
      %v3579 = vsel %vm898, %v3576, %v3578
      %v3580 = vsel %vm898, %v3578, %v3576
      %v3581 = vld [vmem:[%s901] ss:$8 sm:$0x3]
      %v3583 = vlaneseq
      %v3584 = vshrl.u32 %v3583, 7
      %v3585 = vsub.s32 0, %v3584
      %v3586 = vrot.slane %v3581, %v3585
      %v3587 = vlaneseq
      %v3588 = vshrl.u32 %v3587, 7
      %v3589 = vsub.s32 1, %v3588
      %v3590 = vrot.slane %v3581, %v3589
      %v3593 = vmul.f32 %v3579, %v3586
      %v3594 = vmul.f32 %v3580, %v3590
      %s3595 = scalar_lea.vmem %s18, 32
      %v3596 = vld [vmem:[%s3595] sm:$0xff]
      %v3597 = vld [vmem:[%s3595 + $0x8] sm:$0xff]
      %v3599 = vsel %vm745, %v3596, 0
      %v3602 = vsel %vm745, %v3597, 0
      %3604 = vmatprep.subr.mxu0 %v3594
      %3605 = vmatpush1.msra.mxu0 %v3593
      %3606 = vmatprep.subr.mxu0 0.0
      %3607 = vmatpush1.msra.mxu0 0.0
      %3608 = vmatprep.subr.mxu0 0.0
      %3609 = vmatpush1.msra.mxu0 0.0
      %3610 = vmatprep.subr.mxu0 0.0
      %3611 = vmatpush1.msra.mxu0 0.0
      %3612 = vmatprep.subr.mxu0 0.0
      %3613 = vmatpush1.msra.mxu0 0.0
      %3614 = vmatprep.subr.mxu0 0.0
      %3615 = vmatpush1.msra.mxu0 0.0
      %3616 = vmatprep.subr.mxu0 0.0
      %3617 = vmatpush1.msra.mxu0 0.0
      %3618 = vmatprep.subr.mxu0 0.0
      %3619 = vmatpush1.msra.mxu0 0.0
      %3620 = vmatprep.subr.mxu0 0.0
      %3621 = vmatpush1.msra.mxu0 0.0
      %3622 = vmatprep.subr.mxu0 0.0
      %3623 = vmatpush1.msra.mxu0 0.0
      %3624 = vmatprep.subr.mxu0 0.0
      %3625 = vmatpush1.msra.mxu0 0.0
      %3626 = vmatprep.subr.mxu0 0.0
      %3627 = vmatpush1.msra.mxu0 0.0
      %3628 = vmatprep.subr.mxu0 0.0
      %3629 = vmatpush1.msra.mxu0 0.0
      %3630 = vmatprep.subr.mxu0 0.0
      %3631 = vmatpush1.msra.mxu0 0.0
      %3632 = vmatprep.subr.mxu0 0.0
      %3633 = vmatpush1.msra.mxu0 0.0
      %3634 = vmatprep.subr.mxu0 0.0
      %3635 = vmatpush1.msra.mxu0 0.0
      %3636 = vmatprep.subr.mxu0 0.0
      %3637 = vmatpush1.msra.mxu0 0.0
      %3638 = vmatprep.subr.mxu0 0.0
      %3639 = vmatpush1.msra.mxu0 0.0
      %3640 = vmatprep.subr.mxu0 0.0
      %3641 = vmatpush1.msra.mxu0 0.0
      %3642 = vmatprep.subr.mxu0 0.0
      %3643 = vmatpush1.msra.mxu0 0.0
      %3644 = vmatprep.subr.mxu0 0.0
      %3645 = vmatpush1.msra.mxu0 0.0
      %3646 = vmatprep.subr.mxu0 0.0
      %3647 = vmatpush1.msra.mxu0 0.0
      %3648 = vmatprep.subr.mxu0 0.0
      %3649 = vmatpush1.msra.mxu0 0.0
      %3650 = vmatprep.subr.mxu0 0.0
      %3651 = vmatpush1.msra.mxu0 0.0
      %3652 = vmatprep.subr.mxu0 0.0
      %3653 = vmatpush1.msra.mxu0 0.0
      %3654 = vmatprep.subr.mxu0 0.0
      %3655 = vmatpush1.msra.mxu0 0.0
      %3656 = vmatprep.subr.mxu0 0.0
      %3657 = vmatpush1.msra.mxu0 0.0
      %3658 = vmatprep.subr.mxu0 0.0
      %3659 = vmatpush1.msra.mxu0 0.0
      %3660 = vmatprep.subr.mxu0 0.0
      %3661 = vmatpush1.msra.mxu0 0.0
      %3662 = vmatprep.subr.mxu0 0.0
      %3663 = vmatpush1.msra.mxu0 0.0
      %3664 = vmatprep.subr.mxu0 0.0
      %3665 = vmatpush1.msra.mxu0 0.0
      %3666 = vmatprep.subr.mxu0 0.0
      %3667 = vmatpush1.msra.mxu0 0.0
      %3668 = vmatprep.mubr.f32.mxu0 0.0
      %3669 = vmatmul.mubr.f32.gmra.mrb[0].mxu0 %v3599
      %v3670 = vpop.f32.mrb[0].mxu0
      %v3671 = vadd.f32 0.0, %v3670
      %v3672 = vpop.f32.mrb[0].mxu0
      %v3673 = vadd.f32 0.0, %v3672
      %3674 = vmatprep.mubr.f32.mxu0 0.0
      %3675 = vmatmul.mubr.f32.gmra.mrb[0].mxu0 %v3602
      %v3676 = vpop.f32.mrb[0].mxu0
      %v3677 = vadd.f32 0.0, %v3676
      %v3678 = vpop.f32.mrb[0].mxu0
      %v3679 = vadd.f32 0.0, %v3678
      %3680 = vdwg.mxu0
      %v3681 = vadd.f32 %v3571, %v3671
      %v3682 = vadd.f32 %v3572, %v3673
      %v3683 = vadd.f32 %v3573, %v3677
      %v3684 = vadd.f32 %v3574, %v3679
      %vm3685 = vcmp.ge.f32.partialorder %v3681, 0.0
      %vm3686 = vcmp.ge.f32.partialorder %v3682, 0.0
      %vm3687 = vcmp.ge.f32.partialorder %v3683, 0.0
      %vm3688 = vcmp.ge.f32.partialorder %v3684, 0.0
      %v3689 = vld [vmem:[%s20] sm:$0xff]
      %v3690 = vld [vmem:[%s20 + $0x8] sm:$0xff]
      %3692 = vset.pattern.permute.xlu0 0
      %3693 = vperm.xlu0 %3692, %v3689
      %v3694 = vpop.permute.xlu0 %3693
      %3697 = vset.pattern.permute.xlu0 0
      %3698 = vperm.xlu0 %3697, %v3690
      %v3699 = vpop.permute.xlu0 %3698
      %v3701 = vmul.f32 %v3694, %v3681
      %v3702 = vmul.f32 %v3694, %v3682
      %v3703 = vmul.f32 %v3699, %v3683
      %v3704 = vmul.f32 %v3699, %v3684
      %v3705 = vsel %vm3685, %v3681, %v3701
      %v3706 = vsel %vm3686, %v3682, %v3702
      %v3707 = vsel %vm3687, %v3683, %v3703
      %v3708 = vsel %vm3688, %v3684, %v3704
      %3709 = vrot.lane.b32.xlu0 %v3705, 127
      %v3710 = vpop.permute.xlu0 %3709
      %3711 = vrot.lane.b32.xlu0 %v3706, 127
      %v3712 = vpop.permute.xlu0 %3711
      %v3713 = vsel %vm898, %v3710, %v3712
      %v3714 = vsel %vm898, %v3712, %v3710
      %v3715 = vmul.f32 %v3713, %v3586
      %v3716 = vmul.f32 %v3714, %v3590
      %v3717 = vld [vmem:[%s21] sm:$0x3]
      %s3718 = scalar_lea.vmem %s21, 2
      %v3719 = vld [vmem:[%s3718] sm:$0x3]
      %v3721 = vsel %vm745, %v3719, 0
      %3723 = vmatprep.subr.mxu0 %v3708
      %3724 = vmatpush1.msra.mxu0 %v3707
      %3725 = vmatprep.subr.mxu0 0.0
      %3726 = vmatpush1.msra.mxu0 0.0
      %3727 = vmatprep.subr.mxu0 0.0
      %3728 = vmatpush1.msra.mxu0 0.0
      %3729 = vmatprep.subr.mxu0 0.0
      %3730 = vmatpush1.msra.mxu0 0.0
      %3731 = vmatprep.subr.mxu0 0.0
      %3732 = vmatpush1.msra.mxu0 0.0
      %3733 = vmatprep.subr.mxu0 0.0
      %3734 = vmatpush1.msra.mxu0 0.0
      %3735 = vmatprep.subr.mxu0 0.0
      %3736 = vmatpush1.msra.mxu0 0.0
      %3737 = vmatprep.subr.mxu0 0.0
      %3738 = vmatpush1.msra.mxu0 0.0
      %3739 = vmatprep.subr.mxu0 0.0
      %3740 = vmatpush1.msra.mxu0 0.0
      %3741 = vmatprep.subr.mxu0 0.0
      %3742 = vmatpush1.msra.mxu0 0.0
      %3743 = vmatprep.subr.mxu0 0.0
      %3744 = vmatpush1.msra.mxu0 0.0
      %3745 = vmatprep.subr.mxu0 0.0
      %3746 = vmatpush1.msra.mxu0 0.0
      %3747 = vmatprep.subr.mxu0 0.0
      %3748 = vmatpush1.msra.mxu0 0.0
      %3749 = vmatprep.subr.mxu0 0.0
      %3750 = vmatpush1.msra.mxu0 0.0
      %3751 = vmatprep.subr.mxu0 0.0
      %3752 = vmatpush1.msra.mxu0 0.0
      %3753 = vmatprep.subr.mxu0 0.0
      %3754 = vmatpush1.msra.mxu0 0.0
      %3755 = vmatprep.subr.mxu0 0.0
      %3756 = vmatpush1.msra.mxu0 0.0
      %3757 = vmatprep.subr.mxu0 0.0
      %3758 = vmatpush1.msra.mxu0 0.0
      %3759 = vmatprep.subr.mxu0 0.0
      %3760 = vmatpush1.msra.mxu0 0.0
      %3761 = vmatprep.subr.mxu0 0.0
      %3762 = vmatpush1.msra.mxu0 0.0
      %3763 = vmatprep.subr.mxu0 0.0
      %3764 = vmatpush1.msra.mxu0 0.0
      %3765 = vmatprep.subr.mxu0 0.0
      %3766 = vmatpush1.msra.mxu0 0.0
      %3767 = vmatprep.subr.mxu0 0.0
      %3768 = vmatpush1.msra.mxu0 0.0
      %3769 = vmatprep.subr.mxu0 0.0
      %3770 = vmatpush1.msra.mxu0 0.0
      %3771 = vmatprep.subr.mxu0 0.0
      %3772 = vmatpush1.msra.mxu0 0.0
      %3773 = vmatprep.subr.mxu0 0.0
      %3774 = vmatpush1.msra.mxu0 0.0
      %3775 = vmatprep.subr.mxu0 0.0
      %3776 = vmatpush1.msra.mxu0 0.0
      %3777 = vmatprep.subr.mxu0 0.0
      %3778 = vmatpush1.msra.mxu0 0.0
      %3779 = vmatprep.subr.mxu0 0.0
      %3780 = vmatpush1.msra.mxu0 0.0
      %3781 = vmatprep.subr.mxu0 0.0
      %3782 = vmatpush1.msra.mxu0 0.0
      %3783 = vmatprep.subr.mxu0 0.0
      %3784 = vmatpush1.msra.mxu0 0.0
      %3785 = vmatprep.subr.mxu0 0.0
      %3786 = vmatpush1.msra.mxu0 0.0
      %3787 = vmatprep.mubr.f32.mxu0 0.0
      %3788 = vmatmul.mubr.f32.gmra.mrb[0].mxu0 %v3721
      %v3789 = vpop.f32.mrb[0].mxu0
      %v3790 = vadd.f32 0.0, %v3789
      %v3791 = vpop.f32.mrb[0].mxu0
      %v3792 = vadd.f32 0.0, %v3791
      %3793 = vdwg.mxu0
      %v3795 = vsel %vm745, %v3717, 0
      %3797 = vmatprep.subr.mxu0 %v3706
      %3798 = vmatpush1.msra.mxu0 %v3705
      %3799 = vmatprep.subr.mxu0 0.0
      %3800 = vmatpush1.msra.mxu0 0.0
      %3801 = vmatprep.subr.mxu0 0.0
      %3802 = vmatpush1.msra.mxu0 0.0
      %3803 = vmatprep.subr.mxu0 0.0
      %3804 = vmatpush1.msra.mxu0 0.0
      %3805 = vmatprep.subr.mxu0 0.0
      %3806 = vmatpush1.msra.mxu0 0.0
      %3807 = vmatprep.subr.mxu0 0.0
      %3808 = vmatpush1.msra.mxu0 0.0
      %3809 = vmatprep.subr.mxu0 0.0
      %3810 = vmatpush1.msra.mxu0 0.0
      %3811 = vmatprep.subr.mxu0 0.0
      %3812 = vmatpush1.msra.mxu0 0.0
      %3813 = vmatprep.subr.mxu0 0.0
      %3814 = vmatpush1.msra.mxu0 0.0
      %3815 = vmatprep.subr.mxu0 0.0
      %3816 = vmatpush1.msra.mxu0 0.0
      %3817 = vmatprep.subr.mxu0 0.0
      %3818 = vmatpush1.msra.mxu0 0.0
      %3819 = vmatprep.subr.mxu0 0.0
      %3820 = vmatpush1.msra.mxu0 0.0
      %3821 = vmatprep.subr.mxu0 0.0
      %3822 = vmatpush1.msra.mxu0 0.0
      %3823 = vmatprep.subr.mxu0 0.0
      %3824 = vmatpush1.msra.mxu0 0.0
      %3825 = vmatprep.subr.mxu0 0.0
      %3826 = vmatpush1.msra.mxu0 0.0
      %3827 = vmatprep.subr.mxu0 0.0
      %3828 = vmatpush1.msra.mxu0 0.0
      %3829 = vmatprep.subr.mxu0 0.0
      %3830 = vmatpush1.msra.mxu0 0.0
      %3831 = vmatprep.subr.mxu0 0.0
      %3832 = vmatpush1.msra.mxu0 0.0
      %3833 = vmatprep.subr.mxu0 0.0
      %3834 = vmatpush1.msra.mxu0 0.0
      %3835 = vmatprep.subr.mxu0 0.0
      %3836 = vmatpush1.msra.mxu0 0.0
      %3837 = vmatprep.subr.mxu0 0.0
      %3838 = vmatpush1.msra.mxu0 0.0
      %3839 = vmatprep.subr.mxu0 0.0
      %3840 = vmatpush1.msra.mxu0 0.0
      %3841 = vmatprep.subr.mxu0 0.0
      %3842 = vmatpush1.msra.mxu0 0.0
      %3843 = vmatprep.subr.mxu0 0.0
      %3844 = vmatpush1.msra.mxu0 0.0
      %3845 = vmatprep.subr.mxu0 0.0
      %3846 = vmatpush1.msra.mxu0 0.0
      %3847 = vmatprep.subr.mxu0 0.0
      %3848 = vmatpush1.msra.mxu0 0.0
      %3849 = vmatprep.subr.mxu0 0.0
      %3850 = vmatpush1.msra.mxu0 0.0
      %3851 = vmatprep.subr.mxu0 0.0
      %3852 = vmatpush1.msra.mxu0 0.0
      %3853 = vmatprep.subr.mxu0 0.0
      %3854 = vmatpush1.msra.mxu0 0.0
      %3855 = vmatprep.subr.mxu0 0.0
      %3856 = vmatpush1.msra.mxu0 0.0
      %3857 = vmatprep.subr.mxu0 0.0
      %3858 = vmatpush1.msra.mxu0 0.0
      %3859 = vmatprep.subr.mxu0 0.0
      %3860 = vmatpush1.msra.mxu0 0.0
      %3861 = vmatprep.mubr.f32.mxu0 0.0
      %3862 = vmatmul.mubr.f32.gmra.mrb[0].mxu0 %v3795
      %v3863 = vpop.f32.mrb[0].mxu0
      %v3864 = vadd.f32 %v3790, %v3863
      %v3865 = vpop.f32.mrb[0].mxu0
      %v3866 = vadd.f32 %v3792, %v3865
      %3867 = vdwg.mxu0
      %v3868 = vld [vmem:[%s22] sm:$0x3]
      %3870 = vset.pattern.permute.xlu0 0
      %3871 = vperm.xlu0 %3870, %v3868
      %v3872 = vpop.permute.xlu0 %3871
      %v3874 = vadd.f32 %v3864, %v3872
      %v3875 = vadd.f32 %v3866, %v3872
      %3876 = vmatprep.subr.mxu0 %v3716
      %3877 = vmatpush1.msra.mxu0 %v3715
      %3878 = vmatprep.subr.mxu0 0.0
      %3879 = vmatpush1.msra.mxu0 0.0
      %3880 = vmatprep.subr.mxu0 0.0
      %3881 = vmatpush1.msra.mxu0 0.0
      %3882 = vmatprep.subr.mxu0 0.0
      %3883 = vmatpush1.msra.mxu0 0.0
      %3884 = vmatprep.subr.mxu0 0.0
      %3885 = vmatpush1.msra.mxu0 0.0
      %3886 = vmatprep.subr.mxu0 0.0
      %3887 = vmatpush1.msra.mxu0 0.0
      %3888 = vmatprep.subr.mxu0 0.0
      %3889 = vmatpush1.msra.mxu0 0.0
      %3890 = vmatprep.subr.mxu0 0.0
      %3891 = vmatpush1.msra.mxu0 0.0
      %3892 = vmatprep.subr.mxu0 0.0
      %3893 = vmatpush1.msra.mxu0 0.0
      %3894 = vmatprep.subr.mxu0 0.0
      %3895 = vmatpush1.msra.mxu0 0.0
      %3896 = vmatprep.subr.mxu0 0.0
      %3897 = vmatpush1.msra.mxu0 0.0
      %3898 = vmatprep.subr.mxu0 0.0
      %3899 = vmatpush1.msra.mxu0 0.0
      %3900 = vmatprep.subr.mxu0 0.0
      %3901 = vmatpush1.msra.mxu0 0.0
      %3902 = vmatprep.subr.mxu0 0.0
      %3903 = vmatpush1.msra.mxu0 0.0
      %3904 = vmatprep.subr.mxu0 0.0
      %3905 = vmatpush1.msra.mxu0 0.0
      %3906 = vmatprep.subr.mxu0 0.0
      %3907 = vmatpush1.msra.mxu0 0.0
      %3908 = vmatprep.subr.mxu0 0.0
      %3909 = vmatpush1.msra.mxu0 0.0
      %3910 = vmatprep.subr.mxu0 0.0
      %3911 = vmatpush1.msra.mxu0 0.0
      %3912 = vmatprep.subr.mxu0 0.0
      %3913 = vmatpush1.msra.mxu0 0.0
      %3914 = vmatprep.subr.mxu0 0.0
      %3915 = vmatpush1.msra.mxu0 0.0
      %3916 = vmatprep.subr.mxu0 0.0
      %3917 = vmatpush1.msra.mxu0 0.0
      %3918 = vmatprep.subr.mxu0 0.0
      %3919 = vmatpush1.msra.mxu0 0.0
      %3920 = vmatprep.subr.mxu0 0.0
      %3921 = vmatpush1.msra.mxu0 0.0
      %3922 = vmatprep.subr.mxu0 0.0
      %3923 = vmatpush1.msra.mxu0 0.0
      %3924 = vmatprep.subr.mxu0 0.0
      %3925 = vmatpush1.msra.mxu0 0.0
      %3926 = vmatprep.subr.mxu0 0.0
      %3927 = vmatpush1.msra.mxu0 0.0
      %3928 = vmatprep.subr.mxu0 0.0
      %3929 = vmatpush1.msra.mxu0 0.0
      %3930 = vmatprep.subr.mxu0 0.0
      %3931 = vmatpush1.msra.mxu0 0.0
      %3932 = vmatprep.subr.mxu0 0.0
      %3933 = vmatpush1.msra.mxu0 0.0
      %3934 = vmatprep.subr.mxu0 0.0
      %3935 = vmatpush1.msra.mxu0 0.0
      %3936 = vmatprep.subr.mxu0 0.0
      %3937 = vmatpush1.msra.mxu0 0.0
      %3938 = vmatprep.subr.mxu0 0.0
      %3939 = vmatpush1.msra.mxu0 0.0
      %3940 = vmatprep.mubr.f32.mxu0 0.0
      %3941 = vmatmul.mubr.f32.gmra.mrb[0].mxu0 %v3721
      %v3942 = vpop.f32.mrb[0].mxu0
      %v3943 = vadd.f32 0.0, %v3942
      %v3944 = vpop.f32.mrb[0].mxu0
      %v3945 = vadd.f32 0.0, %v3944
      %3946 = vdwg.mxu0
      %3947 = vmatprep.subr.mxu0 %v3708
      %3948 = vmatpush1.msra.mxu0 %v3707
      %3949 = vmatprep.subr.mxu0 0.0
      %3950 = vmatpush1.msra.mxu0 0.0
      %3951 = vmatprep.subr.mxu0 0.0
      %3952 = vmatpush1.msra.mxu0 0.0
      %3953 = vmatprep.subr.mxu0 0.0
      %3954 = vmatpush1.msra.mxu0 0.0
      %3955 = vmatprep.subr.mxu0 0.0
      %3956 = vmatpush1.msra.mxu0 0.0
      %3957 = vmatprep.subr.mxu0 0.0
      %3958 = vmatpush1.msra.mxu0 0.0
      %3959 = vmatprep.subr.mxu0 0.0
      %3960 = vmatpush1.msra.mxu0 0.0
      %3961 = vmatprep.subr.mxu0 0.0
      %3962 = vmatpush1.msra.mxu0 0.0
      %3963 = vmatprep.subr.mxu0 0.0
      %3964 = vmatpush1.msra.mxu0 0.0
      %3965 = vmatprep.subr.mxu0 0.0
      %3966 = vmatpush1.msra.mxu0 0.0
      %3967 = vmatprep.subr.mxu0 0.0
      %3968 = vmatpush1.msra.mxu0 0.0
      %3969 = vmatprep.subr.mxu0 0.0
      %3970 = vmatpush1.msra.mxu0 0.0
      %3971 = vmatprep.subr.mxu0 0.0
      %3972 = vmatpush1.msra.mxu0 0.0
      %3973 = vmatprep.subr.mxu0 0.0
      %3974 = vmatpush1.msra.mxu0 0.0
      %3975 = vmatprep.subr.mxu0 0.0
      %3976 = vmatpush1.msra.mxu0 0.0
      %3977 = vmatprep.subr.mxu0 0.0
      %3978 = vmatpush1.msra.mxu0 0.0
      %3979 = vmatprep.subr.mxu0 0.0
      %3980 = vmatpush1.msra.mxu0 0.0
      %3981 = vmatprep.subr.mxu0 0.0
      %3982 = vmatpush1.msra.mxu0 0.0
      %3983 = vmatprep.subr.mxu0 0.0
      %3984 = vmatpush1.msra.mxu0 0.0
      %3985 = vmatprep.subr.mxu0 0.0
      %3986 = vmatpush1.msra.mxu0 0.0
      %3987 = vmatprep.subr.mxu0 0.0
      %3988 = vmatpush1.msra.mxu0 0.0
      %3989 = vmatprep.subr.mxu0 0.0
      %3990 = vmatpush1.msra.mxu0 0.0
      %3991 = vmatprep.subr.mxu0 0.0
      %3992 = vmatpush1.msra.mxu0 0.0
      %3993 = vmatprep.subr.mxu0 0.0
      %3994 = vmatpush1.msra.mxu0 0.0
      %3995 = vmatprep.subr.mxu0 0.0
      %3996 = vmatpush1.msra.mxu0 0.0
      %3997 = vmatprep.subr.mxu0 0.0
      %3998 = vmatpush1.msra.mxu0 0.0
      %3999 = vmatprep.subr.mxu0 0.0
      %4000 = vmatpush1.msra.mxu0 0.0
      %4001 = vmatprep.subr.mxu0 0.0
      %4002 = vmatpush1.msra.mxu0 0.0
      %4003 = vmatprep.subr.mxu0 0.0
      %4004 = vmatpush1.msra.mxu0 0.0
      %4005 = vmatprep.subr.mxu0 0.0
      %4006 = vmatpush1.msra.mxu0 0.0
      %4007 = vmatprep.subr.mxu0 0.0
      %4008 = vmatpush1.msra.mxu0 0.0
      %4009 = vmatprep.subr.mxu0 0.0
      %4010 = vmatpush1.msra.mxu0 0.0
      %4011 = vmatprep.mubr.f32.mxu0 0.0
      %4012 = vmatmul.mubr.f32.gmra.mrb[0].mxu0 %v3795
      %v4013 = vpop.f32.mrb[0].mxu0
      %v4014 = vadd.f32 %v3943, %v4013
      %v4015 = vpop.f32.mrb[0].mxu0
      %v4016 = vadd.f32 %v3945, %v4015
      %4017 = vdwg.mxu0
      %v4018 = vadd.f32 %v4014, %v3872
      %v4019 = vadd.f32 %v4016, %v3872
      %v4022 = vrot.slane %v4018, 6
      %v4023 = vrot.slane %v4019, 6
      %vm4026 = vcmask 1041408
      %v4027 = vsel %vm4026, %v3874, %v4022
      %v4028 = vsel %vm4026, %v3875, %v4023
      %v4031 = vcombine.low %v4027, %v4028
      %4033 = vst [vmem:[%s710] sm:$0xff] %v4031
      %p4034 = scmp.lt.s32.totalorder %s34, 1
      %s4035 = scalar_select %p4034, %s34, 1
      %s4036 = smul.addr %s4035, 2
      %s4037 = smul.addr %s4036, 4
      %s4038 = scalar_lea.vmem %s23, %s4037
      // Predicated region
      $region113: #{complex_decoder_forward.1} parent=111 // pred_check
        %p4039 = pneg %p540
      $region114: #{complex_decoder_forward.1} parent=111 // pred_check_branch
        %4041 = sbr.rel (%p4039) target = $region116
      $region115: #{complex_decoder_forward.1} parent=111 // pred_region
        _
      $region116: #{complex_decoder_forward.1} parent=111 // pred_fallthru
        _
    $region112: #{complex_decoder_forward.1} parent=5 // pred_fallthru
      _
    %p4042 = scmp.le.s32.totalorder 2, %s29
    // Predicated region
    $region117: #{complex_decoder_forward.1} parent=5 // pred_check
      %p4043 = pneg %p4042
    $region118: #{complex_decoder_forward.1} parent=5 // pred_check_branch
      %4045 = sbr.rel (%p4043) target = $region120
    $region119: #{complex_decoder_forward.1} parent=5 // pred_region
      %s4046 = ssub.s32 %s29, 2
      // Predicated region
      $region121: #{complex_decoder_forward.1} parent=119 // pred_check
        %p4047 = pneg %p546
      $region122: #{complex_decoder_forward.1} parent=119 // pred_check_branch
        %4049 = sbr.rel (%p4047) target = $region124
      $region123: #{complex_decoder_forward.1} parent=119 // pred_region
        %p4050 = scmp.lt.s32.totalorder %s35, 1
        %s4051 = scalar_select %p4050, %s35, 1
        %s4052 = smul.addr %s4051, 2
        %s4053 = smul.addr %s4052, 4
        %s4054 = scalar_lea.vmem %s23, %s4053
      $region124: #{complex_decoder_forward.1} parent=119 // pred_fallthru
        _
    $region120: #{complex_decoder_forward.1} parent=5 // pred_fallthru
      _
  $region6: #{complex_decoder_forward.1} parent=0 // loop_footer
    %s33 = sadd.s32 1, %s29
  $region7: #{complex_decoder_forward.1} parent=0 // loop_footer_branch
    %28 = sbr.rel target = $region3
  $region8: #{complex_decoder_forward.1} parent=0 // loop_exit
    _

</llo_original>
